<compile_context>
chip_gen: v5e
topology: v5e:2x2
jax: 0.10.0
libtpu: 0.0.40
codegen_flags: <defaults>
</compile_context>

<pallas_src>
import math
from functools import partial

import jax
import jax.numpy as jnp
from jax import lax
from jax.experimental import pallas as pl
from jax.experimental.pallas import tpu as pltpu

IMG = 9                    # img_size = board_size = 9, patch_size = 1
NUM_PATCHES = IMG * IMG    # 81
SEQ = NUM_PATCHES + 1      # 82 (cls token + patches)
SEQ_PAD = 88               # next multiple of 8 (sublane aligned)
LN_EPS = 1e-6
VALUE_DIM = 51

channel_num_to_nhead = {32: 4, 64: 8, 128: 8, 256: 8, 512: 8, 768: 12}


def _round_up(x, m):
    return (x + m - 1) // m * m


# ----------------------------- in-kernel math ------------------------------

def _layer_norm(x, w, b):
    mu = jnp.mean(x, axis=-1, keepdims=True)
    var = jnp.mean(jnp.square(x - mu), axis=-1, keepdims=True)
    return (x - mu) * lax.rsqrt(var + LN_EPS) * w + b


def _gelu(x):
    # tanh-form GELU: one EUP tanh instead of a ~12-VALU-op erf polynomial.
    # TODO(synk): nn.GELU defaults to exact erf; tanh form deviates by ~3e-4
    # absolute -- switch back to an erf approximation if bit-parity is needed.
    c = math.sqrt(2.0 / math.pi)
    return 0.5 * x * (1.0 + jnp.tanh(c * (x + 0.044715 * x * x * x)))


# ------------------------------ fused kernel -------------------------------

def _vit_kernel(x_ref, pe_w_ref, pos_ref,
                qkv_w_ref, qkv_b_ref, proj_w_ref, proj_b_ref,
                ln1_w_ref, ln1_b_ref, ln2_w_ref, ln2_b_ref,
                fc1_w_ref, fc1_b_ref, fc2_w_ref, fc2_b_ref,
                lnf_w_ref, lnf_b_ref, head_w_ref, head_b_ref,
                out_ref,
                tok_ref,
                *, nhead, hd, seq, seq_pad):
    d = pl.program_id(1)
    D = pos_ref.shape[1]
    bf16 = jnp.bfloat16

    # ---- first block: patch embed + cls + pos in one matmul + bulk store ----
    # x rows: [zero cls slot | 81 patches | zero pad]; pos already carries
    # (cls + pos[0]) in row 0, (pos[1:] + patch-embed bias) in rows 1..81 and
    # zeros in the pad rows, so one matmul + add builds the padded token slab.
    @pl.when(d == 0)
    def _():
        tok_ref[...] = (jnp.dot(x_ref[...], pe_w_ref[...],
                                preferred_element_type=jnp.float32)
                        + pos_ref[...])

    # additive -inf mask for the padded key columns (cols >= seq)
    kmask = jnp.where(
        lax.broadcasted_iota(jnp.int32, (1, seq_pad), 1) < seq,
        0.0, -1e30).astype(jnp.float32)

    # --------------- one transformer block per depth grid step ---------------
    x_in = tok_ref[...]                                          # (seq_pad, D)
    h = _layer_norm(x_in, ln1_w_ref[...], ln1_b_ref[...])
    # fused QKV matmul; 1/sqrt(hd) scale is pre-folded into the Q columns
    qkv = (jnp.dot(h.astype(bf16), qkv_w_ref[...],
                   preferred_element_type=jnp.float32) + qkv_b_ref[...])

    heads = []
    for hi in range(nhead):
        q = qkv[:, hi * hd:(hi + 1) * hd]
        k = qkv[:, D + hi * hd:D + (hi + 1) * hd]
        v = qkv[:, 2 * D + hi * hd:2 * D + (hi + 1) * hd]
        s = lax.dot_general(q.astype(bf16), k.astype(bf16),
                            (((1,), (1,)), ((), ())),
                            preferred_element_type=jnp.float32)
        s = s + kmask                                    # mask padded keys
        s = s - jnp.max(s, axis=-1, keepdims=True)
        p = jnp.exp(s)
        # approx reciprocal (EUP): rows sum to 1 +/- ~2^-12 -- inference OK.
        p = p * pl.reciprocal(jnp.sum(p, axis=-1, keepdims=True), approx=True)
        heads.append(jnp.dot(p.astype(bf16), v.astype(bf16),
                             preferred_element_type=jnp.float32))
    # lane-dense (seq_pad, D) slab fed straight into the projection matmul
    attn = jnp.concatenate(heads, axis=-1)
    attn = (jnp.dot(attn.astype(bf16), proj_w_ref[...],
                    preferred_element_type=jnp.float32) + proj_b_ref[...])
    x_res = x_in + attn                                          # residual

    h2 = _layer_norm(x_res, ln2_w_ref[...], ln2_b_ref[...])
    m = (jnp.dot(h2.astype(bf16), fc1_w_ref[...],
                 preferred_element_type=jnp.float32) + fc1_b_ref[...])
    m = _gelu(m)
    m = (jnp.dot(m.astype(bf16), fc2_w_ref[...],
                 preferred_element_type=jnp.float32) + fc2_b_ref[...])
    tok_ref[...] = x_res + m                                     # residual

    # ---- last block: final LN + fused (lane-padded) policy/value head ----
    @pl.when(d == pl.num_programs(1) - 1)
    def _():
        hN = _layer_norm(tok_ref[...], lnf_w_ref[...], lnf_b_ref[...])
        out_ref[...] = (jnp.dot(hN.astype(bf16), head_w_ref[...],
                                preferred_element_type=jnp.float32)
                        + head_b_ref[...])


# ----------------------------- params & forward -----------------------------

def build_params(key, in_ch, D, depth, nhead, policy_ch):
    hidden = int(4.0 * D)              # mlp_ratio = 4
    hd = D // nhead
    scale = float(hd) ** -0.5
    head_pad = _round_up(policy_ch + VALUE_DIM, 128)
    keys = jax.random.split(key, 6 + depth)

    def nrm(k, shape, std=0.02):
        return std * jax.random.normal(k, shape, dtype=jnp.float32)

    zeros = lambda s: jnp.zeros(s, jnp.float32)
    ones = lambda s: jnp.ones(s, jnp.float32)
    bf16 = jnp.bfloat16

    pe_w = nrm(keys[0], (in_ch, D))      # patch-embed 1x1 conv as x @ W
    pe_b = zeros((1, D))
    cls = nrm(keys[1], (1, D))
    pos = nrm(keys[2], (SEQ, D))

    # Fold cls/pos/pe_b into one padded pos slab (weight transform, semantics
    # preserving): row 0 = cls + pos[0], rows 1..81 = pos[1:] + pe_b, pad = 0.
    pos_full = jnp.zeros((SEQ_PAD, D), jnp.float32)
    pos_full = pos_full.at[0].set((cls + pos[0:1])[0])
    pos_full = pos_full.at[1:SEQ].set(pos[1:] + pe_b)

    qkv_w, proj_w, fc1_w, fc2_w = [], [], [], []
    for i in range(depth):
        bk = jax.random.split(keys[6 + i], 4)
        # x @ W convention (= torch W.T); fused qkv cols = [q | k | v],
        # heads contiguous (timm reshape layout).
        w = nrm(bk[0], (D, 3 * D))
        w = w.at[:, :D].multiply(scale)   # fold attention scale into Q cols
        qkv_w.append(w)
        proj_w.append(nrm(bk[1], (D, D)))
        fc1_w.append(nrm(bk[2], (D, hidden)))
        fc2_w.append(nrm(bk[3], (hidden, D)))

    # qkv_bias=True, init 0 (scale fold would also hit the Q bias; it is 0).
    qkv_b = zeros((depth, 1, 3 * D))

    # policy + value heads merged and zero-padded to a lane-dense width.
    policy_w = nrm(keys[3], (D, policy_ch))
    value_w = nrm(keys[4], (D, VALUE_DIM))
    head_w = jnp.zeros((D, head_pad), jnp.float32)
    head_w = head_w.at[:, :policy_ch].set(policy_w)
    head_w = head_w.at[:, policy_ch:policy_ch + VALUE_DIM].set(value_w)

    return {
        "pe_w": pe_w,                                  # f32 (tiny K=Cin matmul)
        "pos_full": pos_full,
        # per-block weights stacked on a leading depth axis (streamed by grid)
        "qkv_w": jnp.stack(qkv_w).astype(bf16),
        "qkv_b": qkv_b,
        "proj_w": jnp.stack(proj_w).astype(bf16),
        "proj_b": zeros((depth, 1, D)),
        "ln1_w": ones((depth, 1, D)), "ln1_b": zeros((depth, 1, D)),
        "ln2_w": ones((depth, 1, D)), "ln2_b": zeros((depth, 1, D)),
        "fc1_w": jnp.stack(fc1_w).astype(bf16), "fc1_b": zeros((depth, 1, hidden)),
        "fc2_w": jnp.stack(fc2_w).astype(bf16), "fc2_b": zeros((depth, 1, D)),
        "lnf_w": ones((1, D)), "lnf_b": zeros((1, D)),
        "head_w": head_w.astype(bf16),
        "head_b": zeros((1, head_pad)),
    }


def timm_vit_forward(params, x, *, nhead, policy_ch, board_size):
    B, cin, H, W = x.shape
    D = params["pe_w"].shape[1]
    depth = params["qkv_w"].shape[0]
    hidden = params["fc1_w"].shape[-1]
    head_pad = params["head_w"].shape[-1]
    hd = D // nhead
    n_patch = H * W
    seq = n_patch + 1
    seq_pad = _round_up(seq, 8)

    # NCHW -> (B, 81, Cin) row-major patch order (matches PatchEmbed's
    # flatten(2).transpose(1, 2)); prepend one zero row (cls slot) and append
    # zero rows so every per-batch slab is sublane aligned.
    x_tok = x.reshape(B, cin, n_patch).transpose(0, 2, 1).astype(jnp.float32)
    x_pad = jnp.pad(x_tok, ((0, 0), (1, seq_pad - n_patch - 1), (0, 0)))

    kernel = partial(_vit_kernel, nhead=nhead, hd=hd, seq=seq, seq_pad=seq_pad)

    # per-block weights: depth-streamed (double-buffered DMA over grid axis 1)
    wblk = lambda *s: pl.BlockSpec((None,) + s,
                                   lambda b, d: (d,) + (0,) * len(s))
    # shared weights: single resident block
    const = lambda *s: pl.BlockSpec(s, lambda b, d: (0,) * len(s))

    flops = (2 * B * depth * (seq_pad * D * 3 * D
                              + nhead * 2 * seq_pad * seq_pad * hd
                              + seq_pad * D * D
                              + 2 * seq_pad * D * hidden)
             + 2 * B * seq_pad * (cin * D + D * head_pad))
    transcendentals = B * depth * seq_pad * (nhead * seq_pad + hidden)
    bytes_accessed = (sum(int(v.size) * v.dtype.itemsize for v in params.values())
                      + int(x_pad.size) * 4 + B * seq_pad * head_pad * 4)

    out = pl.pallas_call(
        kernel,
        out_shape=jax.ShapeDtypeStruct((B, seq_pad, head_pad), jnp.float32),
        grid_spec=pltpu.PrefetchScalarGridSpec(
            num_scalar_prefetch=0,
            grid=(B, depth),
            in_specs=[
                pl.BlockSpec((None, seq_pad, cin), lambda b, d: (b, 0, 0)),  # x
                const(cin, D),                    # pe_w
                const(seq_pad, D),                # pos_full (cls/pos/pe_b folded)
                wblk(D, 3 * D),                   # qkv_w (streamed per block)
                wblk(1, 3 * D),                   # qkv_b
                wblk(D, D),                       # proj_w
                wblk(1, D),                       # proj_b
                wblk(1, D), wblk(1, D),           # ln1_w, ln1_b
                wblk(1, D), wblk(1, D),           # ln2_w, ln2_b
                wblk(D, hidden),                  # fc1_w
                wblk(1, hidden),                  # fc1_b
                wblk(hidden, D),                  # fc2_w
                wblk(1, D),                       # fc2_b
                const(1, D), const(1, D),         # lnf_w, lnf_b
                const(D, head_pad),               # head_w (policy|value, padded)
                const(1, head_pad),               # head_b
            ],
            out_specs=pl.BlockSpec((None, seq_pad, head_pad),
                                   lambda b, d: (b, 0, 0)),
            scratch_shapes=[pltpu.VMEM((seq_pad, D), jnp.float32)],  # tokens
        ),
        compiler_params=pltpu.CompilerParams(
            dimension_semantics=("parallel", "arbitrary"),
            vmem_limit_bytes=48 * 1024 * 1024,
        ),
        cost_estimate=pl.CostEstimate(flops=flops,
                                      transcendentals=transcendentals,
                                      bytes_accessed=bytes_accessed),
    )(x_pad, params["pe_w"], params["pos_full"],
      params["qkv_w"], params["qkv_b"], params["proj_w"], params["proj_b"],
      params["ln1_w"], params["ln1_b"], params["ln2_w"], params["ln2_b"],
      params["fc1_w"], params["fc1_b"], params["fc2_w"], params["fc2_b"],
      params["lnf_w"], params["lnf_b"], params["head_w"], params["head_b"])

    policy = (out[:, 1:seq, :policy_ch]                 # patch tokens
              .transpose(0, 2, 1)
              .reshape(B, policy_ch, board_size, board_size))   # NCHW
    value = out[:, 0, policy_ch:policy_ch + VALUE_DIM]  # cls token -> (B, 51)
    return policy, value


# ---------------------------------- main ------------------------------------

if __name__ == "__main__":
    input_channel_num = 4
    block_num = 2
    channel_num = 32
    policy_channel_num = 8
    board_size = 9
    batch = 2
    nhead = channel_num_to_nhead[channel_num]

    key = jax.random.PRNGKey(0)
    pkey, xkey = jax.random.split(key)
    params = build_params(pkey, input_channel_num, channel_num, block_num,
                          nhead, policy_channel_num)
    x = jax.random.normal(
        xkey, (batch, input_channel_num, board_size, board_size),
        dtype=jnp.float32)

    fwd = jax.jit(partial(timm_vit_forward, nhead=nhead,
                          policy_ch=policy_channel_num, board_size=board_size))
    policy, value = fwd(params, x)
    jax.block_until_ready((policy, value))

    assert policy.shape == (batch, policy_channel_num, board_size, board_size)
    assert value.shape == (batch, 51)
    assert policy.dtype == jnp.float32 and value.dtype == jnp.float32
    assert bool(jnp.all(jnp.isfinite(policy))) and bool(jnp.all(jnp.isfinite(value)))
    print("KERNEL_OK")
</pallas_src>

<mosaic_0001>
module attributes {stable_mosaic.version = 11 : i64} {
  func.func @_vit_kernel(%arg0: i32, %arg1: i32, %arg2: memref<1x88x4xf32, #tpu.memory_space<vmem>>, %arg3: memref<4x32xf32, #tpu.memory_space<vmem>>, %arg4: memref<88x32xf32, #tpu.memory_space<vmem>>, %arg5: memref<1x32x96xbf16, #tpu.memory_space<vmem>>, %arg6: memref<1x1x96xf32, #tpu.memory_space<vmem>>, %arg7: memref<1x32x32xbf16, #tpu.memory_space<vmem>>, %arg8: memref<1x1x32xf32, #tpu.memory_space<vmem>>, %arg9: memref<1x1x32xf32, #tpu.memory_space<vmem>>, %arg10: memref<1x1x32xf32, #tpu.memory_space<vmem>>, %arg11: memref<1x1x32xf32, #tpu.memory_space<vmem>>, %arg12: memref<1x1x32xf32, #tpu.memory_space<vmem>>, %arg13: memref<1x32x128xbf16, #tpu.memory_space<vmem>>, %arg14: memref<1x1x128xf32, #tpu.memory_space<vmem>>, %arg15: memref<1x128x32xbf16, #tpu.memory_space<vmem>>, %arg16: memref<1x1x32xf32, #tpu.memory_space<vmem>>, %arg17: memref<1x32xf32, #tpu.memory_space<vmem>>, %arg18: memref<1x32xf32, #tpu.memory_space<vmem>>, %arg19: memref<32x128xbf16, #tpu.memory_space<vmem>>, %arg20: memref<1x128xf32, #tpu.memory_space<vmem>>, %arg21: memref<1x88x128xf32, #tpu.memory_space<vmem>>, %arg22: memref<88x32xf32, #tpu.memory_space<vmem>>) attributes {dimension_semantics = [#tpu.dimension_semantics<parallel>, #tpu.dimension_semantics<arbitrary>], iteration_bounds = array<i64: 2, 2>, scalar_prefetch = 0 : i64, scratch_operands = 1 : i64, tpu.core_type = #tpu.core_type<tc>, window_params = [{transform_indices = @transform_0, window_bounds = array<i64: 1, 88, 4>}, {pipeline_mode = #tpu.pipeline_mode<synchronous>, transform_indices = @transform_1, window_bounds = array<i64: 4, 32>}, {pipeline_mode = #tpu.pipeline_mode<synchronous>, transform_indices = @transform_2, window_bounds = array<i64: 88, 32>}, {transform_indices = @transform_3, window_bounds = array<i64: 1, 32, 96>}, {transform_indices = @transform_4, window_bounds = array<i64: 1, 1, 96>}, {transform_indices = @transform_5, window_bounds = array<i64: 1, 32, 32>}, {transform_indices = @transform_6, window_bounds = array<i64: 1, 1, 32>}, {transform_indices = @transform_7, window_bounds = array<i64: 1, 1, 32>}, {transform_indices = @transform_8, window_bounds = array<i64: 1, 1, 32>}, {transform_indices = @transform_9, window_bounds = array<i64: 1, 1, 32>}, {transform_indices = @transform_10, window_bounds = array<i64: 1, 1, 32>}, {transform_indices = @transform_11, window_bounds = array<i64: 1, 32, 128>}, {transform_indices = @transform_12, window_bounds = array<i64: 1, 1, 128>}, {transform_indices = @transform_13, window_bounds = array<i64: 1, 128, 32>}, {transform_indices = @transform_14, window_bounds = array<i64: 1, 1, 32>}, {pipeline_mode = #tpu.pipeline_mode<synchronous>, transform_indices = @transform_15, window_bounds = array<i64: 1, 32>}, {pipeline_mode = #tpu.pipeline_mode<synchronous>, transform_indices = @transform_16, window_bounds = array<i64: 1, 32>}, {pipeline_mode = #tpu.pipeline_mode<synchronous>, transform_indices = @transform_17, window_bounds = array<i64: 32, 128>}, {pipeline_mode = #tpu.pipeline_mode<synchronous>, transform_indices = @transform_18, window_bounds = array<i64: 1, 128>}, {transform_indices = @transform_19, window_bounds = array<i64: 1, 88, 128>}]} {
    %c0_i32 = arith.constant 0 : i32
    %0 = arith.cmpi eq, %arg1, %c0_i32 : i32
    %1 = arith.extui %0 : i1 to i32
    %c0_i32_0 = arith.constant 0 : i32
    %2 = arith.cmpi ne, %1, %c0_i32_0 : i32
    scf.if %2 {
      %c0_76 = arith.constant 0 : index
      %c0_77 = arith.constant 0 : index
      %c0_78 = arith.constant 0 : index
      %198 = vector.load %arg2[%c0_76, %c0_77, %c0_78] : memref<1x88x4xf32, #tpu.memory_space<vmem>>, vector<1x88x4xf32>
      %199 = vector.shape_cast %198 : vector<1x88x4xf32> to vector<88x4xf32>
      %c0_79 = arith.constant 0 : index
      %c0_80 = arith.constant 0 : index
      %200 = vector.load %arg3[%c0_79, %c0_80] : memref<4x32xf32, #tpu.memory_space<vmem>>, vector<4x32xf32>
      %cst_81 = arith.constant dense<0.000000e+00> : vector<88x32xf32>
      %201 = tpu.matmul %199, %200, %cst_81 {dimension_numbers = #tpu.dot_dimension_numbers<[1], [0], [0], [1], [0, 0, 1, 1], [], []>} : vector<88x4xf32>, vector<4x32xf32>, vector<88x32xf32> -> vector<88x32xf32>
      %c0_82 = arith.constant 0 : index
      %c0_83 = arith.constant 0 : index
      %202 = vector.load %arg4[%c0_82, %c0_83] : memref<88x32xf32, #tpu.memory_space<vmem>>, vector<88x32xf32>
      %203 = arith.addf %201, %202 : vector<88x32xf32>
      %c0_84 = arith.constant 0 : index
      %c0_85 = arith.constant 0 : index
      %204 = vector.load %arg22[%c0_84, %c0_85] : memref<88x32xf32, #tpu.memory_space<vmem>>, vector<88x32xf32>
      tpu.vector_store %arg22[%c0_84, %c0_85], %203 {strides = array<i32>} : memref<88x32xf32, #tpu.memory_space<vmem>>, vector<88x32xf32>,
    } else {
    }
    %3 = tpu.iota {dimensions = array<i32: 1>} : vector<1x88xi32>
    %c82_i32 = arith.constant 82 : i32
    %4 = vector.broadcast %c82_i32 : i32 to vector<1x88xi32>
    %5 = arith.cmpi slt, %3, %4 : vector<1x88xi32>
    %cst = arith.constant 0.000000e+00 : f32
    %cst_1 = arith.constant -1.000000e+30 : f32
    %6 = vector.broadcast %cst : f32 to vector<1x88xf32>
    %7 = vector.broadcast %cst_1 : f32 to vector<1x88xf32>
    %8 = arith.select %5, %6, %7 : vector<1x88xi1>, vector<1x88xf32>
    %c0 = arith.constant 0 : index
    %c0_2 = arith.constant 0 : index
    %9 = vector.load %arg22[%c0, %c0_2] : memref<88x32xf32, #tpu.memory_space<vmem>>, vector<88x32xf32>
    %c0_3 = arith.constant 0 : index
    %c0_4 = arith.constant 0 : index
    %c0_5 = arith.constant 0 : index
    %10 = vector.load %arg9[%c0_3, %c0_4, %c0_5] : memref<1x1x32xf32, #tpu.memory_space<vmem>>, vector<1x1x32xf32>
    %11 = vector.shape_cast %10 : vector<1x1x32xf32> to vector<1x32xf32>
    %c0_6 = arith.constant 0 : index
    %c0_7 = arith.constant 0 : index
    %c0_8 = arith.constant 0 : index
    %12 = vector.load %arg10[%c0_6, %c0_7, %c0_8] : memref<1x1x32xf32, #tpu.memory_space<vmem>>, vector<1x1x32xf32>
    %13 = vector.shape_cast %12 : vector<1x1x32xf32> to vector<1x32xf32>
    %cst_9 = arith.constant dense<0.000000e+00> : vector<88xf32>
    %14 = vector.multi_reduction <add>, %9, %cst_9 [1] : vector<88x32xf32> to vector<88xf32>
    %15 = vector.shape_cast %14 : vector<88xf32> to vector<88x1xf32>
    %cst_10 = arith.constant 3.200000e+01 : f32
    %16 = vector.broadcast %cst_10 : f32 to vector<88x1xf32>
    %17 = arith.divf %15, %16 : vector<88x1xf32>
    %18 = vector.broadcast %17 : vector<88x1xf32> to vector<88x32xf32>
    %19 = arith.subf %9, %18 : vector<88x32xf32>
    %20 = arith.mulf %19, %19 : vector<88x32xf32>
    %cst_11 = arith.constant dense<0.000000e+00> : vector<88xf32>
    %21 = vector.multi_reduction <add>, %20, %cst_11 [1] : vector<88x32xf32> to vector<88xf32>
    %22 = vector.shape_cast %21 : vector<88xf32> to vector<88x1xf32>
    %cst_12 = arith.constant 3.200000e+01 : f32
    %23 = vector.broadcast %cst_12 : f32 to vector<88x1xf32>
    %24 = arith.divf %22, %23 : vector<88x1xf32>
    %25 = vector.broadcast %17 : vector<88x1xf32> to vector<88x32xf32>
    %26 = arith.subf %9, %25 : vector<88x32xf32>
    %cst_13 = arith.constant 9.99999997E-7 : f32
    %27 = vector.broadcast %cst_13 : f32 to vector<88x1xf32>
    %28 = arith.addf %24, %27 : vector<88x1xf32>
    %29 = math.rsqrt %28 : vector<88x1xf32>
    %30 = vector.broadcast %29 : vector<88x1xf32> to vector<88x32xf32>
    %31 = arith.mulf %26, %30 : vector<88x32xf32>
    %32 = vector.broadcast %11 : vector<1x32xf32> to vector<88x32xf32>
    %33 = arith.mulf %31, %32 : vector<88x32xf32>
    %34 = vector.broadcast %13 : vector<1x32xf32> to vector<88x32xf32>
    %35 = arith.addf %33, %34 : vector<88x32xf32>
    %36 = arith.truncf %35 : vector<88x32xf32> to vector<88x32xbf16>
    %c0_14 = arith.constant 0 : index
    %c0_15 = arith.constant 0 : index
    %c0_16 = arith.constant 0 : index
    %37 = vector.load %arg5[%c0_14, %c0_15, %c0_16] : memref<1x32x96xbf16, #tpu.memory_space<vmem>>, vector<1x32x96xbf16>
    %38 = vector.shape_cast %37 : vector<1x32x96xbf16> to vector<32x96xbf16>
    %cst_17 = arith.constant dense<0.000000e+00> : vector<88x96xf32>
    %39 = tpu.matmul %36, %38, %cst_17 {dimension_numbers = #tpu.dot_dimension_numbers<[1], [0], [0], [1], [0, 0, 1, 1], [], []>} : vector<88x32xbf16>, vector<32x96xbf16>, vector<88x96xf32> -> vector<88x96xf32>
    %c0_18 = arith.constant 0 : index
    %c0_19 = arith.constant 0 : index
    %c0_20 = arith.constant 0 : index
    %40 = vector.load %arg6[%c0_18, %c0_19, %c0_20] : memref<1x1x96xf32, #tpu.memory_space<vmem>>, vector<1x1x96xf32>
    %41 = vector.shape_cast %40 : vector<1x1x96xf32> to vector<1x96xf32>
    %42 = vector.broadcast %41 : vector<1x96xf32> to vector<88x96xf32>
    %43 = arith.addf %39, %42 : vector<88x96xf32>
    %44 = vector.extract_strided_slice %43 {offsets = [0, 0], sizes = [88, 8], strides = [1, 1]} : vector<88x96xf32> to vector<88x8xf32>
    %45 = vector.extract_strided_slice %43 {offsets = [0, 32], sizes = [88, 8], strides = [1, 1]} : vector<88x96xf32> to vector<88x8xf32>
    %46 = vector.extract_strided_slice %43 {offsets = [0, 64], sizes = [88, 8], strides = [1, 1]} : vector<88x96xf32> to vector<88x8xf32>
    %47 = arith.truncf %44 : vector<88x8xf32> to vector<88x8xbf16>
    %48 = arith.truncf %45 : vector<88x8xf32> to vector<88x8xbf16>
    %cst_21 = arith.constant dense<0.000000e+00> : vector<88x88xf32>
    %49 = tpu.matmul %47, %48, %cst_21 {dimension_numbers = #tpu.dot_dimension_numbers<[1], [1], [0], [0], [0, 0, 1, 0], [], []>} : vector<88x8xbf16>, vector<88x8xbf16>, vector<88x88xf32> -> vector<88x88xf32>
    %50 = vector.broadcast %8 : vector<1x88xf32> to vector<88x88xf32>
    %51 = arith.addf %49, %50 : vector<88x88xf32>
    %cst_22 = arith.constant dense<0xFF800000> : vector<88xf32>
    %52 = vector.multi_reduction <maximumf>, %51, %cst_22 [1] : vector<88x88xf32> to vector<88xf32>
    %53 = vector.shape_cast %52 : vector<88xf32> to vector<88x1xf32>
    %54 = vector.broadcast %53 : vector<88x1xf32> to vector<88x88xf32>
    %55 = arith.subf %51, %54 : vector<88x88xf32>
    %56 = math.exp %55 : vector<88x88xf32>
    %cst_23 = arith.constant dense<0.000000e+00> : vector<88xf32>
    %57 = vector.multi_reduction <add>, %56, %cst_23 [1] : vector<88x88xf32> to vector<88xf32>
    %58 = vector.shape_cast %57 : vector<88xf32> to vector<88x1xf32>
    %59 = tpu.reciprocal %58 {approx = true} : vector<88x1xf32> -> vector<88x1xf32>
    %60 = vector.broadcast %59 : vector<88x1xf32> to vector<88x88xf32>
    %61 = arith.mulf %56, %60 : vector<88x88xf32>
    %62 = arith.truncf %61 : vector<88x88xf32> to vector<88x88xbf16>
    %63 = arith.truncf %46 : vector<88x8xf32> to vector<88x8xbf16>
    %cst_24 = arith.constant dense<0.000000e+00> : vector<88x8xf32>
    %64 = tpu.matmul %62, %63, %cst_24 {dimension_numbers = #tpu.dot_dimension_numbers<[1], [0], [0], [1], [0, 0, 1, 1], [], []>} : vector<88x88xbf16>, vector<88x8xbf16>, vector<88x8xf32> -> vector<88x8xf32>
    %65 = vector.extract_strided_slice %43 {offsets = [0, 8], sizes = [88, 8], strides = [1, 1]} : vector<88x96xf32> to vector<88x8xf32>
    %66 = vector.extract_strided_slice %43 {offsets = [0, 40], sizes = [88, 8], strides = [1, 1]} : vector<88x96xf32> to vector<88x8xf32>
    %67 = vector.extract_strided_slice %43 {offsets = [0, 72], sizes = [88, 8], strides = [1, 1]} : vector<88x96xf32> to vector<88x8xf32>
    %68 = arith.truncf %65 : vector<88x8xf32> to vector<88x8xbf16>
    %69 = arith.truncf %66 : vector<88x8xf32> to vector<88x8xbf16>
    %cst_25 = arith.constant dense<0.000000e+00> : vector<88x88xf32>
    %70 = tpu.matmul %68, %69, %cst_25 {dimension_numbers = #tpu.dot_dimension_numbers<[1], [1], [0], [0], [0, 0, 1, 0], [], []>} : vector<88x8xbf16>, vector<88x8xbf16>, vector<88x88xf32> -> vector<88x88xf32>
    %71 = vector.broadcast %8 : vector<1x88xf32> to vector<88x88xf32>
    %72 = arith.addf %70, %71 : vector<88x88xf32>
    %cst_26 = arith.constant dense<0xFF800000> : vector<88xf32>
    %73 = vector.multi_reduction <maximumf>, %72, %cst_26 [1] : vector<88x88xf32> to vector<88xf32>
    %74 = vector.shape_cast %73 : vector<88xf32> to vector<88x1xf32>
    %75 = vector.broadcast %74 : vector<88x1xf32> to vector<88x88xf32>
    %76 = arith.subf %72, %75 : vector<88x88xf32>
    %77 = math.exp %76 : vector<88x88xf32>
    %cst_27 = arith.constant dense<0.000000e+00> : vector<88xf32>
    %78 = vector.multi_reduction <add>, %77, %cst_27 [1] : vector<88x88xf32> to vector<88xf32>
    %79 = vector.shape_cast %78 : vector<88xf32> to vector<88x1xf32>
    %80 = tpu.reciprocal %79 {approx = true} : vector<88x1xf32> -> vector<88x1xf32>
    %81 = vector.broadcast %80 : vector<88x1xf32> to vector<88x88xf32>
    %82 = arith.mulf %77, %81 : vector<88x88xf32>
    %83 = arith.truncf %82 : vector<88x88xf32> to vector<88x88xbf16>
    %84 = arith.truncf %67 : vector<88x8xf32> to vector<88x8xbf16>
    %cst_28 = arith.constant dense<0.000000e+00> : vector<88x8xf32>
    %85 = tpu.matmul %83, %84, %cst_28 {dimension_numbers = #tpu.dot_dimension_numbers<[1], [0], [0], [1], [0, 0, 1, 1], [], []>} : vector<88x88xbf16>, vector<88x8xbf16>, vector<88x8xf32> -> vector<88x8xf32>
    %86 = vector.extract_strided_slice %43 {offsets = [0, 16], sizes = [88, 8], strides = [1, 1]} : vector<88x96xf32> to vector<88x8xf32>
    %87 = vector.extract_strided_slice %43 {offsets = [0, 48], sizes = [88, 8], strides = [1, 1]} : vector<88x96xf32> to vector<88x8xf32>
    %88 = vector.extract_strided_slice %43 {offsets = [0, 80], sizes = [88, 8], strides = [1, 1]} : vector<88x96xf32> to vector<88x8xf32>
    %89 = arith.truncf %86 : vector<88x8xf32> to vector<88x8xbf16>
    %90 = arith.truncf %87 : vector<88x8xf32> to vector<88x8xbf16>
    %cst_29 = arith.constant dense<0.000000e+00> : vector<88x88xf32>
    %91 = tpu.matmul %89, %90, %cst_29 {dimension_numbers = #tpu.dot_dimension_numbers<[1], [1], [0], [0], [0, 0, 1, 0], [], []>} : vector<88x8xbf16>, vector<88x8xbf16>, vector<88x88xf32> -> vector<88x88xf32>
    %92 = vector.broadcast %8 : vector<1x88xf32> to vector<88x88xf32>
    %93 = arith.addf %91, %92 : vector<88x88xf32>
    %cst_30 = arith.constant dense<0xFF800000> : vector<88xf32>
    %94 = vector.multi_reduction <maximumf>, %93, %cst_30 [1] : vector<88x88xf32> to vector<88xf32>
    %95 = vector.shape_cast %94 : vector<88xf32> to vector<88x1xf32>
    %96 = vector.broadcast %95 : vector<88x1xf32> to vector<88x88xf32>
    %97 = arith.subf %93, %96 : vector<88x88xf32>
    %98 = math.exp %97 : vector<88x88xf32>
    %cst_31 = arith.constant dense<0.000000e+00> : vector<88xf32>
    %99 = vector.multi_reduction <add>, %98, %cst_31 [1] : vector<88x88xf32> to vector<88xf32>
    %100 = vector.shape_cast %99 : vector<88xf32> to vector<88x1xf32>
    %101 = tpu.reciprocal %100 {approx = true} : vector<88x1xf32> -> vector<88x1xf32>
    %102 = vector.broadcast %101 : vector<88x1xf32> to vector<88x88xf32>
    %103 = arith.mulf %98, %102 : vector<88x88xf32>
    %104 = arith.truncf %103 : vector<88x88xf32> to vector<88x88xbf16>
    %105 = arith.truncf %88 : vector<88x8xf32> to vector<88x8xbf16>
    %cst_32 = arith.constant dense<0.000000e+00> : vector<88x8xf32>
    %106 = tpu.matmul %104, %105, %cst_32 {dimension_numbers = #tpu.dot_dimension_numbers<[1], [0], [0], [1], [0, 0, 1, 1], [], []>} : vector<88x88xbf16>, vector<88x8xbf16>, vector<88x8xf32> -> vector<88x8xf32>
    %107 = vector.extract_strided_slice %43 {offsets = [0, 24], sizes = [88, 8], strides = [1, 1]} : vector<88x96xf32> to vector<88x8xf32>
    %108 = vector.extract_strided_slice %43 {offsets = [0, 56], sizes = [88, 8], strides = [1, 1]} : vector<88x96xf32> to vector<88x8xf32>
    %109 = vector.extract_strided_slice %43 {offsets = [0, 88], sizes = [88, 8], strides = [1, 1]} : vector<88x96xf32> to vector<88x8xf32>
    %110 = arith.truncf %107 : vector<88x8xf32> to vector<88x8xbf16>
    %111 = arith.truncf %108 : vector<88x8xf32> to vector<88x8xbf16>
    %cst_33 = arith.constant dense<0.000000e+00> : vector<88x88xf32>
    %112 = tpu.matmul %110, %111, %cst_33 {dimension_numbers = #tpu.dot_dimension_numbers<[1], [1], [0], [0], [0, 0, 1, 0], [], []>} : vector<88x8xbf16>, vector<88x8xbf16>, vector<88x88xf32> -> vector<88x88xf32>
    %113 = vector.broadcast %8 : vector<1x88xf32> to vector<88x88xf32>
    %114 = arith.addf %112, %113 : vector<88x88xf32>
    %cst_34 = arith.constant dense<0xFF800000> : vector<88xf32>
    %115 = vector.multi_reduction <maximumf>, %114, %cst_34 [1] : vector<88x88xf32> to vector<88xf32>
    %116 = vector.shape_cast %115 : vector<88xf32> to vector<88x1xf32>
    %117 = vector.broadcast %116 : vector<88x1xf32> to vector<88x88xf32>
    %118 = arith.subf %114, %117 : vector<88x88xf32>
    %119 = math.exp %118 : vector<88x88xf32>
    %cst_35 = arith.constant dense<0.000000e+00> : vector<88xf32>
    %120 = vector.multi_reduction <add>, %119, %cst_35 [1] : vector<88x88xf32> to vector<88xf32>
    %121 = vector.shape_cast %120 : vector<88xf32> to vector<88x1xf32>
    %122 = tpu.reciprocal %121 {approx = true} : vector<88x1xf32> -> vector<88x1xf32>
    %123 = vector.broadcast %122 : vector<88x1xf32> to vector<88x88xf32>
    %124 = arith.mulf %119, %123 : vector<88x88xf32>
    %125 = arith.truncf %124 : vector<88x88xf32> to vector<88x88xbf16>
    %126 = arith.truncf %109 : vector<88x8xf32> to vector<88x8xbf16>
    %cst_36 = arith.constant dense<0.000000e+00> : vector<88x8xf32>
    %127 = tpu.matmul %125, %126, %cst_36 {dimension_numbers = #tpu.dot_dimension_numbers<[1], [0], [0], [1], [0, 0, 1, 1], [], []>} : vector<88x88xbf16>, vector<88x8xbf16>, vector<88x8xf32> -> vector<88x8xf32>
    %128 = tpu.concatenate %64, %85, %106, %127 in 1 : vector<88x8xf32>, vector<88x8xf32>, vector<88x8xf32>, vector<88x8xf32> -> vector<88x32xf32>
    %129 = arith.truncf %128 : vector<88x32xf32> to vector<88x32xbf16>
    %c0_37 = arith.constant 0 : index
    %c0_38 = arith.constant 0 : index
    %c0_39 = arith.constant 0 : index
    %130 = vector.load %arg7[%c0_37, %c0_38, %c0_39] : memref<1x32x32xbf16, #tpu.memory_space<vmem>>, vector<1x32x32xbf16>
    %131 = vector.shape_cast %130 : vector<1x32x32xbf16> to vector<32x32xbf16>
    %cst_40 = arith.constant dense<0.000000e+00> : vector<88x32xf32>
    %132 = tpu.matmul %129, %131, %cst_40 {dimension_numbers = #tpu.dot_dimension_numbers<[1], [0], [0], [1], [0, 0, 1, 1], [], []>} : vector<88x32xbf16>, vector<32x32xbf16>, vector<88x32xf32> -> vector<88x32xf32>
    %c0_41 = arith.constant 0 : index
    %c0_42 = arith.constant 0 : index
    %c0_43 = arith.constant 0 : index
    %133 = vector.load %arg8[%c0_41, %c0_42, %c0_43] : memref<1x1x32xf32, #tpu.memory_space<vmem>>, vector<1x1x32xf32>
    %134 = vector.shape_cast %133 : vector<1x1x32xf32> to vector<1x32xf32>
    %135 = vector.broadcast %134 : vector<1x32xf32> to vector<88x32xf32>
    %136 = arith.addf %132, %135 : vector<88x32xf32>
    %137 = arith.addf %9, %136 : vector<88x32xf32>
    %c0_44 = arith.constant 0 : index
    %c0_45 = arith.constant 0 : index
    %c0_46 = arith.constant 0 : index
    %138 = vector.load %arg11[%c0_44, %c0_45, %c0_46] : memref<1x1x32xf32, #tpu.memory_space<vmem>>, vector<1x1x32xf32>
    %139 = vector.shape_cast %138 : vector<1x1x32xf32> to vector<1x32xf32>
    %c0_47 = arith.constant 0 : index
    %c0_48 = arith.constant 0 : index
    %c0_49 = arith.constant 0 : index
    %140 = vector.load %arg12[%c0_47, %c0_48, %c0_49] : memref<1x1x32xf32, #tpu.memory_space<vmem>>, vector<1x1x32xf32>
    %141 = vector.shape_cast %140 : vector<1x1x32xf32> to vector<1x32xf32>
    %cst_50 = arith.constant dense<0.000000e+00> : vector<88xf32>
    %142 = vector.multi_reduction <add>, %137, %cst_50 [1] : vector<88x32xf32> to vector<88xf32>
    %143 = vector.shape_cast %142 : vector<88xf32> to vector<88x1xf32>
    %cst_51 = arith.constant 3.200000e+01 : f32
    %144 = vector.broadcast %cst_51 : f32 to vector<88x1xf32>
    %145 = arith.divf %143, %144 : vector<88x1xf32>
    %146 = vector.broadcast %145 : vector<88x1xf32> to vector<88x32xf32>
    %147 = arith.subf %137, %146 : vector<88x32xf32>
    %148 = arith.mulf %147, %147 : vector<88x32xf32>
    %cst_52 = arith.constant dense<0.000000e+00> : vector<88xf32>
    %149 = vector.multi_reduction <add>, %148, %cst_52 [1] : vector<88x32xf32> to vector<88xf32>
    %150 = vector.shape_cast %149 : vector<88xf32> to vector<88x1xf32>
    %cst_53 = arith.constant 3.200000e+01 : f32
    %151 = vector.broadcast %cst_53 : f32 to vector<88x1xf32>
    %152 = arith.divf %150, %151 : vector<88x1xf32>
    %153 = vector.broadcast %145 : vector<88x1xf32> to vector<88x32xf32>
    %154 = arith.subf %137, %153 : vector<88x32xf32>
    %cst_54 = arith.constant 9.99999997E-7 : f32
    %155 = vector.broadcast %cst_54 : f32 to vector<88x1xf32>
    %156 = arith.addf %152, %155 : vector<88x1xf32>
    %157 = math.rsqrt %156 : vector<88x1xf32>
    %158 = vector.broadcast %157 : vector<88x1xf32> to vector<88x32xf32>
    %159 = arith.mulf %154, %158 : vector<88x32xf32>
    %160 = vector.broadcast %139 : vector<1x32xf32> to vector<88x32xf32>
    %161 = arith.mulf %159, %160 : vector<88x32xf32>
    %162 = vector.broadcast %141 : vector<1x32xf32> to vector<88x32xf32>
    %163 = arith.addf %161, %162 : vector<88x32xf32>
    %164 = arith.truncf %163 : vector<88x32xf32> to vector<88x32xbf16>
    %c0_55 = arith.constant 0 : index
    %c0_56 = arith.constant 0 : index
    %c0_57 = arith.constant 0 : index
    %165 = vector.load %arg13[%c0_55, %c0_56, %c0_57] : memref<1x32x128xbf16, #tpu.memory_space<vmem>>, vector<1x32x128xbf16>
    %166 = vector.shape_cast %165 : vector<1x32x128xbf16> to vector<32x128xbf16>
    %cst_58 = arith.constant dense<0.000000e+00> : vector<88x128xf32>
    %167 = tpu.matmul %164, %166, %cst_58 {dimension_numbers = #tpu.dot_dimension_numbers<[1], [0], [0], [1], [0, 0, 1, 1], [], []>} : vector<88x32xbf16>, vector<32x128xbf16>, vector<88x128xf32> -> vector<88x128xf32>
    %c0_59 = arith.constant 0 : index
    %c0_60 = arith.constant 0 : index
    %c0_61 = arith.constant 0 : index
    %168 = vector.load %arg14[%c0_59, %c0_60, %c0_61] : memref<1x1x128xf32, #tpu.memory_space<vmem>>, vector<1x1x128xf32>
    %169 = vector.shape_cast %168 : vector<1x1x128xf32> to vector<1x128xf32>
    %170 = vector.broadcast %169 : vector<1x128xf32> to vector<88x128xf32>
    %171 = arith.addf %167, %170 : vector<88x128xf32>
    %cst_62 = arith.constant 5.000000e-01 : f32
    %172 = vector.broadcast %cst_62 : f32 to vector<88x128xf32>
    %173 = arith.mulf %172, %171 : vector<88x128xf32>
    %cst_63 = arith.constant 4.471500e-02 : f32
    %174 = vector.broadcast %cst_63 : f32 to vector<88x128xf32>
    %175 = arith.mulf %174, %171 : vector<88x128xf32>
    %176 = arith.mulf %175, %171 : vector<88x128xf32>
    %177 = arith.mulf %176, %171 : vector<88x128xf32>
    %178 = arith.addf %171, %177 : vector<88x128xf32>
    %cst_64 = arith.constant 0.797884583 : f32
    %179 = vector.broadcast %cst_64 : f32 to vector<88x128xf32>
    %180 = arith.mulf %179, %178 : vector<88x128xf32>
    %181 = math.tanh %180 : vector<88x128xf32>
    %cst_65 = arith.constant 1.000000e+00 : f32
    %182 = vector.broadcast %cst_65 : f32 to vector<88x128xf32>
    %183 = arith.addf %182, %181 : vector<88x128xf32>
    %184 = arith.mulf %173, %183 : vector<88x128xf32>
    %185 = arith.truncf %184 : vector<88x128xf32> to vector<88x128xbf16>
    %c0_66 = arith.constant 0 : index
    %c0_67 = arith.constant 0 : index
    %c0_68 = arith.constant 0 : index
    %186 = vector.load %arg15[%c0_66, %c0_67, %c0_68] : memref<1x128x32xbf16, #tpu.memory_space<vmem>>, vector<1x128x32xbf16>
    %187 = vector.shape_cast %186 : vector<1x128x32xbf16> to vector<128x32xbf16>
    %cst_69 = arith.constant dense<0.000000e+00> : vector<88x32xf32>
    %188 = tpu.matmul %185, %187, %cst_69 {dimension_numbers = #tpu.dot_dimension_numbers<[1], [0], [0], [1], [0, 0, 1, 1], [], []>} : vector<88x128xbf16>, vector<128x32xbf16>, vector<88x32xf32> -> vector<88x32xf32>
    %c0_70 = arith.constant 0 : index
    %c0_71 = arith.constant 0 : index
    %c0_72 = arith.constant 0 : index
    %189 = vector.load %arg16[%c0_70, %c0_71, %c0_72] : memref<1x1x32xf32, #tpu.memory_space<vmem>>, vector<1x1x32xf32>
    %190 = vector.shape_cast %189 : vector<1x1x32xf32> to vector<1x32xf32>
    %191 = vector.broadcast %190 : vector<1x32xf32> to vector<88x32xf32>
    %192 = arith.addf %188, %191 : vector<88x32xf32>
    %193 = arith.addf %137, %192 : vector<88x32xf32>
    %c0_73 = arith.constant 0 : index
    %c0_74 = arith.constant 0 : index
    %194 = vector.load %arg22[%c0_73, %c0_74] : memref<88x32xf32, #tpu.memory_space<vmem>>, vector<88x32xf32>
    tpu.vector_store %arg22[%c0_73, %c0_74], %193 {strides = array<i32>} : memref<88x32xf32, #tpu.memory_space<vmem>>, vector<88x32xf32>,
    %c1_i32 = arith.constant 1 : i32
    %195 = arith.cmpi eq, %arg1, %c1_i32 : i32
    %196 = arith.extui %195 : i1 to i32
    %c0_i32_75 = arith.constant 0 : i32
    %197 = arith.cmpi ne, %196, %c0_i32_75 : i32
    scf.if %197 {
      %c0_76 = arith.constant 0 : index
      %c0_77 = arith.constant 0 : index
      %198 = vector.load %arg22[%c0_76, %c0_77] : memref<88x32xf32, #tpu.memory_space<vmem>>, vector<88x32xf32>
      %c0_78 = arith.constant 0 : index
      %c0_79 = arith.constant 0 : index
      %199 = vector.load %arg17[%c0_78, %c0_79] : memref<1x32xf32, #tpu.memory_space<vmem>>, vector<1x32xf32>
      %c0_80 = arith.constant 0 : index
      %c0_81 = arith.constant 0 : index
      %200 = vector.load %arg18[%c0_80, %c0_81] : memref<1x32xf32, #tpu.memory_space<vmem>>, vector<1x32xf32>
      %cst_82 = arith.constant dense<0.000000e+00> : vector<88xf32>
      %201 = vector.multi_reduction <add>, %198, %cst_82 [1] : vector<88x32xf32> to vector<88xf32>
      %202 = vector.shape_cast %201 : vector<88xf32> to vector<88x1xf32>
      %cst_83 = arith.constant 3.200000e+01 : f32
      %203 = vector.broadcast %cst_83 : f32 to vector<88x1xf32>
      %204 = arith.divf %202, %203 : vector<88x1xf32>
      %205 = vector.broadcast %204 : vector<88x1xf32> to vector<88x32xf32>
      %206 = arith.subf %198, %205 : vector<88x32xf32>
      %207 = arith.mulf %206, %206 : vector<88x32xf32>
      %cst_84 = arith.constant dense<0.000000e+00> : vector<88xf32>
      %208 = vector.multi_reduction <add>, %207, %cst_84 [1] : vector<88x32xf32> to vector<88xf32>
      %209 = vector.shape_cast %208 : vector<88xf32> to vector<88x1xf32>
      %cst_85 = arith.constant 3.200000e+01 : f32
      %210 = vector.broadcast %cst_85 : f32 to vector<88x1xf32>
      %211 = arith.divf %209, %210 : vector<88x1xf32>
      %212 = vector.broadcast %204 : vector<88x1xf32> to vector<88x32xf32>
      %213 = arith.subf %198, %212 : vector<88x32xf32>
      %cst_86 = arith.constant 9.99999997E-7 : f32
      %214 = vector.broadcast %cst_86 : f32 to vector<88x1xf32>
      %215 = arith.addf %211, %214 : vector<88x1xf32>
      %216 = math.rsqrt %215 : vector<88x1xf32>
      %217 = vector.broadcast %216 : vector<88x1xf32> to vector<88x32xf32>
      %218 = arith.mulf %213, %217 : vector<88x32xf32>
      %219 = vector.broadcast %199 : vector<1x32xf32> to vector<88x32xf32>
      %220 = arith.mulf %218, %219 : vector<88x32xf32>
      %221 = vector.broadcast %200 : vector<1x32xf32> to vector<88x32xf32>
      %222 = arith.addf %220, %221 : vector<88x32xf32>
      %223 = arith.truncf %222 : vector<88x32xf32> to vector<88x32xbf16>
      %c0_87 = arith.constant 0 : index
      %c0_88 = arith.constant 0 : index
      %224 = vector.load %arg19[%c0_87, %c0_88] : memref<32x128xbf16, #tpu.memory_space<vmem>>, vector<32x128xbf16>
      %cst_89 = arith.constant dense<0.000000e+00> : vector<88x128xf32>
      %225 = tpu.matmul %223, %224, %cst_89 {dimension_numbers = #tpu.dot_dimension_numbers<[1], [0], [0], [1], [0, 0, 1, 1], [], []>} : vector<88x32xbf16>, vector<32x128xbf16>, vector<88x128xf32> -> vector<88x128xf32>
      %c0_90 = arith.constant 0 : index
      %c0_91 = arith.constant 0 : index
      %226 = vector.load %arg20[%c0_90, %c0_91] : memref<1x128xf32, #tpu.memory_space<vmem>>, vector<1x128xf32>
      %227 = vector.broadcast %226 : vector<1x128xf32> to vector<88x128xf32>
      %228 = arith.addf %225, %227 : vector<88x128xf32>
      %c0_92 = arith.constant 0 : index
      %c0_93 = arith.constant 0 : index
      %c0_94 = arith.constant 0 : index
      %229 = vector.load %arg21[%c0_92, %c0_93, %c0_94] : memref<1x88x128xf32, #tpu.memory_space<vmem>>, vector<1x88x128xf32>
      %230 = vector.shape_cast %229 : vector<1x88x128xf32> to vector<88x128xf32>
      %231 = vector.shape_cast %228 : vector<88x128xf32> to vector<1x88x128xf32>
      tpu.vector_store %arg21[%c0_92, %c0_93, %c0_94], %231 {strides = array<i32>} : memref<1x88x128xf32, #tpu.memory_space<vmem>>, vector<1x88x128xf32>,
    } else {
    }
    return
  }
  func.func @transform_0(%arg0: i32, %arg1: i32) -> (i32, i32, i32) {
    %c0_i32 = arith.constant 0 : i32
    %c0_i32_0 = arith.constant 0 : i32
    %c0_i32_1 = arith.constant 0 : i32
    return %arg0, %c0_i32, %c0_i32_0 : i32, i32, i32
  }
  func.func @transform_1(%arg0: i32, %arg1: i32) -> (i32, i32) {
    %c0_i32 = arith.constant 0 : i32
    %c0_i32_0 = arith.constant 0 : i32
    %c0_i32_1 = arith.constant 0 : i32
    return %c0_i32, %c0_i32_0 : i32, i32
  }
  func.func @transform_2(%arg0: i32, %arg1: i32) -> (i32, i32) {
    %c0_i32 = arith.constant 0 : i32
    %c0_i32_0 = arith.constant 0 : i32
    %c0_i32_1 = arith.constant 0 : i32
    return %c0_i32, %c0_i32_0 : i32, i32
  }
  func.func @transform_3(%arg0: i32, %arg1: i32) -> (i32, i32, i32) {
    %c0_i32 = arith.constant 0 : i32
    %c0_i32_0 = arith.constant 0 : i32
    %c0_i32_1 = arith.constant 0 : i32
    return %arg1, %c0_i32, %c0_i32_0 : i32, i32, i32
  }
  func.func @transform_4(%arg0: i32, %arg1: i32) -> (i32, i32, i32) {
    %c0_i32 = arith.constant 0 : i32
    %c0_i32_0 = arith.constant 0 : i32
    %c0_i32_1 = arith.constant 0 : i32
    return %arg1, %c0_i32, %c0_i32_0 : i32, i32, i32
  }
  func.func @transform_5(%arg0: i32, %arg1: i32) -> (i32, i32, i32) {
    %c0_i32 = arith.constant 0 : i32
    %c0_i32_0 = arith.constant 0 : i32
    %c0_i32_1 = arith.constant 0 : i32
    return %arg1, %c0_i32, %c0_i32_0 : i32, i32, i32
  }
  func.func @transform_6(%arg0: i32, %arg1: i32) -> (i32, i32, i32) {
    %c0_i32 = arith.constant 0 : i32
    %c0_i32_0 = arith.constant 0 : i32
    %c0_i32_1 = arith.constant 0 : i32
    return %arg1, %c0_i32, %c0_i32_0 : i32, i32, i32
  }
  func.func @transform_7(%arg0: i32, %arg1: i32) -> (i32, i32, i32) {
    %c0_i32 = arith.constant 0 : i32
    %c0_i32_0 = arith.constant 0 : i32
    %c0_i32_1 = arith.constant 0 : i32
    return %arg1, %c0_i32, %c0_i32_0 : i32, i32, i32
  }
  func.func @transform_8(%arg0: i32, %arg1: i32) -> (i32, i32, i32) {
    %c0_i32 = arith.constant 0 : i32
    %c0_i32_0 = arith.constant 0 : i32
    %c0_i32_1 = arith.constant 0 : i32
    return %arg1, %c0_i32, %c0_i32_0 : i32, i32, i32
  }
  func.func @transform_9(%arg0: i32, %arg1: i32) -> (i32, i32, i32) {
    %c0_i32 = arith.constant 0 : i32
    %c0_i32_0 = arith.constant 0 : i32
    %c0_i32_1 = arith.constant 0 : i32
    return %arg1, %c0_i32, %c0_i32_0 : i32, i32, i32
  }
  func.func @transform_10(%arg0: i32, %arg1: i32) -> (i32, i32, i32) {
    %c0_i32 = arith.constant 0 : i32
    %c0_i32_0 = arith.constant 0 : i32
    %c0_i32_1 = arith.constant 0 : i32
    return %arg1, %c0_i32, %c0_i32_0 : i32, i32, i32
  }
  func.func @transform_11(%arg0: i32, %arg1: i32) -> (i32, i32, i32) {
    %c0_i32 = arith.constant 0 : i32
    %c0_i32_0 = arith.constant 0 : i32
    %c0_i32_1 = arith.constant 0 : i32
    return %arg1, %c0_i32, %c0_i32_0 : i32, i32, i32
  }
  func.func @transform_12(%arg0: i32, %arg1: i32) -> (i32, i32, i32) {
    %c0_i32 = arith.constant 0 : i32
    %c0_i32_0 = arith.constant 0 : i32
    %c0_i32_1 = arith.constant 0 : i32
    return %arg1, %c0_i32, %c0_i32_0 : i32, i32, i32
  }
  func.func @transform_13(%arg0: i32, %arg1: i32) -> (i32, i32, i32) {
    %c0_i32 = arith.constant 0 : i32
    %c0_i32_0 = arith.constant 0 : i32
    %c0_i32_1 = arith.constant 0 : i32
    return %arg1, %c0_i32, %c0_i32_0 : i32, i32, i32
  }
  func.func @transform_14(%arg0: i32, %arg1: i32) -> (i32, i32, i32) {
    %c0_i32 = arith.constant 0 : i32
    %c0_i32_0 = arith.constant 0 : i32
    %c0_i32_1 = arith.constant 0 : i32
    return %arg1, %c0_i32, %c0_i32_0 : i32, i32, i32
  }
  func.func @transform_15(%arg0: i32, %arg1: i32) -> (i32, i32) {
    %c0_i32 = arith.constant 0 : i32
    %c0_i32_0 = arith.constant 0 : i32
    %c0_i32_1 = arith.constant 0 : i32
    return %c0_i32, %c0_i32_0 : i32, i32
  }
  func.func @transform_16(%arg0: i32, %arg1: i32) -> (i32, i32) {
    %c0_i32 = arith.constant 0 : i32
    %c0_i32_0 = arith.constant 0 : i32
    %c0_i32_1 = arith.constant 0 : i32
    return %c0_i32, %c0_i32_0 : i32, i32
  }
  func.func @transform_17(%arg0: i32, %arg1: i32) -> (i32, i32) {
    %c0_i32 = arith.constant 0 : i32
    %c0_i32_0 = arith.constant 0 : i32
    %c0_i32_1 = arith.constant 0 : i32
    return %c0_i32, %c0_i32_0 : i32, i32
  }
  func.func @transform_18(%arg0: i32, %arg1: i32) -> (i32, i32) {
    %c0_i32 = arith.constant 0 : i32
    %c0_i32_0 = arith.constant 0 : i32
    %c0_i32_1 = arith.constant 0 : i32
    return %c0_i32, %c0_i32_0 : i32, i32
  }
  func.func @transform_19(%arg0: i32, %arg1: i32) -> (i32, i32, i32) {
    %c0_i32 = arith.constant 0 : i32
    %c0_i32_0 = arith.constant 0 : i32
    %c0_i32_1 = arith.constant 0 : i32
    return %arg0, %c0_i32, %c0_i32_0 : i32, i32, i32
  }
}

</mosaic_0001>

<llo_original>
// kernel: timm_vit_forward.1
$region0: #{timm_vit_forward.1}
  #allocation0 [shape = 'u32[]', space=smem, size = 0x4, offset = 0x4, fixed_abs, tag = 'smem constant byte address 0x4 - core index']
  #allocation1 [shape = 'u32[72,128]{1,0:T(1,128)}', space=vmem, size = 0x9000, scoped, tag = 'internal scratch']
  #allocation2 [shape = 'f32[88,32]{1,0:T(8,128)}', space=vmem, size = 0xb000, scoped, tag = 'scratch operand']
  %s0 = inlined_call_operand.vmem [shape: f32[2,88,4], index: 0, kind: input, shape index: {}]
  %s1 = inlined_call_operand.vmem [shape: f32[4,32], index: 1, kind: input, shape index: {}]
  %s2 = inlined_call_operand.vmem [shape: f32[88,32], index: 2, kind: input, shape index: {}]
  %s3 = inlined_call_operand.vmem [shape: bf16[2,32,96], index: 3, kind: input, shape index: {}]
  %s4 = inlined_call_operand.vmem [shape: f32[2,1,96], index: 4, kind: input, shape index: {}]
  %s5 = inlined_call_operand.vmem [shape: bf16[2,32,32], index: 5, kind: input, shape index: {}]
  %s6 = inlined_call_operand.vmem [shape: f32[2,1,32], index: 6, kind: input, shape index: {}]
  %s7 = inlined_call_operand.vmem [shape: f32[2,1,32], index: 7, kind: input, shape index: {}]
  %s8 = inlined_call_operand.vmem [shape: f32[2,1,32], index: 8, kind: input, shape index: {}]
  %s9 = inlined_call_operand.vmem [shape: f32[2,1,32], index: 9, kind: input, shape index: {}]
  %s10 = inlined_call_operand.vmem [shape: f32[2,1,32], index: 10, kind: input, shape index: {}]
  %s11 = inlined_call_operand.vmem [shape: bf16[2,32,128], index: 11, kind: input, shape index: {}]
  %s12 = inlined_call_operand.vmem [shape: f32[2,1,128], index: 12, kind: input, shape index: {}]
  %s13 = inlined_call_operand.vmem [shape: bf16[2,128,32], index: 13, kind: input, shape index: {}]
  %s14 = inlined_call_operand.vmem [shape: f32[2,1,32], index: 14, kind: input, shape index: {}]
  %s15 = inlined_call_operand.vmem [shape: f32[1,32], index: 15, kind: input, shape index: {}]
  %s16 = inlined_call_operand.vmem [shape: f32[1,32], index: 16, kind: input, shape index: {}]
  %s17 = inlined_call_operand.vmem [shape: bf16[32,128], index: 17, kind: input, shape index: {}]
  %s18 = inlined_call_operand.vmem [shape: f32[1,128], index: 18, kind: input, shape index: {}]
  %s19 = inlined_call_operand.vmem [shape: f32[2,88,128], index: 19, kind: output, shape index: {}]
  %s20 = sld [smem:[#allocation0]]
  $region117: #{timm_vit_forward.1} parent=0
    _
  %s22 = ssub.s32 1, %s20
  %s23 = scalar_select 0, %s22, %s20
  loop: start=0, step=1, limit=6
  $region2: #{timm_vit_forward.1} parent=0 // loop_pre_header
    _
  $region3: #{timm_vit_forward.1} parent=0 // loop_header
    %s25 = sphi 0, %s29
    %p26 = scmp.ge.s32.totalorder %s25, 6
    %s32 = sphi 0, %s44
    %s33 = sphi 0, %s40
    %s34 = sphi 0, %s32
    %s35 = sphi 0, %s33
    %s36 = sphi 0, %s34
    %s37 = sphi 0, %s35
    %s47 = sphi 0, %s49
    %s50 = sphi 0, %s47
    %s51 = sphi 0, %s50
    %s67 = sphi 0, %s51
    %s71 = sphi 0, %s71
    %s73 = sphi 0, %s71
    %s74 = sphi 0, %s73
    %s88 = sphi 0, %s74
    %s92 = sphi 0, %s92
    %s94 = sphi 0, %s92
    %s95 = sphi 0, %s94
    %s109 = sphi 0, %s95
    %s115 = sphi 0, %s117
    %s118 = sphi 0, %s115
    %s119 = sphi 0, %s118
    %s135 = sphi 0, %s119
    %s141 = sphi 0, %s143
    %s144 = sphi 0, %s141
    %s145 = sphi 0, %s144
    %s161 = sphi 0, %s145
    %s167 = sphi 0, %s169
    %s170 = sphi 0, %s167
    %s171 = sphi 0, %s170
    %s187 = sphi 0, %s171
    %s193 = sphi 0, %s195
    %s196 = sphi 0, %s193
    %s197 = sphi 0, %s196
    %s213 = sphi 0, %s197
    %s219 = sphi 0, %s221
    %s222 = sphi 0, %s219
    %s223 = sphi 0, %s222
    %s239 = sphi 0, %s223
    %s245 = sphi 0, %s247
    %s248 = sphi 0, %s245
    %s249 = sphi 0, %s248
    %s265 = sphi 0, %s249
    %s271 = sphi 0, %s273
    %s274 = sphi 0, %s271
    %s275 = sphi 0, %s274
    %s291 = sphi 0, %s275
    %s297 = sphi 0, %s299
    %s300 = sphi 0, %s297
    %s301 = sphi 0, %s300
    %s317 = sphi 0, %s301
    %s323 = sphi 0, %s325
    %s326 = sphi 0, %s323
    %s327 = sphi 0, %s326
    %s343 = sphi 0, %s327
    %s349 = sphi 0, %s351
    %s352 = sphi 0, %s349
    %s353 = sphi 0, %s352
    %s369 = sphi 0, %s353
    %s375 = sphi 0, %s377
    %s378 = sphi 0, %s375
    %s379 = sphi 0, %s378
    %s395 = sphi 0, %s379
    %s401 = sphi 0, %s403
    %s404 = sphi 0, %s401
    %s405 = sphi 0, %s404
    %s421 = sphi 0, %s405
    %s425 = sphi 0, %s425
    %s427 = sphi 0, %s425
    %s428 = sphi 0, %s427
    %s442 = sphi 0, %s428
    %s446 = sphi 0, %s446
    %s448 = sphi 0, %s446
    %s449 = sphi 0, %s448
    %s463 = sphi 0, %s449
    %s467 = sphi 0, %s467
    %s469 = sphi 0, %s467
    %s470 = sphi 0, %s469
    %s484 = sphi 0, %s470
    %s488 = sphi 0, %s488
    %s490 = sphi 0, %s488
    %s491 = sphi 0, %s490
    %s505 = sphi 0, %s491
    %s511 = sphi 0, %s513
    %s514 = sphi 0, %s511
    %s515 = sphi 0, %s514
    %s531 = sphi 0, %s515
  $region4: #{timm_vit_forward.1} parent=0 // loop_header_branch
    %28 = sbr.rel (%p26) target = $region8
  $region5: #{timm_vit_forward.1} parent=0 // loop_body
    %s30 = ssub.s32 %s25, 1
    %s31 = ssub.s32 %s25, 2
    %s38 = sadd.s32 1, %s33
    %p39 = scmp.ge.s32.totalorder %s38, 2
    %s40 = scalar_select %p39, 0, %s38
    %s41 = sadd.s32 1, %s32
    %s42 = scalar_select %p39, %s41, %s32
    %p43 = scmp.ge.s32.totalorder %s42, 2
    %s44 = scalar_select %p43, 0, %s42
    %s45 = ssub.s32 %s32, %s44
    %p46 = scmp.eq.s32.totalorder %s45, 0
    %s48 = sadd.s32 %s47, 1
    %s49 = scalar_select %p46, %s47, %s48
    %p52 = pneg %p46
    %p53 = scmp.eq.s32.totalorder %s25, 3
    %p54 = por %p52, %p53
    %p55 = scmp.ne.s32.totalorder %s47, %s50
    %p56 = scmp.eq.s32.totalorder %s25, 0
    %p57 = por %p55, %p56
    %p58 = scmp.ne.s32.totalorder %s47, %s50
    %p59 = scmp.eq.s32.totalorder %s30, 3
    %p60 = por %p58, %p59
    %p61 = scmp.ne.s32.totalorder %s50, %s51
    %p62 = scmp.eq.s32.totalorder %s30, 0
    %p63 = por %p61, %p62
    %p64 = scmp.ne.s32.totalorder %s50, %s51
    %p65 = scmp.eq.s32.totalorder %s31, 3
    %p66 = por %p64, %p65
    %p68 = scmp.ne.s32.totalorder %s51, %s67
    %p69 = scmp.eq.s32.totalorder %s31, 0
    %p70 = por %p68, %p69
    %s72 = sadd.s32 %s71, 1
    %p75 = scmp.eq.s32.totalorder %s25, 3
    %p76 = scmp.ne.s32.totalorder %s71, %s73
    %p77 = scmp.eq.s32.totalorder %s25, 0
    %p78 = por %p76, %p77
    %p79 = scmp.ne.s32.totalorder %s71, %s73
    %p80 = scmp.eq.s32.totalorder %s30, 3
    %p81 = por %p79, %p80
    %p82 = scmp.ne.s32.totalorder %s73, %s74
    %p83 = scmp.eq.s32.totalorder %s30, 0
    %p84 = por %p82, %p83
    %p85 = scmp.ne.s32.totalorder %s73, %s74
    %p86 = scmp.eq.s32.totalorder %s31, 3
    %p87 = por %p85, %p86
    %p89 = scmp.ne.s32.totalorder %s74, %s88
    %p90 = scmp.eq.s32.totalorder %s31, 0
    %p91 = por %p89, %p90
    %s93 = sadd.s32 %s92, 1
    %p96 = scmp.eq.s32.totalorder %s25, 3
    %p97 = scmp.ne.s32.totalorder %s92, %s94
    %p98 = scmp.eq.s32.totalorder %s25, 0
    %p99 = por %p97, %p98
    %p100 = scmp.ne.s32.totalorder %s92, %s94
    %p101 = scmp.eq.s32.totalorder %s30, 3
    %p102 = por %p100, %p101
    %p103 = scmp.ne.s32.totalorder %s94, %s95
    %p104 = scmp.eq.s32.totalorder %s30, 0
    %p105 = por %p103, %p104
    %p106 = scmp.ne.s32.totalorder %s94, %s95
    %p107 = scmp.eq.s32.totalorder %s31, 3
    %p108 = por %p106, %p107
    %p110 = scmp.ne.s32.totalorder %s95, %s109
    %p111 = scmp.eq.s32.totalorder %s31, 0
    %p112 = por %p110, %p111
    %s113 = ssub.s32 %s33, %s40
    %p114 = scmp.eq.s32.totalorder %s113, 0
    %s116 = sadd.s32 %s115, 1
    %s117 = scalar_select %p114, %s115, %s116
    %p120 = pneg %p114
    %p121 = scmp.eq.s32.totalorder %s25, 3
    %p122 = por %p120, %p121
    %p123 = scmp.ne.s32.totalorder %s115, %s118
    %p124 = scmp.eq.s32.totalorder %s25, 0
    %p125 = por %p123, %p124
    %p126 = scmp.ne.s32.totalorder %s115, %s118
    %p127 = scmp.eq.s32.totalorder %s30, 3
    %p128 = por %p126, %p127
    %p129 = scmp.ne.s32.totalorder %s118, %s119
    %p130 = scmp.eq.s32.totalorder %s30, 0
    %p131 = por %p129, %p130
    %p132 = scmp.ne.s32.totalorder %s118, %s119
    %p133 = scmp.eq.s32.totalorder %s31, 3
    %p134 = por %p132, %p133
    %p136 = scmp.ne.s32.totalorder %s119, %s135
    %p137 = scmp.eq.s32.totalorder %s31, 0
    %p138 = por %p136, %p137
    %s139 = ssub.s32 %s33, %s40
    %p140 = scmp.eq.s32.totalorder %s139, 0
    %s142 = sadd.s32 %s141, 1
    %s143 = scalar_select %p140, %s141, %s142
    %p146 = pneg %p140
    %p147 = scmp.eq.s32.totalorder %s25, 3
    %p148 = por %p146, %p147
    %p149 = scmp.ne.s32.totalorder %s141, %s144
    %p150 = scmp.eq.s32.totalorder %s25, 0
    %p151 = por %p149, %p150
    %p152 = scmp.ne.s32.totalorder %s141, %s144
    %p153 = scmp.eq.s32.totalorder %s30, 3
    %p154 = por %p152, %p153
    %p155 = scmp.ne.s32.totalorder %s144, %s145
    %p156 = scmp.eq.s32.totalorder %s30, 0
    %p157 = por %p155, %p156
    %p158 = scmp.ne.s32.totalorder %s144, %s145
    %p159 = scmp.eq.s32.totalorder %s31, 3
    %p160 = por %p158, %p159
    %p162 = scmp.ne.s32.totalorder %s145, %s161
    %p163 = scmp.eq.s32.totalorder %s31, 0
    %p164 = por %p162, %p163
    %s165 = ssub.s32 %s33, %s40
    %p166 = scmp.eq.s32.totalorder %s165, 0
    %s168 = sadd.s32 %s167, 1
    %s169 = scalar_select %p166, %s167, %s168
    %p172 = pneg %p166
    %p173 = scmp.eq.s32.totalorder %s25, 3
    %p174 = por %p172, %p173
    %p175 = scmp.ne.s32.totalorder %s167, %s170
    %p176 = scmp.eq.s32.totalorder %s25, 0
    %p177 = por %p175, %p176
    %p178 = scmp.ne.s32.totalorder %s167, %s170
    %p179 = scmp.eq.s32.totalorder %s30, 3
    %p180 = por %p178, %p179
    %p181 = scmp.ne.s32.totalorder %s170, %s171
    %p182 = scmp.eq.s32.totalorder %s30, 0
    %p183 = por %p181, %p182
    %p184 = scmp.ne.s32.totalorder %s170, %s171
    %p185 = scmp.eq.s32.totalorder %s31, 3
    %p186 = por %p184, %p185
    %p188 = scmp.ne.s32.totalorder %s171, %s187
    %p189 = scmp.eq.s32.totalorder %s31, 0
    %p190 = por %p188, %p189
    %s191 = ssub.s32 %s33, %s40
    %p192 = scmp.eq.s32.totalorder %s191, 0
    %s194 = sadd.s32 %s193, 1
    %s195 = scalar_select %p192, %s193, %s194
    %p198 = pneg %p192
    %p199 = scmp.eq.s32.totalorder %s25, 3
    %p200 = por %p198, %p199
    %p201 = scmp.ne.s32.totalorder %s193, %s196
    %p202 = scmp.eq.s32.totalorder %s25, 0
    %p203 = por %p201, %p202
    %p204 = scmp.ne.s32.totalorder %s193, %s196
    %p205 = scmp.eq.s32.totalorder %s30, 3
    %p206 = por %p204, %p205
    %p207 = scmp.ne.s32.totalorder %s196, %s197
    %p208 = scmp.eq.s32.totalorder %s30, 0
    %p209 = por %p207, %p208
    %p210 = scmp.ne.s32.totalorder %s196, %s197
    %p211 = scmp.eq.s32.totalorder %s31, 3
    %p212 = por %p210, %p211
    %p214 = scmp.ne.s32.totalorder %s197, %s213
    %p215 = scmp.eq.s32.totalorder %s31, 0
    %p216 = por %p214, %p215
    %s217 = ssub.s32 %s33, %s40
    %p218 = scmp.eq.s32.totalorder %s217, 0
    %s220 = sadd.s32 %s219, 1
    %s221 = scalar_select %p218, %s219, %s220
    %p224 = pneg %p218
    %p225 = scmp.eq.s32.totalorder %s25, 3
    %p226 = por %p224, %p225
    %p227 = scmp.ne.s32.totalorder %s219, %s222
    %p228 = scmp.eq.s32.totalorder %s25, 0
    %p229 = por %p227, %p228
    %p230 = scmp.ne.s32.totalorder %s219, %s222
    %p231 = scmp.eq.s32.totalorder %s30, 3
    %p232 = por %p230, %p231
    %p233 = scmp.ne.s32.totalorder %s222, %s223
    %p234 = scmp.eq.s32.totalorder %s30, 0
    %p235 = por %p233, %p234
    %p236 = scmp.ne.s32.totalorder %s222, %s223
    %p237 = scmp.eq.s32.totalorder %s31, 3
    %p238 = por %p236, %p237
    %p240 = scmp.ne.s32.totalorder %s223, %s239
    %p241 = scmp.eq.s32.totalorder %s31, 0
    %p242 = por %p240, %p241
    %s243 = ssub.s32 %s33, %s40
    %p244 = scmp.eq.s32.totalorder %s243, 0
    %s246 = sadd.s32 %s245, 1
    %s247 = scalar_select %p244, %s245, %s246
    %p250 = pneg %p244
    %p251 = scmp.eq.s32.totalorder %s25, 3
    %p252 = por %p250, %p251
    %p253 = scmp.ne.s32.totalorder %s245, %s248
    %p254 = scmp.eq.s32.totalorder %s25, 0
    %p255 = por %p253, %p254
    %p256 = scmp.ne.s32.totalorder %s245, %s248
    %p257 = scmp.eq.s32.totalorder %s30, 3
    %p258 = por %p256, %p257
    %p259 = scmp.ne.s32.totalorder %s248, %s249
    %p260 = scmp.eq.s32.totalorder %s30, 0
    %p261 = por %p259, %p260
    %p262 = scmp.ne.s32.totalorder %s248, %s249
    %p263 = scmp.eq.s32.totalorder %s31, 3
    %p264 = por %p262, %p263
    %p266 = scmp.ne.s32.totalorder %s249, %s265
    %p267 = scmp.eq.s32.totalorder %s31, 0
    %p268 = por %p266, %p267
    %s269 = ssub.s32 %s33, %s40
    %p270 = scmp.eq.s32.totalorder %s269, 0
    %s272 = sadd.s32 %s271, 1
    %s273 = scalar_select %p270, %s271, %s272
    %p276 = pneg %p270
    %p277 = scmp.eq.s32.totalorder %s25, 3
    %p278 = por %p276, %p277
    %p279 = scmp.ne.s32.totalorder %s271, %s274
    %p280 = scmp.eq.s32.totalorder %s25, 0
    %p281 = por %p279, %p280
    %p282 = scmp.ne.s32.totalorder %s271, %s274
    %p283 = scmp.eq.s32.totalorder %s30, 3
    %p284 = por %p282, %p283
    %p285 = scmp.ne.s32.totalorder %s274, %s275
    %p286 = scmp.eq.s32.totalorder %s30, 0
    %p287 = por %p285, %p286
    %p288 = scmp.ne.s32.totalorder %s274, %s275
    %p289 = scmp.eq.s32.totalorder %s31, 3
    %p290 = por %p288, %p289
    %p292 = scmp.ne.s32.totalorder %s275, %s291
    %p293 = scmp.eq.s32.totalorder %s31, 0
    %p294 = por %p292, %p293
    %s295 = ssub.s32 %s33, %s40
    %p296 = scmp.eq.s32.totalorder %s295, 0
    %s298 = sadd.s32 %s297, 1
    %s299 = scalar_select %p296, %s297, %s298
    %p302 = pneg %p296
    %p303 = scmp.eq.s32.totalorder %s25, 3
    %p304 = por %p302, %p303
    %p305 = scmp.ne.s32.totalorder %s297, %s300
    %p306 = scmp.eq.s32.totalorder %s25, 0
    %p307 = por %p305, %p306
    %p308 = scmp.ne.s32.totalorder %s297, %s300
    %p309 = scmp.eq.s32.totalorder %s30, 3
    %p310 = por %p308, %p309
    %p311 = scmp.ne.s32.totalorder %s300, %s301
    %p312 = scmp.eq.s32.totalorder %s30, 0
    %p313 = por %p311, %p312
    %p314 = scmp.ne.s32.totalorder %s300, %s301
    %p315 = scmp.eq.s32.totalorder %s31, 3
    %p316 = por %p314, %p315
    %p318 = scmp.ne.s32.totalorder %s301, %s317
    %p319 = scmp.eq.s32.totalorder %s31, 0
    %p320 = por %p318, %p319
    %s321 = ssub.s32 %s33, %s40
    %p322 = scmp.eq.s32.totalorder %s321, 0
    %s324 = sadd.s32 %s323, 1
    %s325 = scalar_select %p322, %s323, %s324
    %p328 = pneg %p322
    %p329 = scmp.eq.s32.totalorder %s25, 3
    %p330 = por %p328, %p329
    %p331 = scmp.ne.s32.totalorder %s323, %s326
    %p332 = scmp.eq.s32.totalorder %s25, 0
    %p333 = por %p331, %p332
    %p334 = scmp.ne.s32.totalorder %s323, %s326
    %p335 = scmp.eq.s32.totalorder %s30, 3
    %p336 = por %p334, %p335
    %p337 = scmp.ne.s32.totalorder %s326, %s327
    %p338 = scmp.eq.s32.totalorder %s30, 0
    %p339 = por %p337, %p338
    %p340 = scmp.ne.s32.totalorder %s326, %s327
    %p341 = scmp.eq.s32.totalorder %s31, 3
    %p342 = por %p340, %p341
    %p344 = scmp.ne.s32.totalorder %s327, %s343
    %p345 = scmp.eq.s32.totalorder %s31, 0
    %p346 = por %p344, %p345
    %s347 = ssub.s32 %s33, %s40
    %p348 = scmp.eq.s32.totalorder %s347, 0
    %s350 = sadd.s32 %s349, 1
    %s351 = scalar_select %p348, %s349, %s350
    %p354 = pneg %p348
    %p355 = scmp.eq.s32.totalorder %s25, 3
    %p356 = por %p354, %p355
    %p357 = scmp.ne.s32.totalorder %s349, %s352
    %p358 = scmp.eq.s32.totalorder %s25, 0
    %p359 = por %p357, %p358
    %p360 = scmp.ne.s32.totalorder %s349, %s352
    %p361 = scmp.eq.s32.totalorder %s30, 3
    %p362 = por %p360, %p361
    %p363 = scmp.ne.s32.totalorder %s352, %s353
    %p364 = scmp.eq.s32.totalorder %s30, 0
    %p365 = por %p363, %p364
    %p366 = scmp.ne.s32.totalorder %s352, %s353
    %p367 = scmp.eq.s32.totalorder %s31, 3
    %p368 = por %p366, %p367
    %p370 = scmp.ne.s32.totalorder %s353, %s369
    %p371 = scmp.eq.s32.totalorder %s31, 0
    %p372 = por %p370, %p371
    %s373 = ssub.s32 %s33, %s40
    %p374 = scmp.eq.s32.totalorder %s373, 0
    %s376 = sadd.s32 %s375, 1
    %s377 = scalar_select %p374, %s375, %s376
    %p380 = pneg %p374
    %p381 = scmp.eq.s32.totalorder %s25, 3
    %p382 = por %p380, %p381
    %p383 = scmp.ne.s32.totalorder %s375, %s378
    %p384 = scmp.eq.s32.totalorder %s25, 0
    %p385 = por %p383, %p384
    %p386 = scmp.ne.s32.totalorder %s375, %s378
    %p387 = scmp.eq.s32.totalorder %s30, 3
    %p388 = por %p386, %p387
    %p389 = scmp.ne.s32.totalorder %s378, %s379
    %p390 = scmp.eq.s32.totalorder %s30, 0
    %p391 = por %p389, %p390
    %p392 = scmp.ne.s32.totalorder %s378, %s379
    %p393 = scmp.eq.s32.totalorder %s31, 3
    %p394 = por %p392, %p393
    %p396 = scmp.ne.s32.totalorder %s379, %s395
    %p397 = scmp.eq.s32.totalorder %s31, 0
    %p398 = por %p396, %p397
    %s399 = ssub.s32 %s33, %s40
    %p400 = scmp.eq.s32.totalorder %s399, 0
    %s402 = sadd.s32 %s401, 1
    %s403 = scalar_select %p400, %s401, %s402
    %p406 = pneg %p400
    %p407 = scmp.eq.s32.totalorder %s25, 3
    %p408 = por %p406, %p407
    %p409 = scmp.ne.s32.totalorder %s401, %s404
    %p410 = scmp.eq.s32.totalorder %s25, 0
    %p411 = por %p409, %p410
    %p412 = scmp.ne.s32.totalorder %s401, %s404
    %p413 = scmp.eq.s32.totalorder %s30, 3
    %p414 = por %p412, %p413
    %p415 = scmp.ne.s32.totalorder %s404, %s405
    %p416 = scmp.eq.s32.totalorder %s30, 0
    %p417 = por %p415, %p416
    %p418 = scmp.ne.s32.totalorder %s404, %s405
    %p419 = scmp.eq.s32.totalorder %s31, 3
    %p420 = por %p418, %p419
    %p422 = scmp.ne.s32.totalorder %s405, %s421
    %p423 = scmp.eq.s32.totalorder %s31, 0
    %p424 = por %p422, %p423
    %s426 = sadd.s32 %s425, 1
    %p429 = scmp.eq.s32.totalorder %s25, 3
    %p430 = scmp.ne.s32.totalorder %s425, %s427
    %p431 = scmp.eq.s32.totalorder %s25, 0
    %p432 = por %p430, %p431
    %p433 = scmp.ne.s32.totalorder %s425, %s427
    %p434 = scmp.eq.s32.totalorder %s30, 3
    %p435 = por %p433, %p434
    %p436 = scmp.ne.s32.totalorder %s427, %s428
    %p437 = scmp.eq.s32.totalorder %s30, 0
    %p438 = por %p436, %p437
    %p439 = scmp.ne.s32.totalorder %s427, %s428
    %p440 = scmp.eq.s32.totalorder %s31, 3
    %p441 = por %p439, %p440
    %p443 = scmp.ne.s32.totalorder %s428, %s442
    %p444 = scmp.eq.s32.totalorder %s31, 0
    %p445 = por %p443, %p444
    %s447 = sadd.s32 %s446, 1
    %p450 = scmp.eq.s32.totalorder %s25, 3
    %p451 = scmp.ne.s32.totalorder %s446, %s448
    %p452 = scmp.eq.s32.totalorder %s25, 0
    %p453 = por %p451, %p452
    %p454 = scmp.ne.s32.totalorder %s446, %s448
    %p455 = scmp.eq.s32.totalorder %s30, 3
    %p456 = por %p454, %p455
    %p457 = scmp.ne.s32.totalorder %s448, %s449
    %p458 = scmp.eq.s32.totalorder %s30, 0
    %p459 = por %p457, %p458
    %p460 = scmp.ne.s32.totalorder %s448, %s449
    %p461 = scmp.eq.s32.totalorder %s31, 3
    %p462 = por %p460, %p461
    %p464 = scmp.ne.s32.totalorder %s449, %s463
    %p465 = scmp.eq.s32.totalorder %s31, 0
    %p466 = por %p464, %p465
    %s468 = sadd.s32 %s467, 1
    %p471 = scmp.eq.s32.totalorder %s25, 3
    %p472 = scmp.ne.s32.totalorder %s467, %s469
    %p473 = scmp.eq.s32.totalorder %s25, 0
    %p474 = por %p472, %p473
    %p475 = scmp.ne.s32.totalorder %s467, %s469
    %p476 = scmp.eq.s32.totalorder %s30, 3
    %p477 = por %p475, %p476
    %p478 = scmp.ne.s32.totalorder %s469, %s470
    %p479 = scmp.eq.s32.totalorder %s30, 0
    %p480 = por %p478, %p479
    %p481 = scmp.ne.s32.totalorder %s469, %s470
    %p482 = scmp.eq.s32.totalorder %s31, 3
    %p483 = por %p481, %p482
    %p485 = scmp.ne.s32.totalorder %s470, %s484
    %p486 = scmp.eq.s32.totalorder %s31, 0
    %p487 = por %p485, %p486
    %s489 = sadd.s32 %s488, 1
    %p492 = scmp.eq.s32.totalorder %s25, 3
    %p493 = scmp.ne.s32.totalorder %s488, %s490
    %p494 = scmp.eq.s32.totalorder %s25, 0
    %p495 = por %p493, %p494
    %p496 = scmp.ne.s32.totalorder %s488, %s490
    %p497 = scmp.eq.s32.totalorder %s30, 3
    %p498 = por %p496, %p497
    %p499 = scmp.ne.s32.totalorder %s490, %s491
    %p500 = scmp.eq.s32.totalorder %s30, 0
    %p501 = por %p499, %p500
    %p502 = scmp.ne.s32.totalorder %s490, %s491
    %p503 = scmp.eq.s32.totalorder %s31, 3
    %p504 = por %p502, %p503
    %p506 = scmp.ne.s32.totalorder %s491, %s505
    %p507 = scmp.eq.s32.totalorder %s31, 0
    %p508 = por %p506, %p507
    %s509 = ssub.s32 %s32, %s44
    %p510 = scmp.eq.s32.totalorder %s509, 0
    %s512 = sadd.s32 %s511, 1
    %s513 = scalar_select %p510, %s511, %s512
    %p516 = pneg %p510
    %p517 = scmp.eq.s32.totalorder %s25, 3
    %p518 = por %p516, %p517
    %p519 = scmp.ne.s32.totalorder %s511, %s514
    %p520 = scmp.eq.s32.totalorder %s25, 0
    %p521 = por %p519, %p520
    %p522 = scmp.ne.s32.totalorder %s511, %s514
    %p523 = scmp.eq.s32.totalorder %s30, 3
    %p524 = por %p522, %p523
    %p525 = scmp.ne.s32.totalorder %s514, %s515
    %p526 = scmp.eq.s32.totalorder %s30, 0
    %p527 = por %p525, %p526
    %p528 = scmp.ne.s32.totalorder %s514, %s515
    %p529 = scmp.eq.s32.totalorder %s31, 3
    %p530 = por %p528, %p529
    %p532 = scmp.ne.s32.totalorder %s515, %s531
    %p533 = scmp.eq.s32.totalorder %s31, 0
    %p534 = por %p532, %p533
    %p535 = scmp.le.s32.totalorder 1, %s25
    %p536 = scmp.lt.s32.totalorder %s25, 5
    %p537 = pnand %p535, %p536
    %p538 = pneg %p537
    // Predicated region
    $region9: #{timm_vit_forward.1} parent=5 // pred_check
      _
    $region10: #{timm_vit_forward.1} parent=5 // pred_check_branch
      %540 = sbr.rel (%p537) target = $region12
    $region11: #{timm_vit_forward.1} parent=5 // pred_region
      %s541 = ssub.s32 %s25, 1
      // Predicated region
      $region13: #{timm_vit_forward.1} parent=11 // pred_check
        %p542 = pneg %p84
      $region14: #{timm_vit_forward.1} parent=11 // pred_check_branch
        %544 = sbr.rel (%p542) target = $region16
      $region15: #{timm_vit_forward.1} parent=11 // pred_region
        _
      $region16: #{timm_vit_forward.1} parent=11 // pred_fallthru
        _
      // Predicated region
      $region17: #{timm_vit_forward.1} parent=11 // pred_check
        %p545 = pneg %p105
      $region18: #{timm_vit_forward.1} parent=11 // pred_check_branch
        %547 = sbr.rel (%p545) target = $region20
      $region19: #{timm_vit_forward.1} parent=11 // pred_region
        _
      $region20: #{timm_vit_forward.1} parent=11 // pred_fallthru
        _
      // Predicated region
      $region21: #{timm_vit_forward.1} parent=11 // pred_check
        %p548 = pneg %p438
      $region22: #{timm_vit_forward.1} parent=11 // pred_check_branch
        %550 = sbr.rel (%p548) target = $region24
      $region23: #{timm_vit_forward.1} parent=11 // pred_region
        _
      $region24: #{timm_vit_forward.1} parent=11 // pred_fallthru
        _
      // Predicated region
      $region25: #{timm_vit_forward.1} parent=11 // pred_check
        %p551 = pneg %p459
      $region26: #{timm_vit_forward.1} parent=11 // pred_check_branch
        %553 = sbr.rel (%p551) target = $region28
      $region27: #{timm_vit_forward.1} parent=11 // pred_region
        _
      $region28: #{timm_vit_forward.1} parent=11 // pred_fallthru
        _
      // Predicated region
      $region29: #{timm_vit_forward.1} parent=11 // pred_check
        %p554 = pneg %p480
      $region30: #{timm_vit_forward.1} parent=11 // pred_check_branch
        %556 = sbr.rel (%p554) target = $region32
      $region31: #{timm_vit_forward.1} parent=11 // pred_region
        _
      $region32: #{timm_vit_forward.1} parent=11 // pred_fallthru
        _
      // Predicated region
      $region33: #{timm_vit_forward.1} parent=11 // pred_check
        %p557 = pneg %p501
      $region34: #{timm_vit_forward.1} parent=11 // pred_check_branch
        %559 = sbr.rel (%p557) target = $region36
      $region35: #{timm_vit_forward.1} parent=11 // pred_region
        _
      $region36: #{timm_vit_forward.1} parent=11 // pred_fallthru
        _
    $region12: #{timm_vit_forward.1} parent=5 // pred_fallthru
      _
    %p560 = scmp.lt.s32.totalorder %s25, 4
    // Predicated region
    $region37: #{timm_vit_forward.1} parent=5 // pred_check
      %p561 = pneg %p560
    $region38: #{timm_vit_forward.1} parent=5 // pred_check_branch
      %563 = sbr.rel (%p561) target = $region40
    $region39: #{timm_vit_forward.1} parent=5 // pred_region
      // Predicated region
      $region41: #{timm_vit_forward.1} parent=39 // pred_check
        %p564 = pneg %p57
      $region42: #{timm_vit_forward.1} parent=39 // pred_check_branch
        %566 = sbr.rel (%p564) target = $region44
      $region43: #{timm_vit_forward.1} parent=39 // pred_region
        %p567 = scmp.lt.s32.totalorder %s32, 1
        %s568 = scalar_select %p567, %s32, 1
        %s569 = smul.addr %s568, 11
        %s570 = smul.addr %s569, 8
        %s571 = scalar_lea.vmem %s0, %s570
      $region44: #{timm_vit_forward.1} parent=39 // pred_fallthru
        _
      // Predicated region
      $region45: #{timm_vit_forward.1} parent=39 // pred_check
        %p572 = pneg %p125
      $region46: #{timm_vit_forward.1} parent=39 // pred_check_branch
        %574 = sbr.rel (%p572) target = $region48
      $region47: #{timm_vit_forward.1} parent=39 // pred_region
        %p575 = scmp.lt.s32.totalorder %s33, 1
        %s576 = scalar_select %p575, %s33, 1
        %s577 = smul.addr %s576, 4
        %s578 = smul.addr %s577, 4
        %s579 = scalar_lea.vmem %s3, %s578
      $region48: #{timm_vit_forward.1} parent=39 // pred_fallthru
        _
      // Predicated region
      $region49: #{timm_vit_forward.1} parent=39 // pred_check
        %p580 = pneg %p151
      $region50: #{timm_vit_forward.1} parent=39 // pred_check_branch
        %582 = sbr.rel (%p580) target = $region52
      $region51: #{timm_vit_forward.1} parent=39 // pred_region
        %p583 = scmp.lt.s32.totalorder %s33, 1
        %s584 = scalar_select %p583, %s33, 1
        %s585 = scalar_lea.vmem %s4, %s584
      $region52: #{timm_vit_forward.1} parent=39 // pred_fallthru
        _
      // Predicated region
      $region53: #{timm_vit_forward.1} parent=39 // pred_check
        %p586 = pneg %p177
      $region54: #{timm_vit_forward.1} parent=39 // pred_check_branch
        %588 = sbr.rel (%p586) target = $region56
      $region55: #{timm_vit_forward.1} parent=39 // pred_region
        %p589 = scmp.lt.s32.totalorder %s33, 1
        %s590 = scalar_select %p589, %s33, 1
        %s591 = smul.addr %s590, 4
        %s592 = smul.addr %s591, 4
        %s593 = scalar_lea.vmem %s5, %s592
      $region56: #{timm_vit_forward.1} parent=39 // pred_fallthru
        _
      // Predicated region
      $region57: #{timm_vit_forward.1} parent=39 // pred_check
        %p594 = pneg %p203
      $region58: #{timm_vit_forward.1} parent=39 // pred_check_branch
        %596 = sbr.rel (%p594) target = $region60
      $region59: #{timm_vit_forward.1} parent=39 // pred_region
        %p597 = scmp.lt.s32.totalorder %s33, 1
        %s598 = scalar_select %p597, %s33, 1
        %s599 = scalar_lea.vmem %s6, %s598
      $region60: #{timm_vit_forward.1} parent=39 // pred_fallthru
        _
      // Predicated region
      $region61: #{timm_vit_forward.1} parent=39 // pred_check
        %p600 = pneg %p229
      $region62: #{timm_vit_forward.1} parent=39 // pred_check_branch
        %602 = sbr.rel (%p600) target = $region64
      $region63: #{timm_vit_forward.1} parent=39 // pred_region
        %p603 = scmp.lt.s32.totalorder %s33, 1
        %s604 = scalar_select %p603, %s33, 1
        %s605 = scalar_lea.vmem %s7, %s604
      $region64: #{timm_vit_forward.1} parent=39 // pred_fallthru
        _
      // Predicated region
      $region65: #{timm_vit_forward.1} parent=39 // pred_check
        %p606 = pneg %p255
      $region66: #{timm_vit_forward.1} parent=39 // pred_check_branch
        %608 = sbr.rel (%p606) target = $region68
      $region67: #{timm_vit_forward.1} parent=39 // pred_region
        %p609 = scmp.lt.s32.totalorder %s33, 1
        %s610 = scalar_select %p609, %s33, 1
        %s611 = scalar_lea.vmem %s8, %s610
      $region68: #{timm_vit_forward.1} parent=39 // pred_fallthru
        _
      // Predicated region
      $region69: #{timm_vit_forward.1} parent=39 // pred_check
        %p612 = pneg %p281
      $region70: #{timm_vit_forward.1} parent=39 // pred_check_branch
        %614 = sbr.rel (%p612) target = $region72
      $region71: #{timm_vit_forward.1} parent=39 // pred_region
        %p615 = scmp.lt.s32.totalorder %s33, 1
        %s616 = scalar_select %p615, %s33, 1
        %s617 = scalar_lea.vmem %s9, %s616
      $region72: #{timm_vit_forward.1} parent=39 // pred_fallthru
        _
      // Predicated region
      $region73: #{timm_vit_forward.1} parent=39 // pred_check
        %p618 = pneg %p307
      $region74: #{timm_vit_forward.1} parent=39 // pred_check_branch
        %620 = sbr.rel (%p618) target = $region76
      $region75: #{timm_vit_forward.1} parent=39 // pred_region
        %p621 = scmp.lt.s32.totalorder %s33, 1
        %s622 = scalar_select %p621, %s33, 1
        %s623 = scalar_lea.vmem %s10, %s622
      $region76: #{timm_vit_forward.1} parent=39 // pred_fallthru
        _
      // Predicated region
      $region77: #{timm_vit_forward.1} parent=39 // pred_check
        %p624 = pneg %p333
      $region78: #{timm_vit_forward.1} parent=39 // pred_check_branch
        %626 = sbr.rel (%p624) target = $region80
      $region79: #{timm_vit_forward.1} parent=39 // pred_region
        %p627 = scmp.lt.s32.totalorder %s33, 1
        %s628 = scalar_select %p627, %s33, 1
        %s629 = smul.addr %s628, 4
        %s630 = smul.addr %s629, 4
        %s631 = scalar_lea.vmem %s11, %s630
      $region80: #{timm_vit_forward.1} parent=39 // pred_fallthru
        _
      // Predicated region
      $region81: #{timm_vit_forward.1} parent=39 // pred_check
        %p632 = pneg %p359
      $region82: #{timm_vit_forward.1} parent=39 // pred_check_branch
        %634 = sbr.rel (%p632) target = $region84
      $region83: #{timm_vit_forward.1} parent=39 // pred_region
        %p635 = scmp.lt.s32.totalorder %s33, 1
        %s636 = scalar_select %p635, %s33, 1
        %s637 = scalar_lea.vmem %s12, %s636
      $region84: #{timm_vit_forward.1} parent=39 // pred_fallthru
        _
      // Predicated region
      $region85: #{timm_vit_forward.1} parent=39 // pred_check
        %p638 = pneg %p385
      $region86: #{timm_vit_forward.1} parent=39 // pred_check_branch
        %640 = sbr.rel (%p638) target = $region88
      $region87: #{timm_vit_forward.1} parent=39 // pred_region
        %p641 = scmp.lt.s32.totalorder %s33, 1
        %s642 = scalar_select %p641, %s33, 1
        %s643 = smul.addr %s642, 16
        %s644 = smul.addr %s643, 4
        %s645 = scalar_lea.vmem %s13, %s644
      $region88: #{timm_vit_forward.1} parent=39 // pred_fallthru
        _
      // Predicated region
      $region89: #{timm_vit_forward.1} parent=39 // pred_check
        %p646 = pneg %p411
      $region90: #{timm_vit_forward.1} parent=39 // pred_check_branch
        %648 = sbr.rel (%p646) target = $region92
      $region91: #{timm_vit_forward.1} parent=39 // pred_region
        %p649 = scmp.lt.s32.totalorder %s33, 1
        %s650 = scalar_select %p649, %s33, 1
        %s651 = scalar_lea.vmem %s14, %s650
      $region92: #{timm_vit_forward.1} parent=39 // pred_fallthru
        _
    $region40: #{timm_vit_forward.1} parent=5 // pred_fallthru
      _
    %p652 = scmp.le.s32.totalorder 1, %s25
    %p653 = scmp.lt.s32.totalorder %s25, 5
    %p654 = pnand %p652, %p653
    %p655 = pneg %p654
    // Predicated region
    $region93: #{timm_vit_forward.1} parent=5 // pred_check
      _
    $region94: #{timm_vit_forward.1} parent=5 // pred_check_branch
      %657 = sbr.rel (%p654) target = $region96
    $region95: #{timm_vit_forward.1} parent=5 // pred_region
      %s658 = ssub.s32 %s25, 1
      %p659 = scmp.lt.s32.totalorder %s34, 1
      %s660 = scalar_select %p659, %s34, 1
      %s661 = smul.addr %s660, 11
      %s662 = smul.addr %s661, 8
      %s663 = scalar_lea.vmem %s0, %s662
      %p664 = pneg %p63
      %p665 = pneg %p60
      %p666 = pneg %p84
      %p667 = pneg %p81
      %p668 = pneg %p105
      %p669 = pneg %p102
      %p670 = scmp.lt.s32.totalorder %s35, 1
      %s671 = scalar_select %p670, %s35, 1
      %s672 = smul.addr %s671, 4
      %s673 = smul.addr %s672, 4
      %s674 = scalar_lea.vmem %s3, %s673
      %p675 = pneg %p131
      %p676 = pneg %p128
      %p677 = scmp.lt.s32.totalorder %s35, 1
      %s678 = scalar_select %p677, %s35, 1
      %s679 = scalar_lea.vmem %s4, %s678
      %p680 = pneg %p157
      %p681 = pneg %p154
      %p682 = scmp.lt.s32.totalorder %s35, 1
      %s683 = scalar_select %p682, %s35, 1
      %s684 = smul.addr %s683, 4
      %s685 = smul.addr %s684, 4
      %s686 = scalar_lea.vmem %s5, %s685
      %p687 = pneg %p183
      %p688 = pneg %p180
      %p689 = scmp.lt.s32.totalorder %s35, 1
      %s690 = scalar_select %p689, %s35, 1
      %s691 = scalar_lea.vmem %s6, %s690
      %p692 = pneg %p209
      %p693 = pneg %p206
      %p694 = scmp.lt.s32.totalorder %s35, 1
      %s695 = scalar_select %p694, %s35, 1
      %s696 = scalar_lea.vmem %s7, %s695
      %p697 = pneg %p235
      %p698 = pneg %p232
      %p699 = scmp.lt.s32.totalorder %s35, 1
      %s700 = scalar_select %p699, %s35, 1
      %s701 = scalar_lea.vmem %s8, %s700
      %p702 = pneg %p261
      %p703 = pneg %p258
      %p704 = scmp.lt.s32.totalorder %s35, 1
      %s705 = scalar_select %p704, %s35, 1
      %s706 = scalar_lea.vmem %s9, %s705
      %p707 = pneg %p287
      %p708 = pneg %p284
      %p709 = scmp.lt.s32.totalorder %s35, 1
      %s710 = scalar_select %p709, %s35, 1
      %s711 = scalar_lea.vmem %s10, %s710
      %p712 = pneg %p313
      %p713 = pneg %p310
      %p714 = scmp.lt.s32.totalorder %s35, 1
      %s715 = scalar_select %p714, %s35, 1
      %s716 = smul.addr %s715, 4
      %s717 = smul.addr %s716, 4
      %s718 = scalar_lea.vmem %s11, %s717
      %p719 = pneg %p339
      %p720 = pneg %p336
      %p721 = scmp.lt.s32.totalorder %s35, 1
      %s722 = scalar_select %p721, %s35, 1
      %s723 = scalar_lea.vmem %s12, %s722
      %p724 = pneg %p365
      %p725 = pneg %p362
      %p726 = scmp.lt.s32.totalorder %s35, 1
      %s727 = scalar_select %p726, %s35, 1
      %s728 = smul.addr %s727, 16
      %s729 = smul.addr %s728, 4
      %s730 = scalar_lea.vmem %s13, %s729
      %p731 = pneg %p391
      %p732 = pneg %p388
      %p733 = scmp.lt.s32.totalorder %s35, 1
      %s734 = scalar_select %p733, %s35, 1
      %s735 = scalar_lea.vmem %s14, %s734
      %p736 = pneg %p417
      %p737 = pneg %p414
      %p738 = pneg %p438
      %p739 = pneg %p435
      %p740 = pneg %p459
      %p741 = pneg %p456
      %p742 = pneg %p480
      %p743 = pneg %p477
      %p744 = pneg %p501
      %p745 = pneg %p498
      %p746 = pneg %p527
      %p747 = pneg %p524
      %p748 = scmp.lt.s32.totalorder %s34, 1
      %s749 = scalar_select %p748, %s34, 1
      %s750 = smul.addr %s749, 11
      %s751 = smul.addr %s750, 8
      %s752 = scalar_lea.vmem %s19, %s751
      %p753 = scmp.lt.s32.totalorder %s34, 1
      %s754 = scalar_select %p753, %s34, 1
      %s755 = smul.addr %s754, 11
      %s756 = smul.addr %s755, 8
      %s757 = scalar_lea.vmem %s0, %s756
      %p758 = scmp.lt.s32.totalorder %s35, 1
      %s759 = scalar_select %p758, %s35, 1
      %s760 = smul.addr %s759, 4
      %s761 = smul.addr %s760, 4
      %s762 = scalar_lea.vmem %s3, %s761
      %p763 = scmp.lt.s32.totalorder %s35, 1
      %s764 = scalar_select %p763, %s35, 1
      %s765 = scalar_lea.vmem %s4, %s764
      %p766 = scmp.lt.s32.totalorder %s35, 1
      %s767 = scalar_select %p766, %s35, 1
      %s768 = smul.addr %s767, 4
      %s769 = smul.addr %s768, 4
      %s770 = scalar_lea.vmem %s5, %s769
      %p771 = scmp.lt.s32.totalorder %s35, 1
      %s772 = scalar_select %p771, %s35, 1
      %s773 = scalar_lea.vmem %s6, %s772
      %p774 = scmp.lt.s32.totalorder %s35, 1
      %s775 = scalar_select %p774, %s35, 1
      %s776 = scalar_lea.vmem %s7, %s775
      %p777 = scmp.lt.s32.totalorder %s35, 1
      %s778 = scalar_select %p777, %s35, 1
      %s779 = scalar_lea.vmem %s8, %s778
      %p780 = scmp.lt.s32.totalorder %s35, 1
      %s781 = scalar_select %p780, %s35, 1
      %s782 = scalar_lea.vmem %s9, %s781
      %p783 = scmp.lt.s32.totalorder %s35, 1
      %s784 = scalar_select %p783, %s35, 1
      %s785 = scalar_lea.vmem %s10, %s784
      %p786 = scmp.lt.s32.totalorder %s35, 1
      %s787 = scalar_select %p786, %s35, 1
      %s788 = smul.addr %s787, 4
      %s789 = smul.addr %s788, 4
      %s790 = scalar_lea.vmem %s11, %s789
      %p791 = scmp.lt.s32.totalorder %s35, 1
      %s792 = scalar_select %p791, %s35, 1
      %s793 = scalar_lea.vmem %s12, %s792
      %p794 = scmp.lt.s32.totalorder %s35, 1
      %s795 = scalar_select %p794, %s35, 1
      %s796 = smul.addr %s795, 16
      %s797 = smul.addr %s796, 4
      %s798 = scalar_lea.vmem %s13, %s797
      %p799 = scmp.lt.s32.totalorder %s35, 1
      %s800 = scalar_select %p799, %s35, 1
      %s801 = scalar_lea.vmem %s14, %s800
      %p802 = scmp.lt.s32.totalorder %s34, 1
      %s803 = scalar_select %p802, %s34, 1
      %s804 = smul.addr %s803, 11
      %s805 = smul.addr %s804, 8
      %s806 = scalar_lea.vmem %s19, %s805
      %p808 = scmp.eq.s32.totalorder %s35, 0
      // Predicated region
      $region97: #{timm_vit_forward.1} parent=95 // pred_check
        %p809 = pneg %p808
      $region98: #{timm_vit_forward.1} parent=95 // pred_check_branch
        %811 = sbr.rel (%p809) target = $region100
      $region99: #{timm_vit_forward.1} parent=95 // pred_region
        %v812 = vld [vmem:[%s757] sm:$0xff]
        %v813 = vld [vmem:[%s757 + $0x8] sm:$0xff]
        %v814 = vld [vmem:[%s757 + $0x10] sm:$0xff]
        %v815 = vld [vmem:[%s757 + $0x18] sm:$0xff]
        %v816 = vld [vmem:[%s757 + $0x20] sm:$0xff]
        %v817 = vld [vmem:[%s757 + $0x28] sm:$0xff]
        %v818 = vld [vmem:[%s757 + $0x30] sm:$0xff]
        %v819 = vld [vmem:[%s757 + $0x38] sm:$0xff]
        %v820 = vld [vmem:[%s757 + $0x40] sm:$0xff]
        %v821 = vld [vmem:[%s757 + $0x48] sm:$0xff]
        %v822 = vld [vmem:[%s757 + $0x50] sm:$0xff]
        %v823 = vld [vmem:[%s1] sm:$0xf]
        %v824 = vld [vmem:[%s2] sm:$0xff]
        %v825 = vld [vmem:[%s2 + $0x8] sm:$0xff]
        %v826 = vld [vmem:[%s2 + $0x10] sm:$0xff]
        %v827 = vld [vmem:[%s2 + $0x18] sm:$0xff]
        %v828 = vld [vmem:[%s2 + $0x20] sm:$0xff]
        %v829 = vld [vmem:[%s2 + $0x28] sm:$0xff]
        %v830 = vld [vmem:[%s2 + $0x30] sm:$0xff]
        %v831 = vld [vmem:[%s2 + $0x38] sm:$0xff]
        %v832 = vld [vmem:[%s2 + $0x40] sm:$0xff]
        %v833 = vld [vmem:[%s2 + $0x48] sm:$0xff]
        %v834 = vld [vmem:[%s2 + $0x50] sm:$0xff]
        %vm835 = vcmask 31744
        %v837 = vsel %vm835, %v812, 0
        %v840 = vsel %vm835, %v813, 0
        %v843 = vsel %vm835, %v814, 0
        %v846 = vsel %vm835, %v815, 0
        %v849 = vsel %vm835, %v816, 0
        %v852 = vsel %vm835, %v817, 0
        %v855 = vsel %vm835, %v818, 0
        %v858 = vsel %vm835, %v819, 0
        %v861 = vsel %vm835, %v820, 0
        %v864 = vsel %vm835, %v821, 0
        %v867 = vsel %vm835, %v822, 0
        %vm869 = vcmask 1043456
        %v871 = vsel %vm869, %v823, 0
        %873 = vmatpush.msra.mxu0 0.0
        %874 = vmatpush.msra.mxu0 0.0
        %875 = vmatpush.msra.mxu0 0.0
        %876 = vmatpush.msra.mxu0 0.0
        %877 = vmatpush.msra.mxu0 0.0
        %878 = vmatpush.msra.mxu0 0.0
        %879 = vmatpush.msra.mxu0 0.0
        %880 = vmatpush.msra.mxu0 0.0
        %881 = vmatpush.msra.mxu0 0.0
        %882 = vmatpush.msra.mxu0 0.0
        %883 = vmatpush.msra.mxu0 0.0
        %884 = vmatpush.msra.mxu0 0.0
        %885 = vmatpush.msra.mxu0 0.0
        %886 = vmatpush.msra.mxu0 0.0
        %887 = vmatpush.msra.mxu0 0.0
        %888 = vmatpush.msra.mxu0 %v871
        %889 = vmatmul.f32.gmra.mxu0 %v837
        %v890 = vpop.f32.mrf.mxu0
        %v891 = vadd.f32 %v824, %v890
        %892 = vmatmul.f32.gmra.mxu0 %v840
        %v893 = vpop.f32.mrf.mxu0
        %v894 = vadd.f32 %v825, %v893
        %895 = vmatmul.f32.gmra.mxu0 %v843
        %v896 = vpop.f32.mrf.mxu0
        %v897 = vadd.f32 %v826, %v896
        %898 = vmatmul.f32.gmra.mxu0 %v846
        %v899 = vpop.f32.mrf.mxu0
        %v900 = vadd.f32 %v827, %v899
        %901 = vmatmul.f32.gmra.mxu0 %v849
        %v902 = vpop.f32.mrf.mxu0
        %v903 = vadd.f32 %v828, %v902
        %904 = vmatmul.f32.gmra.mxu0 %v852
        %v905 = vpop.f32.mrf.mxu0
        %v906 = vadd.f32 %v829, %v905
        %907 = vmatmul.f32.gmra.mxu0 %v855
        %v908 = vpop.f32.mrf.mxu0
        %v909 = vadd.f32 %v830, %v908
        %910 = vmatmul.f32.gmra.mxu0 %v858
        %v911 = vpop.f32.mrf.mxu0
        %v912 = vadd.f32 %v831, %v911
        %913 = vmatmul.f32.gmra.mxu0 %v861
        %v914 = vpop.f32.mrf.mxu0
        %v915 = vadd.f32 %v832, %v914
        %916 = vmatmul.f32.gmra.mxu0 %v864
        %v917 = vpop.f32.mrf.mxu0
        %v918 = vadd.f32 %v833, %v917
        %919 = vmatmul.f32.gmra.mxu0 %v867
        %v920 = vpop.f32.mrf.mxu0
        %v921 = vadd.f32 %v834, %v920
        %922 = vdwg.mxu0
        %vm923 = vcmask 261120
        %924 = vst.msk [vmem:[#allocation2] sm:$0xff] %vm923, %v891
        %925 = vst.msk [vmem:[#allocation2 + $0x8] sm:$0xff] %vm923, %v894
        %926 = vst.msk [vmem:[#allocation2 + $0x10] sm:$0xff] %vm923, %v897
        %927 = vst.msk [vmem:[#allocation2 + $0x18] sm:$0xff] %vm923, %v900
        %928 = vst.msk [vmem:[#allocation2 + $0x20] sm:$0xff] %vm923, %v903
        %929 = vst.msk [vmem:[#allocation2 + $0x28] sm:$0xff] %vm923, %v906
        %930 = vst.msk [vmem:[#allocation2 + $0x30] sm:$0xff] %vm923, %v909
        %931 = vst.msk [vmem:[#allocation2 + $0x38] sm:$0xff] %vm923, %v912
        %932 = vst.msk [vmem:[#allocation2 + $0x40] sm:$0xff] %vm923, %v915
        %933 = vst.msk [vmem:[#allocation2 + $0x48] sm:$0xff] %vm923, %v918
        %934 = vst.msk [vmem:[#allocation2 + $0x50] sm:$0xff] %vm923, %v921
      $region100: #{timm_vit_forward.1} parent=95 // pred_fallthru
        _
      %v935 = vlaneseq
      %v936 = vand.u32 %v935, 127
      %vm937 = vcmp.lt.s32.totalorder %v936, 82
      %v938 = vsel %vm937, 0.0, -1e+30
      %v939 = vld [vmem:[#allocation2] sm:$0xff]
      %v940 = vld [vmem:[#allocation2 + $0x8] sm:$0xff]
      %v941 = vld [vmem:[#allocation2 + $0x10] sm:$0xff]
      %v942 = vld [vmem:[#allocation2 + $0x18] sm:$0xff]
      %v943 = vld [vmem:[#allocation2 + $0x20] sm:$0xff]
      %v944 = vld [vmem:[#allocation2 + $0x28] sm:$0xff]
      %v945 = vld [vmem:[#allocation2 + $0x30] sm:$0xff]
      %v946 = vld [vmem:[#allocation2 + $0x38] sm:$0xff]
      %v947 = vld [vmem:[#allocation2 + $0x40] sm:$0xff]
      %v948 = vld [vmem:[#allocation2 + $0x48] sm:$0xff]
      %v949 = vld [vmem:[#allocation2 + $0x50] sm:$0xff]
      %v950 = vld [vmem:[%s776] sm:$0x1]
      %v951 = vld [vmem:[%s779] sm:$0x1]
      %vm952 = vcmask 261120
      %v953 = vsel %vm952, %v939, 0.0
      %954 = vadd.xlane.f32.xlu0 %v953
      %v955 = vpop.xlane.xlu0 %954
      %v956 = vsel %vm952, %v940, 0.0
      %957 = vadd.xlane.f32.xlu0 %v956
      %v958 = vpop.xlane.xlu0 %957
      %v959 = vsel %vm952, %v941, 0.0
      %960 = vadd.xlane.f32.xlu0 %v959
      %v961 = vpop.xlane.xlu0 %960
      %v962 = vsel %vm952, %v942, 0.0
      %963 = vadd.xlane.f32.xlu0 %v962
      %v964 = vpop.xlane.xlu0 %963
      %v965 = vsel %vm952, %v943, 0.0
      %966 = vadd.xlane.f32.xlu0 %v965
      %v967 = vpop.xlane.xlu0 %966
      %v968 = vsel %vm952, %v944, 0.0
      %969 = vadd.xlane.f32.xlu0 %v968
      %v970 = vpop.xlane.xlu0 %969
      %v971 = vsel %vm952, %v945, 0.0
      %972 = vadd.xlane.f32.xlu0 %v971
      %v973 = vpop.xlane.xlu0 %972
      %v974 = vsel %vm952, %v946, 0.0
      %975 = vadd.xlane.f32.xlu0 %v974
      %v976 = vpop.xlane.xlu0 %975
      %v977 = vsel %vm952, %v947, 0.0
      %978 = vadd.xlane.f32.xlu0 %v977
      %v979 = vpop.xlane.xlu0 %978
      %v980 = vsel %vm952, %v948, 0.0
      %981 = vadd.xlane.f32.xlu0 %v980
      %v982 = vpop.xlane.xlu0 %981
      %v983 = vsel %vm952, %v949, 0.0
      %984 = vadd.xlane.f32.xlu0 %v983
      %v985 = vpop.xlane.xlu0 %984
      %v986 = vrcp.pop 32.0
      %v987 = vmul.f32 32.0, %v986
      %v988 = vsub.f32 1.0, %v987
      %v989 = vmul.f32 %v986, %v988
      %v990 = vadd.f32 %v986, %v989
      %vm991 = vweird.f32 %v986
      %v992 = vsel %vm991, %v986, %v990
      %v993 = vmul.f32 %v955, %v992
      %v994 = vmul.f32 %v958, %v992
      %v995 = vmul.f32 %v961, %v992
      %v996 = vmul.f32 %v964, %v992
      %v997 = vmul.f32 %v967, %v992
      %v998 = vmul.f32 %v970, %v992
      %v999 = vmul.f32 %v973, %v992
      %v1000 = vmul.f32 %v976, %v992
      %v1001 = vmul.f32 %v979, %v992
      %v1002 = vmul.f32 %v982, %v992
      %v1003 = vmul.f32 %v985, %v992
      %v1004 = vsub.f32 %v939, %v993
      %v1005 = vsub.f32 %v940, %v994
      %v1006 = vsub.f32 %v941, %v995
      %v1007 = vsub.f32 %v942, %v996
      %v1008 = vsub.f32 %v943, %v997
      %v1009 = vsub.f32 %v944, %v998
      %v1010 = vsub.f32 %v945, %v999
      %v1011 = vsub.f32 %v946, %v1000
      %v1012 = vsub.f32 %v947, %v1001
      %v1013 = vsub.f32 %v948, %v1002
      %v1014 = vsub.f32 %v949, %v1003
      %v1015 = vmul.f32 %v1004, %v1004
      %v1016 = vmul.f32 %v1005, %v1005
      %v1017 = vmul.f32 %v1006, %v1006
      %v1018 = vmul.f32 %v1007, %v1007
      %v1019 = vmul.f32 %v1008, %v1008
      %v1020 = vmul.f32 %v1009, %v1009
      %v1021 = vmul.f32 %v1010, %v1010
      %v1022 = vmul.f32 %v1011, %v1011
      %v1023 = vmul.f32 %v1012, %v1012
      %v1024 = vmul.f32 %v1013, %v1013
      %v1025 = vmul.f32 %v1014, %v1014
      %v1026 = vsel %vm952, %v1015, 0.0
      %1027 = vadd.xlane.f32.xlu0 %v1026
      %v1028 = vpop.xlane.xlu0 %1027
      %v1029 = vsel %vm952, %v1016, 0.0
      %1030 = vadd.xlane.f32.xlu0 %v1029
      %v1031 = vpop.xlane.xlu0 %1030
      %v1032 = vsel %vm952, %v1017, 0.0
      %1033 = vadd.xlane.f32.xlu0 %v1032
      %v1034 = vpop.xlane.xlu0 %1033
      %v1035 = vsel %vm952, %v1018, 0.0
      %1036 = vadd.xlane.f32.xlu0 %v1035
      %v1037 = vpop.xlane.xlu0 %1036
      %v1038 = vsel %vm952, %v1019, 0.0
      %1039 = vadd.xlane.f32.xlu0 %v1038
      %v1040 = vpop.xlane.xlu0 %1039
      %v1041 = vsel %vm952, %v1020, 0.0
      %1042 = vadd.xlane.f32.xlu0 %v1041
      %v1043 = vpop.xlane.xlu0 %1042
      %v1044 = vsel %vm952, %v1021, 0.0
      %1045 = vadd.xlane.f32.xlu0 %v1044
      %v1046 = vpop.xlane.xlu0 %1045
      %v1047 = vsel %vm952, %v1022, 0.0
      %1048 = vadd.xlane.f32.xlu0 %v1047
      %v1049 = vpop.xlane.xlu0 %1048
      %v1050 = vsel %vm952, %v1023, 0.0
      %1051 = vadd.xlane.f32.xlu0 %v1050
      %v1052 = vpop.xlane.xlu0 %1051
      %v1053 = vsel %vm952, %v1024, 0.0
      %1054 = vadd.xlane.f32.xlu0 %v1053
      %v1055 = vpop.xlane.xlu0 %1054
      %v1056 = vsel %vm952, %v1025, 0.0
      %1057 = vadd.xlane.f32.xlu0 %v1056
      %v1058 = vpop.xlane.xlu0 %1057
      %v1059 = vmul.f32 %v1028, %v992
      %v1060 = vmul.f32 %v1031, %v992
      %v1061 = vmul.f32 %v1034, %v992
      %v1062 = vmul.f32 %v1037, %v992
      %v1063 = vmul.f32 %v1040, %v992
      %v1064 = vmul.f32 %v1043, %v992
      %v1065 = vmul.f32 %v1046, %v992
      %v1066 = vmul.f32 %v1049, %v992
      %v1067 = vmul.f32 %v1052, %v992
      %v1068 = vmul.f32 %v1055, %v992
      %v1069 = vmul.f32 %v1058, %v992
      %v1070 = vadd.f32 %v1059, 1e-06
      %v1071 = vadd.f32 %v1060, 1e-06
      %v1072 = vadd.f32 %v1061, 1e-06
      %v1073 = vadd.f32 %v1062, 1e-06
      %v1074 = vadd.f32 %v1063, 1e-06
      %v1075 = vadd.f32 %v1064, 1e-06
      %v1076 = vadd.f32 %v1065, 1e-06
      %v1077 = vadd.f32 %v1066, 1e-06
      %v1078 = vadd.f32 %v1067, 1e-06
      %v1079 = vadd.f32 %v1068, 1e-06
      %v1080 = vadd.f32 %v1069, 1e-06
      %v1081 = vrsqrt.pop %v1070
      %v1082 = vmul.f32 %v1081, %v1070
      %v1083 = vmul.f32 %v1082, %v1081
      %v1084 = vmul.f32 0.5, %v1083
      %v1085 = vsub.f32 1.5, %v1084
      %v1086 = vmul.f32 %v1081, %v1085
      %vm1087 = vweird.f32 %v1070
      %vm1088 = vweird.f32 %v1081
      %vm1089 = vmor %vm1087, %vm1088
      %v1090 = vsel %vm1089, %v1081, %v1086
      %v1091 = vrsqrt.pop %v1071
      %v1092 = vmul.f32 %v1091, %v1071
      %v1093 = vmul.f32 %v1092, %v1091
      %v1094 = vmul.f32 0.5, %v1093
      %v1095 = vsub.f32 1.5, %v1094
      %v1096 = vmul.f32 %v1091, %v1095
      %vm1097 = vweird.f32 %v1071
      %vm1098 = vweird.f32 %v1091
      %vm1099 = vmor %vm1097, %vm1098
      %v1100 = vsel %vm1099, %v1091, %v1096
      %v1101 = vrsqrt.pop %v1072
      %v1102 = vmul.f32 %v1101, %v1072
      %v1103 = vmul.f32 %v1102, %v1101
      %v1104 = vmul.f32 0.5, %v1103
      %v1105 = vsub.f32 1.5, %v1104
      %v1106 = vmul.f32 %v1101, %v1105
      %vm1107 = vweird.f32 %v1072
      %vm1108 = vweird.f32 %v1101
      %vm1109 = vmor %vm1107, %vm1108
      %v1110 = vsel %vm1109, %v1101, %v1106
      %v1111 = vrsqrt.pop %v1073
      %v1112 = vmul.f32 %v1111, %v1073
      %v1113 = vmul.f32 %v1112, %v1111
      %v1114 = vmul.f32 0.5, %v1113
      %v1115 = vsub.f32 1.5, %v1114
      %v1116 = vmul.f32 %v1111, %v1115
      %vm1117 = vweird.f32 %v1073
      %vm1118 = vweird.f32 %v1111
      %vm1119 = vmor %vm1117, %vm1118
      %v1120 = vsel %vm1119, %v1111, %v1116
      %v1121 = vrsqrt.pop %v1074
      %v1122 = vmul.f32 %v1121, %v1074
      %v1123 = vmul.f32 %v1122, %v1121
      %v1124 = vmul.f32 0.5, %v1123
      %v1125 = vsub.f32 1.5, %v1124
      %v1126 = vmul.f32 %v1121, %v1125
      %vm1127 = vweird.f32 %v1074
      %vm1128 = vweird.f32 %v1121
      %vm1129 = vmor %vm1127, %vm1128
      %v1130 = vsel %vm1129, %v1121, %v1126
      %v1131 = vrsqrt.pop %v1075
      %v1132 = vmul.f32 %v1131, %v1075
      %v1133 = vmul.f32 %v1132, %v1131
      %v1134 = vmul.f32 0.5, %v1133
      %v1135 = vsub.f32 1.5, %v1134
      %v1136 = vmul.f32 %v1131, %v1135
      %vm1137 = vweird.f32 %v1075
      %vm1138 = vweird.f32 %v1131
      %vm1139 = vmor %vm1137, %vm1138
      %v1140 = vsel %vm1139, %v1131, %v1136
      %v1141 = vrsqrt.pop %v1076
      %v1142 = vmul.f32 %v1141, %v1076
      %v1143 = vmul.f32 %v1142, %v1141
      %v1144 = vmul.f32 0.5, %v1143
      %v1145 = vsub.f32 1.5, %v1144
      %v1146 = vmul.f32 %v1141, %v1145
      %vm1147 = vweird.f32 %v1076
      %vm1148 = vweird.f32 %v1141
      %vm1149 = vmor %vm1147, %vm1148
      %v1150 = vsel %vm1149, %v1141, %v1146
      %v1151 = vrsqrt.pop %v1077
      %v1152 = vmul.f32 %v1151, %v1077
      %v1153 = vmul.f32 %v1152, %v1151
      %v1154 = vmul.f32 0.5, %v1153
      %v1155 = vsub.f32 1.5, %v1154
      %v1156 = vmul.f32 %v1151, %v1155
      %vm1157 = vweird.f32 %v1077
      %vm1158 = vweird.f32 %v1151
      %vm1159 = vmor %vm1157, %vm1158
      %v1160 = vsel %vm1159, %v1151, %v1156
      %v1161 = vrsqrt.pop %v1078
      %v1162 = vmul.f32 %v1161, %v1078
      %v1163 = vmul.f32 %v1162, %v1161
      %v1164 = vmul.f32 0.5, %v1163
      %v1165 = vsub.f32 1.5, %v1164
      %v1166 = vmul.f32 %v1161, %v1165
      %vm1167 = vweird.f32 %v1078
      %vm1168 = vweird.f32 %v1161
      %vm1169 = vmor %vm1167, %vm1168
      %v1170 = vsel %vm1169, %v1161, %v1166
      %v1171 = vrsqrt.pop %v1079
      %v1172 = vmul.f32 %v1171, %v1079
      %v1173 = vmul.f32 %v1172, %v1171
      %v1174 = vmul.f32 0.5, %v1173
      %v1175 = vsub.f32 1.5, %v1174
      %v1176 = vmul.f32 %v1171, %v1175
      %vm1177 = vweird.f32 %v1079
      %vm1178 = vweird.f32 %v1171
      %vm1179 = vmor %vm1177, %vm1178
      %v1180 = vsel %vm1179, %v1171, %v1176
      %v1181 = vrsqrt.pop %v1080
      %v1182 = vmul.f32 %v1181, %v1080
      %v1183 = vmul.f32 %v1182, %v1181
      %v1184 = vmul.f32 0.5, %v1183
      %v1185 = vsub.f32 1.5, %v1184
      %v1186 = vmul.f32 %v1181, %v1185
      %vm1187 = vweird.f32 %v1080
      %vm1188 = vweird.f32 %v1181
      %vm1189 = vmor %vm1187, %vm1188
      %v1190 = vsel %vm1189, %v1181, %v1186
      %v1191 = vmul.f32 %v1004, %v1090
      %v1192 = vmul.f32 %v1005, %v1100
      %v1193 = vmul.f32 %v1006, %v1110
      %v1194 = vmul.f32 %v1007, %v1120
      %v1195 = vmul.f32 %v1008, %v1130
      %v1196 = vmul.f32 %v1009, %v1140
      %v1197 = vmul.f32 %v1010, %v1150
      %v1198 = vmul.f32 %v1011, %v1160
      %v1199 = vmul.f32 %v1012, %v1170
      %v1200 = vmul.f32 %v1013, %v1180
      %v1201 = vmul.f32 %v1014, %v1190
      %v1203 = vperm.slane %v950, 0
      %v1205 = vmul.f32 %v1191, %v1203
      %v1206 = vmul.f32 %v1192, %v1203
      %v1207 = vmul.f32 %v1193, %v1203
      %v1208 = vmul.f32 %v1194, %v1203
      %v1209 = vmul.f32 %v1195, %v1203
      %v1210 = vmul.f32 %v1196, %v1203
      %v1211 = vmul.f32 %v1197, %v1203
      %v1212 = vmul.f32 %v1198, %v1203
      %v1213 = vmul.f32 %v1199, %v1203
      %v1214 = vmul.f32 %v1200, %v1203
      %v1215 = vmul.f32 %v1201, %v1203
      %v1217 = vperm.slane %v951, 0
      %v1219 = vadd.f32 %v1205, %v1217
      %v1220 = vadd.f32 %v1206, %v1217
      %v1221 = vadd.f32 %v1207, %v1217
      %v1222 = vadd.f32 %v1208, %v1217
      %v1223 = vadd.f32 %v1209, %v1217
      %v1224 = vadd.f32 %v1210, %v1217
      %v1225 = vadd.f32 %v1211, %v1217
      %v1226 = vadd.f32 %v1212, %v1217
      %v1227 = vadd.f32 %v1213, %v1217
      %v1228 = vadd.f32 %v1214, %v1217
      %v1229 = vadd.f32 %v1215, %v1217
      %v1230 = vpack.c.bf16 %v1220, %v1219
      %v1231 = vpack.c.bf16 %v1222, %v1221
      %v1232 = vpack.c.bf16 %v1224, %v1223
      %v1233 = vpack.c.bf16 %v1226, %v1225
      %v1234 = vpack.c.bf16 %v1228, %v1227
      %v1235 = vpack.c.bf16 %v1229, %v1229
      %v1236 = vld [vmem:[%s762] sm:$0xf]
      %v1237 = vld [vmem:[%s762 + $0x4] sm:$0xf]
      %v1238 = vld [vmem:[%s762 + $0x8] sm:$0xf]
      %v1239 = vld [vmem:[%s762 + $0xc] sm:$0xf]
      %v1240 = vld [vmem:[%s765] sm:$0x1]
      %v1242 = vperm.slane %v1240, 0
      %v1248 = vunpack.c.l.b16 %v1236
      %v1249 = vunpack.c.l.b16 %v1237
      %v1250 = vunpack.c.l.b16 %v1238
      %v1251 = vunpack.c.l.b16 %v1239
      %v1252 = vpack.c.b16 %v1249, %v1248
      %v1253 = vpack.c.b16 %v1251, %v1250
      %v1257 = vsel %vm952, %v1230, 0
      %v1260 = vsel %vm952, %v1231, 0
      %v1263 = vsel %vm952, %v1232, 0
      %v1266 = vsel %vm952, %v1233, 0
      %v1269 = vsel %vm952, %v1234, 0
      %v1272 = vsel %vm952, %v1235, 0
      %1274 = vmatpush.bf16.msra.mxu0 0
      %1275 = vmatpush.bf16.msra.mxu0 0
      %1276 = vmatpush.bf16.msra.mxu0 0
      %1277 = vmatpush.bf16.msra.mxu0 0
      %1278 = vmatpush.bf16.msra.mxu0 0
      %1279 = vmatpush.bf16.msra.mxu0 0
      %1280 = vmatpush.bf16.msra.mxu0 %v1253
      %1281 = vmatpush.bf16.msra.mxu0 %v1252
      %1282 = vmatmul.bf16.gmra.mxu0 %v1257
      %v1283 = vpop.f32.mrf.mxu0
      %v1284 = vadd.f32 %v1242, %v1283
      %v1285 = vpop.f32.mrf.mxu0
      %v1286 = vadd.f32 %v1242, %v1285
      %1287 = vmatmul.bf16.gmra.mxu0 %v1260
      %v1288 = vpop.f32.mrf.mxu0
      %v1289 = vadd.f32 %v1242, %v1288
      %v1290 = vpop.f32.mrf.mxu0
      %v1291 = vadd.f32 %v1242, %v1290
      %1292 = vmatmul.bf16.gmra.mxu0 %v1263
      %v1293 = vpop.f32.mrf.mxu0
      %v1294 = vadd.f32 %v1242, %v1293
      %v1295 = vpop.f32.mrf.mxu0
      %v1296 = vadd.f32 %v1242, %v1295
      %1297 = vmatmul.bf16.gmra.mxu0 %v1266
      %v1298 = vpop.f32.mrf.mxu0
      %v1299 = vadd.f32 %v1242, %v1298
      %v1300 = vpop.f32.mrf.mxu0
      %v1301 = vadd.f32 %v1242, %v1300
      %1302 = vmatmul.bf16.gmra.mxu0 %v1269
      %v1303 = vpop.f32.mrf.mxu0
      %v1304 = vadd.f32 %v1242, %v1303
      %v1305 = vpop.f32.mrf.mxu0
      %v1306 = vadd.f32 %v1242, %v1305
      %1307 = vmatmul.bf16.gmra.mxu0 %v1272
      %v1308 = vpop.f32.mrf.mxu0
      %v1309 = vadd.f32 %v1242, %v1308
      %v1310 = vpop.f32.mrf.mxu0
      %1311 = vdwg.mxu0
      %v1312 = vpack.c.bf16 %v1286, %v1284
      %v1313 = vpack.c.bf16 %v1291, %v1289
      %v1314 = vpack.c.bf16 %v1296, %v1294
      %v1315 = vpack.c.bf16 %v1301, %v1299
      %v1316 = vpack.c.bf16 %v1306, %v1304
      %v1317 = vpack.c.bf16 %v1309, %v1309
      %1324 = vrot.lane.b32.xlu0 %v1312, 96
      %v1325 = vpop.permute.xlu0 %1324
      %1326 = vrot.lane.b32.xlu0 %v1313, 96
      %v1327 = vpop.permute.xlu0 %1326
      %1328 = vrot.lane.b32.xlu0 %v1314, 96
      %v1329 = vpop.permute.xlu0 %1328
      %1330 = vrot.lane.b32.xlu0 %v1315, 96
      %v1331 = vpop.permute.xlu0 %1330
      %1332 = vrot.lane.b32.xlu0 %v1316, 96
      %v1333 = vpop.permute.xlu0 %1332
      %1334 = vrot.lane.b32.xlu0 %v1317, 96
      %v1335 = vpop.permute.xlu0 %1334
      %vm1336 = vcmask 64512
      %v1338 = vsel %vm1336, %v1312, 0
      %v1341 = vsel %vm1336, %v1313, 0
      %v1344 = vsel %vm1336, %v1314, 0
      %v1347 = vsel %vm1336, %v1315, 0
      %v1350 = vsel %vm1336, %v1316, 0
      %v1353 = vsel %vm1336, %v1317, 0
      %v1356 = vsel %vm1336, %v1325, 0
      %v1359 = vsel %vm1336, %v1327, 0
      %v1362 = vsel %vm1336, %v1329, 0
      %v1365 = vsel %vm1336, %v1331, 0
      %v1368 = vsel %vm1336, %v1333, 0
      %v1371 = vsel %vm1336, %v1335, 0
      %1373 = vmatpush.bf16.xpose.msra.mxu0 0
      %1374 = vmatpush.bf16.xpose.msra.mxu0 0
      %1375 = vmatpush.bf16.xpose.msra.mxu0 %v1371
      %1376 = vmatpush.bf16.xpose.msra.mxu0 %v1368
      %1377 = vmatpush.bf16.xpose.msra.mxu0 %v1365
      %1378 = vmatpush.bf16.xpose.msra.mxu0 %v1362
      %1379 = vmatpush.bf16.xpose.msra.mxu0 %v1359
      %1380 = vmatpush.bf16.xpose.msra.mxu0 %v1356
      %1381 = vmatmul.bf16.gmra.mxu0 %v1338
      %v1382 = vpop.f32.mrf.mxu0
      %v1383 = vadd.f32 %v938, %v1382
      %v1384 = vpop.f32.mrf.mxu0
      %v1385 = vadd.f32 %v938, %v1384
      %1386 = vmatmul.bf16.gmra.mxu0 %v1341
      %v1387 = vpop.f32.mrf.mxu0
      %v1388 = vadd.f32 %v938, %v1387
      %v1389 = vpop.f32.mrf.mxu0
      %v1390 = vadd.f32 %v938, %v1389
      %1391 = vmatmul.bf16.gmra.mxu0 %v1344
      %v1392 = vpop.f32.mrf.mxu0
      %v1393 = vadd.f32 %v938, %v1392
      %v1394 = vpop.f32.mrf.mxu0
      %v1395 = vadd.f32 %v938, %v1394
      %1396 = vmatmul.bf16.gmra.mxu0 %v1347
      %v1397 = vpop.f32.mrf.mxu0
      %v1398 = vadd.f32 %v938, %v1397
      %v1399 = vpop.f32.mrf.mxu0
      %v1400 = vadd.f32 %v938, %v1399
      %1401 = vmatmul.bf16.gmra.mxu0 %v1350
      %v1402 = vpop.f32.mrf.mxu0
      %v1403 = vadd.f32 %v938, %v1402
      %v1404 = vpop.f32.mrf.mxu0
      %v1405 = vadd.f32 %v938, %v1404
      %1406 = vmatmul.bf16.gmra.mxu0 %v1353
      %v1407 = vpop.f32.mrf.mxu0
      %v1408 = vadd.f32 %v938, %v1407
      %v1409 = vpop.f32.mrf.mxu0
      %1410 = vdwg.mxu0
      %vm1411 = vcmask 719872
      %v1412 = vsel %vm1411, %v1383, -inf
      %1413 = vmax.xlane.f32.xlu0 %v1412
      %v1414 = vpop.xlane.xlu0 %1413
      %v1415 = vsel %vm1411, %v1385, -inf
      %1416 = vmax.xlane.f32.xlu0 %v1415
      %v1417 = vpop.xlane.xlu0 %1416
      %v1418 = vsel %vm1411, %v1388, -inf
      %1419 = vmax.xlane.f32.xlu0 %v1418
      %v1420 = vpop.xlane.xlu0 %1419
      %v1421 = vsel %vm1411, %v1390, -inf
      %1422 = vmax.xlane.f32.xlu0 %v1421
      %v1423 = vpop.xlane.xlu0 %1422
      %v1424 = vsel %vm1411, %v1393, -inf
      %1425 = vmax.xlane.f32.xlu0 %v1424
      %v1426 = vpop.xlane.xlu0 %1425
      %v1427 = vsel %vm1411, %v1395, -inf
      %1428 = vmax.xlane.f32.xlu0 %v1427
      %v1429 = vpop.xlane.xlu0 %1428
      %v1430 = vsel %vm1411, %v1398, -inf
      %1431 = vmax.xlane.f32.xlu0 %v1430
      %v1432 = vpop.xlane.xlu0 %1431
      %v1433 = vsel %vm1411, %v1400, -inf
      %1434 = vmax.xlane.f32.xlu0 %v1433
      %v1435 = vpop.xlane.xlu0 %1434
      %v1436 = vsel %vm1411, %v1403, -inf
      %1437 = vmax.xlane.f32.xlu0 %v1436
      %v1438 = vpop.xlane.xlu0 %1437
      %v1439 = vsel %vm1411, %v1405, -inf
      %1440 = vmax.xlane.f32.xlu0 %v1439
      %v1441 = vpop.xlane.xlu0 %1440
      %v1442 = vsel %vm1411, %v1408, -inf
      %1443 = vmax.xlane.f32.xlu0 %v1442
      %v1444 = vpop.xlane.xlu0 %1443
      %v1445 = vsub.f32 %v1383, %v1414
      %v1446 = vsub.f32 %v1385, %v1417
      %v1447 = vsub.f32 %v1388, %v1420
      %v1448 = vsub.f32 %v1390, %v1423
      %v1449 = vsub.f32 %v1393, %v1426
      %v1450 = vsub.f32 %v1395, %v1429
      %v1451 = vsub.f32 %v1398, %v1432
      %v1452 = vsub.f32 %v1400, %v1435
      %v1453 = vsub.f32 %v1403, %v1438
      %v1454 = vsub.f32 %v1405, %v1441
      %v1455 = vsub.f32 %v1408, %v1444
      %v1456 = vmul.f32 %v1445, 1.442695
      %v1457 = vpow.pop %v1456
      %v1458 = vmul.f32 %v1446, 1.442695
      %v1459 = vpow.pop %v1458
      %v1460 = vmul.f32 %v1447, 1.442695
      %v1461 = vpow.pop %v1460
      %v1462 = vmul.f32 %v1448, 1.442695
      %v1463 = vpow.pop %v1462
      %v1464 = vmul.f32 %v1449, 1.442695
      %v1465 = vpow.pop %v1464
      %v1466 = vmul.f32 %v1450, 1.442695
      %v1467 = vpow.pop %v1466
      %v1468 = vmul.f32 %v1451, 1.442695
      %v1469 = vpow.pop %v1468
      %v1470 = vmul.f32 %v1452, 1.442695
      %v1471 = vpow.pop %v1470
      %v1472 = vmul.f32 %v1453, 1.442695
      %v1473 = vpow.pop %v1472
      %v1474 = vmul.f32 %v1454, 1.442695
      %v1475 = vpow.pop %v1474
      %v1476 = vmul.f32 %v1455, 1.442695
      %v1477 = vpow.pop %v1476
      %v1478 = vsel %vm1411, %v1457, 0.0
      %1479 = vadd.xlane.f32.xlu0 %v1478
      %v1480 = vpop.xlane.xlu0 %1479
      %v1481 = vsel %vm1411, %v1459, 0.0
      %1482 = vadd.xlane.f32.xlu0 %v1481
      %v1483 = vpop.xlane.xlu0 %1482
      %v1484 = vsel %vm1411, %v1461, 0.0
      %1485 = vadd.xlane.f32.xlu0 %v1484
      %v1486 = vpop.xlane.xlu0 %1485
      %v1487 = vsel %vm1411, %v1463, 0.0
      %1488 = vadd.xlane.f32.xlu0 %v1487
      %v1489 = vpop.xlane.xlu0 %1488
      %v1490 = vsel %vm1411, %v1465, 0.0
      %1491 = vadd.xlane.f32.xlu0 %v1490
      %v1492 = vpop.xlane.xlu0 %1491
      %v1493 = vsel %vm1411, %v1467, 0.0
      %1494 = vadd.xlane.f32.xlu0 %v1493
      %v1495 = vpop.xlane.xlu0 %1494
      %v1496 = vsel %vm1411, %v1469, 0.0
      %1497 = vadd.xlane.f32.xlu0 %v1496
      %v1498 = vpop.xlane.xlu0 %1497
      %v1499 = vsel %vm1411, %v1471, 0.0
      %1500 = vadd.xlane.f32.xlu0 %v1499
      %v1501 = vpop.xlane.xlu0 %1500
      %v1502 = vsel %vm1411, %v1473, 0.0
      %1503 = vadd.xlane.f32.xlu0 %v1502
      %v1504 = vpop.xlane.xlu0 %1503
      %v1505 = vsel %vm1411, %v1475, 0.0
      %1506 = vadd.xlane.f32.xlu0 %v1505
      %v1507 = vpop.xlane.xlu0 %1506
      %v1508 = vsel %vm1411, %v1477, 0.0
      %1509 = vadd.xlane.f32.xlu0 %v1508
      %v1510 = vpop.xlane.xlu0 %1509
      %v1511 = vrcp.pop %v1480
      %v1512 = vrcp.pop %v1483
      %v1513 = vrcp.pop %v1486
      %v1514 = vrcp.pop %v1489
      %v1515 = vrcp.pop %v1492
      %v1516 = vrcp.pop %v1495
      %v1517 = vrcp.pop %v1498
      %v1518 = vrcp.pop %v1501
      %v1519 = vrcp.pop %v1504
      %v1520 = vrcp.pop %v1507
      %v1521 = vrcp.pop %v1510
      %v1522 = vmul.f32 %v1457, %v1511
      %v1523 = vmul.f32 %v1459, %v1512
      %v1524 = vmul.f32 %v1461, %v1513
      %v1525 = vmul.f32 %v1463, %v1514
      %v1526 = vmul.f32 %v1465, %v1515
      %v1527 = vmul.f32 %v1467, %v1516
      %v1528 = vmul.f32 %v1469, %v1517
      %v1529 = vmul.f32 %v1471, %v1518
      %v1530 = vmul.f32 %v1473, %v1519
      %v1531 = vmul.f32 %v1475, %v1520
      %v1532 = vmul.f32 %v1477, %v1521
      %v1533 = vpack.c.bf16 %v1523, %v1522
      %v1534 = vpack.c.bf16 %v1525, %v1524
      %v1535 = vpack.c.bf16 %v1527, %v1526
      %v1536 = vpack.c.bf16 %v1529, %v1528
      %v1537 = vpack.c.bf16 %v1531, %v1530
      %v1538 = vpack.c.bf16 %v1532, %v1532
      %1539 = vrot.lane.b32.xlu0 %v1312, 64
      %v1540 = vpop.permute.xlu0 %1539
      %1541 = vrot.lane.b32.xlu0 %v1313, 64
      %v1542 = vpop.permute.xlu0 %1541
      %1543 = vrot.lane.b32.xlu0 %v1314, 64
      %v1544 = vpop.permute.xlu0 %1543
      %1545 = vrot.lane.b32.xlu0 %v1315, 64
      %v1546 = vpop.permute.xlu0 %1545
      %1547 = vrot.lane.b32.xlu0 %v1316, 64
      %v1548 = vpop.permute.xlu0 %1547
      %1549 = vrot.lane.b32.xlu0 %v1317, 64
      %v1550 = vpop.permute.xlu0 %1549
      %v1557 = vsel %vm1411, %v1533, 0
      %v1560 = vsel %vm1411, %v1534, 0
      %v1563 = vsel %vm1411, %v1535, 0
      %v1566 = vsel %vm1411, %v1536, 0
      %v1569 = vsel %vm1411, %v1537, 0
      %v1572 = vsel %vm1411, %v1538, 0
      %vm1574 = vcmask 1043456
      %v1576 = vsel %vm1574, %v1550, 0
      %1578 = vmatpush.bf16.msra.mxu0 0
      %1579 = vmatpush.bf16.msra.mxu0 0
      %1580 = vmatpush.bf16.msra.mxu0 %v1576
      %1581 = vmatpush.bf16.msra.mxu0 %v1548
      %1582 = vmatpush.bf16.msra.mxu0 %v1546
      %1583 = vmatpush.bf16.msra.mxu0 %v1544
      %1584 = vmatpush.bf16.msra.mxu0 %v1542
      %1585 = vmatpush.bf16.msra.mxu0 %v1540
      %1586 = vmatmul.bf16.gmra.mxu0 %v1557
      %v1587 = vpop.f32.mrf.mxu0
      %v1588 = vadd.f32 0.0, %v1587
      %v1589 = vpop.f32.mrf.mxu0
      %v1590 = vadd.f32 0.0, %v1589
      %1591 = vmatmul.bf16.gmra.mxu0 %v1560
      %v1592 = vpop.f32.mrf.mxu0
      %v1593 = vadd.f32 0.0, %v1592
      %v1594 = vpop.f32.mrf.mxu0
      %v1595 = vadd.f32 0.0, %v1594
      %1596 = vmatmul.bf16.gmra.mxu0 %v1563
      %v1597 = vpop.f32.mrf.mxu0
      %v1598 = vadd.f32 0.0, %v1597
      %v1599 = vpop.f32.mrf.mxu0
      %v1600 = vadd.f32 0.0, %v1599
      %1601 = vmatmul.bf16.gmra.mxu0 %v1566
      %v1602 = vpop.f32.mrf.mxu0
      %v1603 = vadd.f32 0.0, %v1602
      %v1604 = vpop.f32.mrf.mxu0
      %v1605 = vadd.f32 0.0, %v1604
      %1606 = vmatmul.bf16.gmra.mxu0 %v1569
      %v1607 = vpop.f32.mrf.mxu0
      %v1608 = vadd.f32 0.0, %v1607
      %v1609 = vpop.f32.mrf.mxu0
      %v1610 = vadd.f32 0.0, %v1609
      %1611 = vmatmul.bf16.gmra.mxu0 %v1572
      %v1612 = vpop.f32.mrf.mxu0
      %v1613 = vadd.f32 0.0, %v1612
      %v1614 = vpop.f32.mrf.mxu0
      %1615 = vdwg.mxu0
      %1616 = vrot.lane.b32.xlu0 %v1312, 120
      %v1617 = vpop.permute.xlu0 %1616
      %1618 = vrot.lane.b32.xlu0 %v1313, 120
      %v1619 = vpop.permute.xlu0 %1618
      %1620 = vrot.lane.b32.xlu0 %v1314, 120
      %v1621 = vpop.permute.xlu0 %1620
      %1622 = vrot.lane.b32.xlu0 %v1315, 120
      %v1623 = vpop.permute.xlu0 %1622
      %1624 = vrot.lane.b32.xlu0 %v1316, 120
      %v1625 = vpop.permute.xlu0 %1624
      %1626 = vrot.lane.b32.xlu0 %v1317, 120
      %v1627 = vpop.permute.xlu0 %1626
      %1628 = vrot.lane.b32.xlu0 %v1312, 88
      %v1629 = vpop.permute.xlu0 %1628
      %1630 = vrot.lane.b32.xlu0 %v1313, 88
      %v1631 = vpop.permute.xlu0 %1630
      %1632 = vrot.lane.b32.xlu0 %v1314, 88
      %v1633 = vpop.permute.xlu0 %1632
      %1634 = vrot.lane.b32.xlu0 %v1315, 88
      %v1635 = vpop.permute.xlu0 %1634
      %1636 = vrot.lane.b32.xlu0 %v1316, 88
      %v1637 = vpop.permute.xlu0 %1636
      %1638 = vrot.lane.b32.xlu0 %v1317, 88
      %v1639 = vpop.permute.xlu0 %1638
      %v1641 = vsel %vm1336, %v1617, 0
      %v1644 = vsel %vm1336, %v1619, 0
      %v1647 = vsel %vm1336, %v1621, 0
      %v1650 = vsel %vm1336, %v1623, 0
      %v1653 = vsel %vm1336, %v1625, 0
      %v1656 = vsel %vm1336, %v1627, 0
      %v1659 = vsel %vm1336, %v1629, 0
      %v1662 = vsel %vm1336, %v1631, 0
      %v1665 = vsel %vm1336, %v1633, 0
      %v1668 = vsel %vm1336, %v1635, 0
      %v1671 = vsel %vm1336, %v1637, 0
      %v1674 = vsel %vm1336, %v1639, 0
      %1676 = vmatpush.bf16.xpose.msra.mxu0 0
      %1677 = vmatpush.bf16.xpose.msra.mxu0 0
      %1678 = vmatpush.bf16.xpose.msra.mxu0 %v1674
      %1679 = vmatpush.bf16.xpose.msra.mxu0 %v1671
      %1680 = vmatpush.bf16.xpose.msra.mxu0 %v1668
      %1681 = vmatpush.bf16.xpose.msra.mxu0 %v1665
      %1682 = vmatpush.bf16.xpose.msra.mxu0 %v1662
      %1683 = vmatpush.bf16.xpose.msra.mxu0 %v1659
      %1684 = vmatmul.bf16.gmra.mxu0 %v1641
      %v1685 = vpop.f32.mrf.mxu0
      %v1686 = vadd.f32 %v938, %v1685
      %v1687 = vpop.f32.mrf.mxu0
      %v1688 = vadd.f32 %v938, %v1687
      %1689 = vmatmul.bf16.gmra.mxu0 %v1644
      %v1690 = vpop.f32.mrf.mxu0
      %v1691 = vadd.f32 %v938, %v1690
      %v1692 = vpop.f32.mrf.mxu0
      %v1693 = vadd.f32 %v938, %v1692
      %1694 = vmatmul.bf16.gmra.mxu0 %v1647
      %v1695 = vpop.f32.mrf.mxu0
      %v1696 = vadd.f32 %v938, %v1695
      %v1697 = vpop.f32.mrf.mxu0
      %v1698 = vadd.f32 %v938, %v1697
      %1699 = vmatmul.bf16.gmra.mxu0 %v1650
      %v1700 = vpop.f32.mrf.mxu0
      %v1701 = vadd.f32 %v938, %v1700
      %v1702 = vpop.f32.mrf.mxu0
      %v1703 = vadd.f32 %v938, %v1702
      %1704 = vmatmul.bf16.gmra.mxu0 %v1653
      %v1705 = vpop.f32.mrf.mxu0
      %v1706 = vadd.f32 %v938, %v1705
      %v1707 = vpop.f32.mrf.mxu0
      %v1708 = vadd.f32 %v938, %v1707
      %1709 = vmatmul.bf16.gmra.mxu0 %v1656
      %v1710 = vpop.f32.mrf.mxu0
      %v1711 = vadd.f32 %v938, %v1710
      %v1712 = vpop.f32.mrf.mxu0
      %1713 = vdwg.mxu0
      %v1714 = vsel %vm1411, %v1686, -inf
      %1715 = vmax.xlane.f32.xlu0 %v1714
      %v1716 = vpop.xlane.xlu0 %1715
      %v1717 = vsel %vm1411, %v1688, -inf
      %1718 = vmax.xlane.f32.xlu0 %v1717
      %v1719 = vpop.xlane.xlu0 %1718
      %v1720 = vsel %vm1411, %v1691, -inf
      %1721 = vmax.xlane.f32.xlu0 %v1720
      %v1722 = vpop.xlane.xlu0 %1721
      %v1723 = vsel %vm1411, %v1693, -inf
      %1724 = vmax.xlane.f32.xlu0 %v1723
      %v1725 = vpop.xlane.xlu0 %1724
      %v1726 = vsel %vm1411, %v1696, -inf
      %1727 = vmax.xlane.f32.xlu0 %v1726
      %v1728 = vpop.xlane.xlu0 %1727
      %v1729 = vsel %vm1411, %v1698, -inf
      %1730 = vmax.xlane.f32.xlu0 %v1729
      %v1731 = vpop.xlane.xlu0 %1730
      %v1732 = vsel %vm1411, %v1701, -inf
      %1733 = vmax.xlane.f32.xlu0 %v1732
      %v1734 = vpop.xlane.xlu0 %1733
      %v1735 = vsel %vm1411, %v1703, -inf
      %1736 = vmax.xlane.f32.xlu0 %v1735
      %v1737 = vpop.xlane.xlu0 %1736
      %v1738 = vsel %vm1411, %v1706, -inf
      %1739 = vmax.xlane.f32.xlu0 %v1738
      %v1740 = vpop.xlane.xlu0 %1739
      %v1741 = vsel %vm1411, %v1708, -inf
      %1742 = vmax.xlane.f32.xlu0 %v1741
      %v1743 = vpop.xlane.xlu0 %1742
      %v1744 = vsel %vm1411, %v1711, -inf
      %1745 = vmax.xlane.f32.xlu0 %v1744
      %v1746 = vpop.xlane.xlu0 %1745
      %v1747 = vsub.f32 %v1686, %v1716
      %v1748 = vsub.f32 %v1688, %v1719
      %v1749 = vsub.f32 %v1691, %v1722
      %v1750 = vsub.f32 %v1693, %v1725
      %v1751 = vsub.f32 %v1696, %v1728
      %v1752 = vsub.f32 %v1698, %v1731
      %v1753 = vsub.f32 %v1701, %v1734
      %v1754 = vsub.f32 %v1703, %v1737
      %v1755 = vsub.f32 %v1706, %v1740
      %v1756 = vsub.f32 %v1708, %v1743
      %v1757 = vsub.f32 %v1711, %v1746
      %v1758 = vmul.f32 %v1747, 1.442695
      %v1759 = vpow.pop %v1758
      %v1760 = vmul.f32 %v1748, 1.442695
      %v1761 = vpow.pop %v1760
      %v1762 = vmul.f32 %v1749, 1.442695
      %v1763 = vpow.pop %v1762
      %v1764 = vmul.f32 %v1750, 1.442695
      %v1765 = vpow.pop %v1764
      %v1766 = vmul.f32 %v1751, 1.442695
      %v1767 = vpow.pop %v1766
      %v1768 = vmul.f32 %v1752, 1.442695
      %v1769 = vpow.pop %v1768
      %v1770 = vmul.f32 %v1753, 1.442695
      %v1771 = vpow.pop %v1770
      %v1772 = vmul.f32 %v1754, 1.442695
      %v1773 = vpow.pop %v1772
      %v1774 = vmul.f32 %v1755, 1.442695
      %v1775 = vpow.pop %v1774
      %v1776 = vmul.f32 %v1756, 1.442695
      %v1777 = vpow.pop %v1776
      %v1778 = vmul.f32 %v1757, 1.442695
      %v1779 = vpow.pop %v1778
      %v1780 = vsel %vm1411, %v1759, 0.0
      %1781 = vadd.xlane.f32.xlu0 %v1780
      %v1782 = vpop.xlane.xlu0 %1781
      %v1783 = vsel %vm1411, %v1761, 0.0
      %1784 = vadd.xlane.f32.xlu0 %v1783
      %v1785 = vpop.xlane.xlu0 %1784
      %v1786 = vsel %vm1411, %v1763, 0.0
      %1787 = vadd.xlane.f32.xlu0 %v1786
      %v1788 = vpop.xlane.xlu0 %1787
      %v1789 = vsel %vm1411, %v1765, 0.0
      %1790 = vadd.xlane.f32.xlu0 %v1789
      %v1791 = vpop.xlane.xlu0 %1790
      %v1792 = vsel %vm1411, %v1767, 0.0
      %1793 = vadd.xlane.f32.xlu0 %v1792
      %v1794 = vpop.xlane.xlu0 %1793
      %v1795 = vsel %vm1411, %v1769, 0.0
      %1796 = vadd.xlane.f32.xlu0 %v1795
      %v1797 = vpop.xlane.xlu0 %1796
      %v1798 = vsel %vm1411, %v1771, 0.0
      %1799 = vadd.xlane.f32.xlu0 %v1798
      %v1800 = vpop.xlane.xlu0 %1799
      %v1801 = vsel %vm1411, %v1773, 0.0
      %1802 = vadd.xlane.f32.xlu0 %v1801
      %v1803 = vpop.xlane.xlu0 %1802
      %v1804 = vsel %vm1411, %v1775, 0.0
      %1805 = vadd.xlane.f32.xlu0 %v1804
      %v1806 = vpop.xlane.xlu0 %1805
      %v1807 = vsel %vm1411, %v1777, 0.0
      %1808 = vadd.xlane.f32.xlu0 %v1807
      %v1809 = vpop.xlane.xlu0 %1808
      %v1810 = vsel %vm1411, %v1779, 0.0
      %1811 = vadd.xlane.f32.xlu0 %v1810
      %v1812 = vpop.xlane.xlu0 %1811
      %v1813 = vrcp.pop %v1782
      %v1814 = vrcp.pop %v1785
      %v1815 = vrcp.pop %v1788
      %v1816 = vrcp.pop %v1791
      %v1817 = vrcp.pop %v1794
      %v1818 = vrcp.pop %v1797
      %v1819 = vrcp.pop %v1800
      %v1820 = vrcp.pop %v1803
      %v1821 = vrcp.pop %v1806
      %v1822 = vrcp.pop %v1809
      %v1823 = vrcp.pop %v1812
      %v1824 = vmul.f32 %v1759, %v1813
      %v1825 = vmul.f32 %v1761, %v1814
      %v1826 = vmul.f32 %v1763, %v1815
      %v1827 = vmul.f32 %v1765, %v1816
      %v1828 = vmul.f32 %v1767, %v1817
      %v1829 = vmul.f32 %v1769, %v1818
      %v1830 = vmul.f32 %v1771, %v1819
      %v1831 = vmul.f32 %v1773, %v1820
      %v1832 = vmul.f32 %v1775, %v1821
      %v1833 = vmul.f32 %v1777, %v1822
      %v1834 = vmul.f32 %v1779, %v1823
      %v1835 = vpack.c.bf16 %v1825, %v1824
      %v1836 = vpack.c.bf16 %v1827, %v1826
      %v1837 = vpack.c.bf16 %v1829, %v1828
      %v1838 = vpack.c.bf16 %v1831, %v1830
      %v1839 = vpack.c.bf16 %v1833, %v1832
      %v1840 = vpack.c.bf16 %v1834, %v1834
      %1841 = vrot.lane.b32.xlu0 %v1312, 56
      %v1842 = vpop.permute.xlu0 %1841
      %1843 = vrot.lane.b32.xlu0 %v1313, 56
      %v1844 = vpop.permute.xlu0 %1843
      %1845 = vrot.lane.b32.xlu0 %v1314, 56
      %v1846 = vpop.permute.xlu0 %1845
      %1847 = vrot.lane.b32.xlu0 %v1315, 56
      %v1848 = vpop.permute.xlu0 %1847
      %1849 = vrot.lane.b32.xlu0 %v1316, 56
      %v1850 = vpop.permute.xlu0 %1849
      %1851 = vrot.lane.b32.xlu0 %v1317, 56
      %v1852 = vpop.permute.xlu0 %1851
      %v1859 = vsel %vm1411, %v1835, 0
      %v1862 = vsel %vm1411, %v1836, 0
      %v1865 = vsel %vm1411, %v1837, 0
      %v1868 = vsel %vm1411, %v1838, 0
      %v1871 = vsel %vm1411, %v1839, 0
      %v1874 = vsel %vm1411, %v1840, 0
      %v1877 = vsel %vm1574, %v1852, 0
      %1879 = vmatpush.bf16.msra.mxu0 0
      %1880 = vmatpush.bf16.msra.mxu0 0
      %1881 = vmatpush.bf16.msra.mxu0 %v1877
      %1882 = vmatpush.bf16.msra.mxu0 %v1850
      %1883 = vmatpush.bf16.msra.mxu0 %v1848
      %1884 = vmatpush.bf16.msra.mxu0 %v1846
      %1885 = vmatpush.bf16.msra.mxu0 %v1844
      %1886 = vmatpush.bf16.msra.mxu0 %v1842
      %1887 = vmatmul.bf16.gmra.mxu0 %v1859
      %v1888 = vpop.f32.mrf.mxu0
      %v1889 = vadd.f32 0.0, %v1888
      %v1890 = vpop.f32.mrf.mxu0
      %v1891 = vadd.f32 0.0, %v1890
      %1892 = vmatmul.bf16.gmra.mxu0 %v1862
      %v1893 = vpop.f32.mrf.mxu0
      %v1894 = vadd.f32 0.0, %v1893
      %v1895 = vpop.f32.mrf.mxu0
      %v1896 = vadd.f32 0.0, %v1895
      %1897 = vmatmul.bf16.gmra.mxu0 %v1865
      %v1898 = vpop.f32.mrf.mxu0
      %v1899 = vadd.f32 0.0, %v1898
      %v1900 = vpop.f32.mrf.mxu0
      %v1901 = vadd.f32 0.0, %v1900
      %1902 = vmatmul.bf16.gmra.mxu0 %v1868
      %v1903 = vpop.f32.mrf.mxu0
      %v1904 = vadd.f32 0.0, %v1903
      %v1905 = vpop.f32.mrf.mxu0
      %v1906 = vadd.f32 0.0, %v1905
      %1907 = vmatmul.bf16.gmra.mxu0 %v1871
      %v1908 = vpop.f32.mrf.mxu0
      %v1909 = vadd.f32 0.0, %v1908
      %v1910 = vpop.f32.mrf.mxu0
      %v1911 = vadd.f32 0.0, %v1910
      %1912 = vmatmul.bf16.gmra.mxu0 %v1874
      %v1913 = vpop.f32.mrf.mxu0
      %v1914 = vadd.f32 0.0, %v1913
      %v1915 = vpop.f32.mrf.mxu0
      %1916 = vdwg.mxu0
      %1917 = vrot.lane.b32.xlu0 %v1312, 112
      %v1918 = vpop.permute.xlu0 %1917
      %1919 = vrot.lane.b32.xlu0 %v1313, 112
      %v1920 = vpop.permute.xlu0 %1919
      %1921 = vrot.lane.b32.xlu0 %v1314, 112
      %v1922 = vpop.permute.xlu0 %1921
      %1923 = vrot.lane.b32.xlu0 %v1315, 112
      %v1924 = vpop.permute.xlu0 %1923
      %1925 = vrot.lane.b32.xlu0 %v1316, 112
      %v1926 = vpop.permute.xlu0 %1925
      %1927 = vrot.lane.b32.xlu0 %v1317, 112
      %v1928 = vpop.permute.xlu0 %1927
      %1929 = vrot.lane.b32.xlu0 %v1312, 80
      %v1930 = vpop.permute.xlu0 %1929
      %1931 = vrot.lane.b32.xlu0 %v1313, 80
      %v1932 = vpop.permute.xlu0 %1931
      %1933 = vrot.lane.b32.xlu0 %v1314, 80
      %v1934 = vpop.permute.xlu0 %1933
      %1935 = vrot.lane.b32.xlu0 %v1315, 80
      %v1936 = vpop.permute.xlu0 %1935
      %1937 = vrot.lane.b32.xlu0 %v1316, 80
      %v1938 = vpop.permute.xlu0 %1937
      %1939 = vrot.lane.b32.xlu0 %v1317, 80
      %v1940 = vpop.permute.xlu0 %1939
      %v1942 = vsel %vm1336, %v1918, 0
      %v1945 = vsel %vm1336, %v1920, 0
      %v1948 = vsel %vm1336, %v1922, 0
      %v1951 = vsel %vm1336, %v1924, 0
      %v1954 = vsel %vm1336, %v1926, 0
      %v1957 = vsel %vm1336, %v1928, 0
      %v1960 = vsel %vm1336, %v1930, 0
      %v1963 = vsel %vm1336, %v1932, 0
      %v1966 = vsel %vm1336, %v1934, 0
      %v1969 = vsel %vm1336, %v1936, 0
      %v1972 = vsel %vm1336, %v1938, 0
      %v1975 = vsel %vm1336, %v1940, 0
      %1977 = vmatpush.bf16.xpose.msra.mxu0 0
      %1978 = vmatpush.bf16.xpose.msra.mxu0 0
      %1979 = vmatpush.bf16.xpose.msra.mxu0 %v1975
      %1980 = vmatpush.bf16.xpose.msra.mxu0 %v1972
      %1981 = vmatpush.bf16.xpose.msra.mxu0 %v1969
      %1982 = vmatpush.bf16.xpose.msra.mxu0 %v1966
      %1983 = vmatpush.bf16.xpose.msra.mxu0 %v1963
      %1984 = vmatpush.bf16.xpose.msra.mxu0 %v1960
      %1985 = vmatmul.bf16.gmra.mxu0 %v1942
      %v1986 = vpop.f32.mrf.mxu0
      %v1987 = vadd.f32 %v938, %v1986
      %v1988 = vpop.f32.mrf.mxu0
      %v1989 = vadd.f32 %v938, %v1988
      %1990 = vmatmul.bf16.gmra.mxu0 %v1945
      %v1991 = vpop.f32.mrf.mxu0
      %v1992 = vadd.f32 %v938, %v1991
      %v1993 = vpop.f32.mrf.mxu0
      %v1994 = vadd.f32 %v938, %v1993
      %1995 = vmatmul.bf16.gmra.mxu0 %v1948
      %v1996 = vpop.f32.mrf.mxu0
      %v1997 = vadd.f32 %v938, %v1996
      %v1998 = vpop.f32.mrf.mxu0
      %v1999 = vadd.f32 %v938, %v1998
      %2000 = vmatmul.bf16.gmra.mxu0 %v1951
      %v2001 = vpop.f32.mrf.mxu0
      %v2002 = vadd.f32 %v938, %v2001
      %v2003 = vpop.f32.mrf.mxu0
      %v2004 = vadd.f32 %v938, %v2003
      %2005 = vmatmul.bf16.gmra.mxu0 %v1954
      %v2006 = vpop.f32.mrf.mxu0
      %v2007 = vadd.f32 %v938, %v2006
      %v2008 = vpop.f32.mrf.mxu0
      %v2009 = vadd.f32 %v938, %v2008
      %2010 = vmatmul.bf16.gmra.mxu0 %v1957
      %v2011 = vpop.f32.mrf.mxu0
      %v2012 = vadd.f32 %v938, %v2011
      %v2013 = vpop.f32.mrf.mxu0
      %2014 = vdwg.mxu0
      %v2015 = vsel %vm1411, %v1987, -inf
      %2016 = vmax.xlane.f32.xlu0 %v2015
      %v2017 = vpop.xlane.xlu0 %2016
      %v2018 = vsel %vm1411, %v1989, -inf
      %2019 = vmax.xlane.f32.xlu0 %v2018
      %v2020 = vpop.xlane.xlu0 %2019
      %v2021 = vsel %vm1411, %v1992, -inf
      %2022 = vmax.xlane.f32.xlu0 %v2021
      %v2023 = vpop.xlane.xlu0 %2022
      %v2024 = vsel %vm1411, %v1994, -inf
      %2025 = vmax.xlane.f32.xlu0 %v2024
      %v2026 = vpop.xlane.xlu0 %2025
      %v2027 = vsel %vm1411, %v1997, -inf
      %2028 = vmax.xlane.f32.xlu0 %v2027
      %v2029 = vpop.xlane.xlu0 %2028
      %v2030 = vsel %vm1411, %v1999, -inf
      %2031 = vmax.xlane.f32.xlu0 %v2030
      %v2032 = vpop.xlane.xlu0 %2031
      %v2033 = vsel %vm1411, %v2002, -inf
      %2034 = vmax.xlane.f32.xlu0 %v2033
      %v2035 = vpop.xlane.xlu0 %2034
      %v2036 = vsel %vm1411, %v2004, -inf
      %2037 = vmax.xlane.f32.xlu0 %v2036
      %v2038 = vpop.xlane.xlu0 %2037
      %v2039 = vsel %vm1411, %v2007, -inf
      %2040 = vmax.xlane.f32.xlu0 %v2039
      %v2041 = vpop.xlane.xlu0 %2040
      %v2042 = vsel %vm1411, %v2009, -inf
      %2043 = vmax.xlane.f32.xlu0 %v2042
      %v2044 = vpop.xlane.xlu0 %2043
      %v2045 = vsel %vm1411, %v2012, -inf
      %2046 = vmax.xlane.f32.xlu0 %v2045
      %v2047 = vpop.xlane.xlu0 %2046
      %v2048 = vsub.f32 %v1987, %v2017
      %v2049 = vsub.f32 %v1989, %v2020
      %v2050 = vsub.f32 %v1992, %v2023
      %v2051 = vsub.f32 %v1994, %v2026
      %v2052 = vsub.f32 %v1997, %v2029
      %v2053 = vsub.f32 %v1999, %v2032
      %v2054 = vsub.f32 %v2002, %v2035
      %v2055 = vsub.f32 %v2004, %v2038
      %v2056 = vsub.f32 %v2007, %v2041
      %v2057 = vsub.f32 %v2009, %v2044
      %v2058 = vsub.f32 %v2012, %v2047
      %v2059 = vmul.f32 %v2048, 1.442695
      %v2060 = vpow.pop %v2059
      %v2061 = vmul.f32 %v2049, 1.442695
      %v2062 = vpow.pop %v2061
      %v2063 = vmul.f32 %v2050, 1.442695
      %v2064 = vpow.pop %v2063
      %v2065 = vmul.f32 %v2051, 1.442695
      %v2066 = vpow.pop %v2065
      %v2067 = vmul.f32 %v2052, 1.442695
      %v2068 = vpow.pop %v2067
      %v2069 = vmul.f32 %v2053, 1.442695
      %v2070 = vpow.pop %v2069
      %v2071 = vmul.f32 %v2054, 1.442695
      %v2072 = vpow.pop %v2071
      %v2073 = vmul.f32 %v2055, 1.442695
      %v2074 = vpow.pop %v2073
      %v2075 = vmul.f32 %v2056, 1.442695
      %v2076 = vpow.pop %v2075
      %v2077 = vmul.f32 %v2057, 1.442695
      %v2078 = vpow.pop %v2077
      %v2079 = vmul.f32 %v2058, 1.442695
      %v2080 = vpow.pop %v2079
      %v2081 = vsel %vm1411, %v2060, 0.0
      %2082 = vadd.xlane.f32.xlu0 %v2081
      %v2083 = vpop.xlane.xlu0 %2082
      %v2084 = vsel %vm1411, %v2062, 0.0
      %2085 = vadd.xlane.f32.xlu0 %v2084
      %v2086 = vpop.xlane.xlu0 %2085
      %v2087 = vsel %vm1411, %v2064, 0.0
      %2088 = vadd.xlane.f32.xlu0 %v2087
      %v2089 = vpop.xlane.xlu0 %2088
      %v2090 = vsel %vm1411, %v2066, 0.0
      %2091 = vadd.xlane.f32.xlu0 %v2090
      %v2092 = vpop.xlane.xlu0 %2091
      %v2093 = vsel %vm1411, %v2068, 0.0
      %2094 = vadd.xlane.f32.xlu0 %v2093
      %v2095 = vpop.xlane.xlu0 %2094
      %v2096 = vsel %vm1411, %v2070, 0.0
      %2097 = vadd.xlane.f32.xlu0 %v2096
      %v2098 = vpop.xlane.xlu0 %2097
      %v2099 = vsel %vm1411, %v2072, 0.0
      %2100 = vadd.xlane.f32.xlu0 %v2099
      %v2101 = vpop.xlane.xlu0 %2100
      %v2102 = vsel %vm1411, %v2074, 0.0
      %2103 = vadd.xlane.f32.xlu0 %v2102
      %v2104 = vpop.xlane.xlu0 %2103
      %v2105 = vsel %vm1411, %v2076, 0.0
      %2106 = vadd.xlane.f32.xlu0 %v2105
      %v2107 = vpop.xlane.xlu0 %2106
      %v2108 = vsel %vm1411, %v2078, 0.0
      %2109 = vadd.xlane.f32.xlu0 %v2108
      %v2110 = vpop.xlane.xlu0 %2109
      %v2111 = vsel %vm1411, %v2080, 0.0
      %2112 = vadd.xlane.f32.xlu0 %v2111
      %v2113 = vpop.xlane.xlu0 %2112
      %v2114 = vrcp.pop %v2083
      %v2115 = vrcp.pop %v2086
      %v2116 = vrcp.pop %v2089
      %v2117 = vrcp.pop %v2092
      %v2118 = vrcp.pop %v2095
      %v2119 = vrcp.pop %v2098
      %v2120 = vrcp.pop %v2101
      %v2121 = vrcp.pop %v2104
      %v2122 = vrcp.pop %v2107
      %v2123 = vrcp.pop %v2110
      %v2124 = vrcp.pop %v2113
      %v2125 = vmul.f32 %v2060, %v2114
      %v2126 = vmul.f32 %v2062, %v2115
      %v2127 = vmul.f32 %v2064, %v2116
      %v2128 = vmul.f32 %v2066, %v2117
      %v2129 = vmul.f32 %v2068, %v2118
      %v2130 = vmul.f32 %v2070, %v2119
      %v2131 = vmul.f32 %v2072, %v2120
      %v2132 = vmul.f32 %v2074, %v2121
      %v2133 = vmul.f32 %v2076, %v2122
      %v2134 = vmul.f32 %v2078, %v2123
      %v2135 = vmul.f32 %v2080, %v2124
      %v2136 = vpack.c.bf16 %v2126, %v2125
      %v2137 = vpack.c.bf16 %v2128, %v2127
      %v2138 = vpack.c.bf16 %v2130, %v2129
      %v2139 = vpack.c.bf16 %v2132, %v2131
      %v2140 = vpack.c.bf16 %v2134, %v2133
      %v2141 = vpack.c.bf16 %v2135, %v2135
      %2142 = vrot.lane.b32.xlu0 %v1312, 48
      %v2143 = vpop.permute.xlu0 %2142
      %2144 = vrot.lane.b32.xlu0 %v1313, 48
      %v2145 = vpop.permute.xlu0 %2144
      %2146 = vrot.lane.b32.xlu0 %v1314, 48
      %v2147 = vpop.permute.xlu0 %2146
      %2148 = vrot.lane.b32.xlu0 %v1315, 48
      %v2149 = vpop.permute.xlu0 %2148
      %2150 = vrot.lane.b32.xlu0 %v1316, 48
      %v2151 = vpop.permute.xlu0 %2150
      %2152 = vrot.lane.b32.xlu0 %v1317, 48
      %v2153 = vpop.permute.xlu0 %2152
      %v2160 = vsel %vm1411, %v2136, 0
      %v2163 = vsel %vm1411, %v2137, 0
      %v2166 = vsel %vm1411, %v2138, 0
      %v2169 = vsel %vm1411, %v2139, 0
      %v2172 = vsel %vm1411, %v2140, 0
      %v2175 = vsel %vm1411, %v2141, 0
      %v2178 = vsel %vm1574, %v2153, 0
      %2180 = vmatpush.bf16.msra.mxu0 0
      %2181 = vmatpush.bf16.msra.mxu0 0
      %2182 = vmatpush.bf16.msra.mxu0 %v2178
      %2183 = vmatpush.bf16.msra.mxu0 %v2151
      %2184 = vmatpush.bf16.msra.mxu0 %v2149
      %2185 = vmatpush.bf16.msra.mxu0 %v2147
      %2186 = vmatpush.bf16.msra.mxu0 %v2145
      %2187 = vmatpush.bf16.msra.mxu0 %v2143
      %2188 = vmatmul.bf16.gmra.mxu0 %v2160
      %v2189 = vpop.f32.mrf.mxu0
      %v2190 = vadd.f32 0.0, %v2189
      %v2191 = vpop.f32.mrf.mxu0
      %v2192 = vadd.f32 0.0, %v2191
      %2193 = vmatmul.bf16.gmra.mxu0 %v2163
      %v2194 = vpop.f32.mrf.mxu0
      %v2195 = vadd.f32 0.0, %v2194
      %v2196 = vpop.f32.mrf.mxu0
      %v2197 = vadd.f32 0.0, %v2196
      %2198 = vmatmul.bf16.gmra.mxu0 %v2166
      %v2199 = vpop.f32.mrf.mxu0
      %v2200 = vadd.f32 0.0, %v2199
      %v2201 = vpop.f32.mrf.mxu0
      %v2202 = vadd.f32 0.0, %v2201
      %2203 = vmatmul.bf16.gmra.mxu0 %v2169
      %v2204 = vpop.f32.mrf.mxu0
      %v2205 = vadd.f32 0.0, %v2204
      %v2206 = vpop.f32.mrf.mxu0
      %v2207 = vadd.f32 0.0, %v2206
      %2208 = vmatmul.bf16.gmra.mxu0 %v2172
      %v2209 = vpop.f32.mrf.mxu0
      %v2210 = vadd.f32 0.0, %v2209
      %v2211 = vpop.f32.mrf.mxu0
      %v2212 = vadd.f32 0.0, %v2211
      %2213 = vmatmul.bf16.gmra.mxu0 %v2175
      %v2214 = vpop.f32.mrf.mxu0
      %v2215 = vadd.f32 0.0, %v2214
      %v2216 = vpop.f32.mrf.mxu0
      %2217 = vdwg.mxu0
      %2218 = vrot.lane.b32.xlu0 %v1312, 104
      %v2219 = vpop.permute.xlu0 %2218
      %2220 = vrot.lane.b32.xlu0 %v1313, 104
      %v2221 = vpop.permute.xlu0 %2220
      %2222 = vrot.lane.b32.xlu0 %v1314, 104
      %v2223 = vpop.permute.xlu0 %2222
      %2224 = vrot.lane.b32.xlu0 %v1315, 104
      %v2225 = vpop.permute.xlu0 %2224
      %2226 = vrot.lane.b32.xlu0 %v1316, 104
      %v2227 = vpop.permute.xlu0 %2226
      %2228 = vrot.lane.b32.xlu0 %v1317, 104
      %v2229 = vpop.permute.xlu0 %2228
      %2230 = vrot.lane.b32.xlu0 %v1312, 72
      %v2231 = vpop.permute.xlu0 %2230
      %2232 = vrot.lane.b32.xlu0 %v1313, 72
      %v2233 = vpop.permute.xlu0 %2232
      %2234 = vrot.lane.b32.xlu0 %v1314, 72
      %v2235 = vpop.permute.xlu0 %2234
      %2236 = vrot.lane.b32.xlu0 %v1315, 72
      %v2237 = vpop.permute.xlu0 %2236
      %2238 = vrot.lane.b32.xlu0 %v1316, 72
      %v2239 = vpop.permute.xlu0 %2238
      %2240 = vrot.lane.b32.xlu0 %v1317, 72
      %v2241 = vpop.permute.xlu0 %2240
      %v2243 = vsel %vm1336, %v2219, 0
      %v2246 = vsel %vm1336, %v2221, 0
      %v2249 = vsel %vm1336, %v2223, 0
      %v2252 = vsel %vm1336, %v2225, 0
      %v2255 = vsel %vm1336, %v2227, 0
      %v2258 = vsel %vm1336, %v2229, 0
      %v2261 = vsel %vm1336, %v2231, 0
      %v2264 = vsel %vm1336, %v2233, 0
      %v2267 = vsel %vm1336, %v2235, 0
      %v2270 = vsel %vm1336, %v2237, 0
      %v2273 = vsel %vm1336, %v2239, 0
      %v2276 = vsel %vm1336, %v2241, 0
      %2278 = vmatpush.bf16.xpose.msra.mxu0 0
      %2279 = vmatpush.bf16.xpose.msra.mxu0 0
      %2280 = vmatpush.bf16.xpose.msra.mxu0 %v2276
      %2281 = vmatpush.bf16.xpose.msra.mxu0 %v2273
      %2282 = vmatpush.bf16.xpose.msra.mxu0 %v2270
      %2283 = vmatpush.bf16.xpose.msra.mxu0 %v2267
      %2284 = vmatpush.bf16.xpose.msra.mxu0 %v2264
      %2285 = vmatpush.bf16.xpose.msra.mxu0 %v2261
      %2286 = vmatmul.bf16.gmra.mxu0 %v2243
      %v2287 = vpop.f32.mrf.mxu0
      %v2288 = vadd.f32 %v938, %v2287
      %v2289 = vpop.f32.mrf.mxu0
      %v2290 = vadd.f32 %v938, %v2289
      %2291 = vmatmul.bf16.gmra.mxu0 %v2246
      %v2292 = vpop.f32.mrf.mxu0
      %v2293 = vadd.f32 %v938, %v2292
      %v2294 = vpop.f32.mrf.mxu0
      %v2295 = vadd.f32 %v938, %v2294
      %2296 = vmatmul.bf16.gmra.mxu0 %v2249
      %v2297 = vpop.f32.mrf.mxu0
      %v2298 = vadd.f32 %v938, %v2297
      %v2299 = vpop.f32.mrf.mxu0
      %v2300 = vadd.f32 %v938, %v2299
      %2301 = vmatmul.bf16.gmra.mxu0 %v2252
      %v2302 = vpop.f32.mrf.mxu0
      %v2303 = vadd.f32 %v938, %v2302
      %v2304 = vpop.f32.mrf.mxu0
      %v2305 = vadd.f32 %v938, %v2304
      %2306 = vmatmul.bf16.gmra.mxu0 %v2255
      %v2307 = vpop.f32.mrf.mxu0
      %v2308 = vadd.f32 %v938, %v2307
      %v2309 = vpop.f32.mrf.mxu0
      %v2310 = vadd.f32 %v938, %v2309
      %2311 = vmatmul.bf16.gmra.mxu0 %v2258
      %v2312 = vpop.f32.mrf.mxu0
      %v2313 = vadd.f32 %v938, %v2312
      %v2314 = vpop.f32.mrf.mxu0
      %2315 = vdwg.mxu0
      %v2316 = vsel %vm1411, %v2288, -inf
      %2317 = vmax.xlane.f32.xlu0 %v2316
      %v2318 = vpop.xlane.xlu0 %2317
      %v2319 = vsel %vm1411, %v2290, -inf
      %2320 = vmax.xlane.f32.xlu0 %v2319
      %v2321 = vpop.xlane.xlu0 %2320
      %v2322 = vsel %vm1411, %v2293, -inf
      %2323 = vmax.xlane.f32.xlu0 %v2322
      %v2324 = vpop.xlane.xlu0 %2323
      %v2325 = vsel %vm1411, %v2295, -inf
      %2326 = vmax.xlane.f32.xlu0 %v2325
      %v2327 = vpop.xlane.xlu0 %2326
      %v2328 = vsel %vm1411, %v2298, -inf
      %2329 = vmax.xlane.f32.xlu0 %v2328
      %v2330 = vpop.xlane.xlu0 %2329
      %v2331 = vsel %vm1411, %v2300, -inf
      %2332 = vmax.xlane.f32.xlu0 %v2331
      %v2333 = vpop.xlane.xlu0 %2332
      %v2334 = vsel %vm1411, %v2303, -inf
      %2335 = vmax.xlane.f32.xlu0 %v2334
      %v2336 = vpop.xlane.xlu0 %2335
      %v2337 = vsel %vm1411, %v2305, -inf
      %2338 = vmax.xlane.f32.xlu0 %v2337
      %v2339 = vpop.xlane.xlu0 %2338
      %v2340 = vsel %vm1411, %v2308, -inf
      %2341 = vmax.xlane.f32.xlu0 %v2340
      %v2342 = vpop.xlane.xlu0 %2341
      %v2343 = vsel %vm1411, %v2310, -inf
      %2344 = vmax.xlane.f32.xlu0 %v2343
      %v2345 = vpop.xlane.xlu0 %2344
      %v2346 = vsel %vm1411, %v2313, -inf
      %2347 = vmax.xlane.f32.xlu0 %v2346
      %v2348 = vpop.xlane.xlu0 %2347
      %v2349 = vsub.f32 %v2288, %v2318
      %v2350 = vsub.f32 %v2290, %v2321
      %v2351 = vsub.f32 %v2293, %v2324
      %v2352 = vsub.f32 %v2295, %v2327
      %v2353 = vsub.f32 %v2298, %v2330
      %v2354 = vsub.f32 %v2300, %v2333
      %v2355 = vsub.f32 %v2303, %v2336
      %v2356 = vsub.f32 %v2305, %v2339
      %v2357 = vsub.f32 %v2308, %v2342
      %v2358 = vsub.f32 %v2310, %v2345
      %v2359 = vsub.f32 %v2313, %v2348
      %v2360 = vmul.f32 %v2349, 1.442695
      %v2361 = vpow.pop %v2360
      %v2362 = vmul.f32 %v2350, 1.442695
      %v2363 = vpow.pop %v2362
      %v2364 = vmul.f32 %v2351, 1.442695
      %v2365 = vpow.pop %v2364
      %v2366 = vmul.f32 %v2352, 1.442695
      %v2367 = vpow.pop %v2366
      %v2368 = vmul.f32 %v2353, 1.442695
      %v2369 = vpow.pop %v2368
      %v2370 = vmul.f32 %v2354, 1.442695
      %v2371 = vpow.pop %v2370
      %v2372 = vmul.f32 %v2355, 1.442695
      %v2373 = vpow.pop %v2372
      %v2374 = vmul.f32 %v2356, 1.442695
      %v2375 = vpow.pop %v2374
      %v2376 = vmul.f32 %v2357, 1.442695
      %v2377 = vpow.pop %v2376
      %v2378 = vmul.f32 %v2358, 1.442695
      %v2379 = vpow.pop %v2378
      %v2380 = vmul.f32 %v2359, 1.442695
      %v2381 = vpow.pop %v2380
      %v2382 = vsel %vm1411, %v2361, 0.0
      %2383 = vadd.xlane.f32.xlu0 %v2382
      %v2384 = vpop.xlane.xlu0 %2383
      %v2385 = vsel %vm1411, %v2363, 0.0
      %2386 = vadd.xlane.f32.xlu0 %v2385
      %v2387 = vpop.xlane.xlu0 %2386
      %v2388 = vsel %vm1411, %v2365, 0.0
      %2389 = vadd.xlane.f32.xlu0 %v2388
      %v2390 = vpop.xlane.xlu0 %2389
      %v2391 = vsel %vm1411, %v2367, 0.0
      %2392 = vadd.xlane.f32.xlu0 %v2391
      %v2393 = vpop.xlane.xlu0 %2392
      %v2394 = vsel %vm1411, %v2369, 0.0
      %2395 = vadd.xlane.f32.xlu0 %v2394
      %v2396 = vpop.xlane.xlu0 %2395
      %v2397 = vsel %vm1411, %v2371, 0.0
      %2398 = vadd.xlane.f32.xlu0 %v2397
      %v2399 = vpop.xlane.xlu0 %2398
      %v2400 = vsel %vm1411, %v2373, 0.0
      %2401 = vadd.xlane.f32.xlu0 %v2400
      %v2402 = vpop.xlane.xlu0 %2401
      %v2403 = vsel %vm1411, %v2375, 0.0
      %2404 = vadd.xlane.f32.xlu0 %v2403
      %v2405 = vpop.xlane.xlu0 %2404
      %v2406 = vsel %vm1411, %v2377, 0.0
      %2407 = vadd.xlane.f32.xlu0 %v2406
      %v2408 = vpop.xlane.xlu0 %2407
      %v2409 = vsel %vm1411, %v2379, 0.0
      %2410 = vadd.xlane.f32.xlu0 %v2409
      %v2411 = vpop.xlane.xlu0 %2410
      %v2412 = vsel %vm1411, %v2381, 0.0
      %2413 = vadd.xlane.f32.xlu0 %v2412
      %v2414 = vpop.xlane.xlu0 %2413
      %v2415 = vrcp.pop %v2384
      %v2416 = vrcp.pop %v2387
      %v2417 = vrcp.pop %v2390
      %v2418 = vrcp.pop %v2393
      %v2419 = vrcp.pop %v2396
      %v2420 = vrcp.pop %v2399
      %v2421 = vrcp.pop %v2402
      %v2422 = vrcp.pop %v2405
      %v2423 = vrcp.pop %v2408
      %v2424 = vrcp.pop %v2411
      %v2425 = vrcp.pop %v2414
      %v2426 = vmul.f32 %v2361, %v2415
      %v2427 = vmul.f32 %v2363, %v2416
      %v2428 = vmul.f32 %v2365, %v2417
      %v2429 = vmul.f32 %v2367, %v2418
      %v2430 = vmul.f32 %v2369, %v2419
      %v2431 = vmul.f32 %v2371, %v2420
      %v2432 = vmul.f32 %v2373, %v2421
      %v2433 = vmul.f32 %v2375, %v2422
      %v2434 = vmul.f32 %v2377, %v2423
      %v2435 = vmul.f32 %v2379, %v2424
      %v2436 = vmul.f32 %v2381, %v2425
      %v2437 = vpack.c.bf16 %v2427, %v2426
      %v2438 = vpack.c.bf16 %v2429, %v2428
      %v2439 = vpack.c.bf16 %v2431, %v2430
      %v2440 = vpack.c.bf16 %v2433, %v2432
      %v2441 = vpack.c.bf16 %v2435, %v2434
      %v2442 = vpack.c.bf16 %v2436, %v2436
      %2443 = vrot.lane.b32.xlu0 %v1312, 40
      %v2444 = vpop.permute.xlu0 %2443
      %2445 = vrot.lane.b32.xlu0 %v1313, 40
      %v2446 = vpop.permute.xlu0 %2445
      %2447 = vrot.lane.b32.xlu0 %v1314, 40
      %v2448 = vpop.permute.xlu0 %2447
      %2449 = vrot.lane.b32.xlu0 %v1315, 40
      %v2450 = vpop.permute.xlu0 %2449
      %2451 = vrot.lane.b32.xlu0 %v1316, 40
      %v2452 = vpop.permute.xlu0 %2451
      %2453 = vrot.lane.b32.xlu0 %v1317, 40
      %v2454 = vpop.permute.xlu0 %2453
      %v2461 = vsel %vm1411, %v2437, 0
      %v2464 = vsel %vm1411, %v2438, 0
      %v2467 = vsel %vm1411, %v2439, 0
      %v2470 = vsel %vm1411, %v2440, 0
      %v2473 = vsel %vm1411, %v2441, 0
      %v2476 = vsel %vm1411, %v2442, 0
      %v2479 = vsel %vm1574, %v2454, 0
      %2481 = vmatpush.bf16.msra.mxu0 0
      %2482 = vmatpush.bf16.msra.mxu0 0
      %2483 = vmatpush.bf16.msra.mxu0 %v2479
      %2484 = vmatpush.bf16.msra.mxu0 %v2452
      %2485 = vmatpush.bf16.msra.mxu0 %v2450
      %2486 = vmatpush.bf16.msra.mxu0 %v2448
      %2487 = vmatpush.bf16.msra.mxu0 %v2446
      %2488 = vmatpush.bf16.msra.mxu0 %v2444
      %2489 = vmatmul.bf16.gmra.mxu0 %v2461
      %v2490 = vpop.f32.mrf.mxu0
      %v2491 = vadd.f32 0.0, %v2490
      %v2492 = vpop.f32.mrf.mxu0
      %v2493 = vadd.f32 0.0, %v2492
      %2494 = vmatmul.bf16.gmra.mxu0 %v2464
      %v2495 = vpop.f32.mrf.mxu0
      %v2496 = vadd.f32 0.0, %v2495
      %v2497 = vpop.f32.mrf.mxu0
      %v2498 = vadd.f32 0.0, %v2497
      %2499 = vmatmul.bf16.gmra.mxu0 %v2467
      %v2500 = vpop.f32.mrf.mxu0
      %v2501 = vadd.f32 0.0, %v2500
      %v2502 = vpop.f32.mrf.mxu0
      %v2503 = vadd.f32 0.0, %v2502
      %2504 = vmatmul.bf16.gmra.mxu0 %v2470
      %v2505 = vpop.f32.mrf.mxu0
      %v2506 = vadd.f32 0.0, %v2505
      %v2507 = vpop.f32.mrf.mxu0
      %v2508 = vadd.f32 0.0, %v2507
      %2509 = vmatmul.bf16.gmra.mxu0 %v2473
      %v2510 = vpop.f32.mrf.mxu0
      %v2511 = vadd.f32 0.0, %v2510
      %v2512 = vpop.f32.mrf.mxu0
      %v2513 = vadd.f32 0.0, %v2512
      %2514 = vmatmul.bf16.gmra.mxu0 %v2476
      %v2515 = vpop.f32.mrf.mxu0
      %v2516 = vadd.f32 0.0, %v2515
      %v2517 = vpop.f32.mrf.mxu0
      %2518 = vdwg.mxu0
      %2530 = vrot.lane.b32.xlu0 %v1889, 8
      %v2531 = vpop.permute.xlu0 %2530
      %2532 = vrot.lane.b32.xlu0 %v1891, 8
      %v2533 = vpop.permute.xlu0 %2532
      %2534 = vrot.lane.b32.xlu0 %v1894, 8
      %v2535 = vpop.permute.xlu0 %2534
      %2536 = vrot.lane.b32.xlu0 %v1896, 8
      %v2537 = vpop.permute.xlu0 %2536
      %2538 = vrot.lane.b32.xlu0 %v1899, 8
      %v2539 = vpop.permute.xlu0 %2538
      %2540 = vrot.lane.b32.xlu0 %v1901, 8
      %v2541 = vpop.permute.xlu0 %2540
      %2542 = vrot.lane.b32.xlu0 %v1904, 8
      %v2543 = vpop.permute.xlu0 %2542
      %2544 = vrot.lane.b32.xlu0 %v1906, 8
      %v2545 = vpop.permute.xlu0 %2544
      %2546 = vrot.lane.b32.xlu0 %v1909, 8
      %v2547 = vpop.permute.xlu0 %2546
      %2548 = vrot.lane.b32.xlu0 %v1911, 8
      %v2549 = vpop.permute.xlu0 %2548
      %2550 = vrot.lane.b32.xlu0 %v1914, 8
      %v2551 = vpop.permute.xlu0 %2550
      %2574 = vrot.lane.b32.xlu0 %v2190, 16
      %v2575 = vpop.permute.xlu0 %2574
      %2576 = vrot.lane.b32.xlu0 %v2192, 16
      %v2577 = vpop.permute.xlu0 %2576
      %2578 = vrot.lane.b32.xlu0 %v2195, 16
      %v2579 = vpop.permute.xlu0 %2578
      %2580 = vrot.lane.b32.xlu0 %v2197, 16
      %v2581 = vpop.permute.xlu0 %2580
      %2582 = vrot.lane.b32.xlu0 %v2200, 16
      %v2583 = vpop.permute.xlu0 %2582
      %2584 = vrot.lane.b32.xlu0 %v2202, 16
      %v2585 = vpop.permute.xlu0 %2584
      %2586 = vrot.lane.b32.xlu0 %v2205, 16
      %v2587 = vpop.permute.xlu0 %2586
      %2588 = vrot.lane.b32.xlu0 %v2207, 16
      %v2589 = vpop.permute.xlu0 %2588
      %2590 = vrot.lane.b32.xlu0 %v2210, 16
      %v2591 = vpop.permute.xlu0 %2590
      %2592 = vrot.lane.b32.xlu0 %v2212, 16
      %v2593 = vpop.permute.xlu0 %2592
      %2594 = vrot.lane.b32.xlu0 %v2215, 16
      %v2595 = vpop.permute.xlu0 %2594
      %2618 = vrot.lane.b32.xlu0 %v2491, 24
      %v2619 = vpop.permute.xlu0 %2618
      %2620 = vrot.lane.b32.xlu0 %v2493, 24
      %v2621 = vpop.permute.xlu0 %2620
      %2622 = vrot.lane.b32.xlu0 %v2496, 24
      %v2623 = vpop.permute.xlu0 %2622
      %2624 = vrot.lane.b32.xlu0 %v2498, 24
      %v2625 = vpop.permute.xlu0 %2624
      %2626 = vrot.lane.b32.xlu0 %v2501, 24
      %v2627 = vpop.permute.xlu0 %2626
      %2628 = vrot.lane.b32.xlu0 %v2503, 24
      %v2629 = vpop.permute.xlu0 %2628
      %2630 = vrot.lane.b32.xlu0 %v2506, 24
      %v2631 = vpop.permute.xlu0 %2630
      %2632 = vrot.lane.b32.xlu0 %v2508, 24
      %v2633 = vpop.permute.xlu0 %2632
      %2634 = vrot.lane.b32.xlu0 %v2511, 24
      %v2635 = vpop.permute.xlu0 %2634
      %2636 = vrot.lane.b32.xlu0 %v2513, 24
      %v2637 = vpop.permute.xlu0 %2636
      %2638 = vrot.lane.b32.xlu0 %v2516, 24
      %v2639 = vpop.permute.xlu0 %2638
      %v2651 = vsel %vm1336, %v1588, %v2531
      %v2652 = vsel %vm1336, %v1590, %v2533
      %v2653 = vsel %vm1336, %v1593, %v2535
      %v2654 = vsel %vm1336, %v1595, %v2537
      %v2655 = vsel %vm1336, %v1598, %v2539
      %v2656 = vsel %vm1336, %v1600, %v2541
      %v2657 = vsel %vm1336, %v1603, %v2543
      %v2658 = vsel %vm1336, %v1605, %v2545
      %v2659 = vsel %vm1336, %v1608, %v2547
      %v2660 = vsel %vm1336, %v1610, %v2549
      %v2661 = vsel %vm1336, %v1613, %v2551
      %vm2662 = vcmask 130048
      %v2663 = vsel %vm2662, %v2651, %v2575
      %v2664 = vsel %vm2662, %v2652, %v2577
      %v2665 = vsel %vm2662, %v2653, %v2579
      %v2666 = vsel %vm2662, %v2654, %v2581
      %v2667 = vsel %vm2662, %v2655, %v2583
      %v2668 = vsel %vm2662, %v2656, %v2585
      %v2669 = vsel %vm2662, %v2657, %v2587
      %v2670 = vsel %vm2662, %v2658, %v2589
      %v2671 = vsel %vm2662, %v2659, %v2591
      %v2672 = vsel %vm2662, %v2660, %v2593
      %v2673 = vsel %vm2662, %v2661, %v2595
      %vm2674 = vcmask 195584
      %v2675 = vsel %vm2674, %v2663, %v2619
      %v2676 = vsel %vm2674, %v2664, %v2621
      %v2677 = vsel %vm2674, %v2665, %v2623
      %v2678 = vsel %vm2674, %v2666, %v2625
      %v2679 = vsel %vm2674, %v2667, %v2627
      %v2680 = vsel %vm2674, %v2668, %v2629
      %v2681 = vsel %vm2674, %v2669, %v2631
      %v2682 = vsel %vm2674, %v2670, %v2633
      %v2683 = vsel %vm2674, %v2671, %v2635
      %v2684 = vsel %vm2674, %v2672, %v2637
      %v2685 = vsel %vm2674, %v2673, %v2639
      %v2686 = vpack.c.bf16 %v2676, %v2675
      %v2687 = vpack.c.bf16 %v2678, %v2677
      %v2688 = vpack.c.bf16 %v2680, %v2679
      %v2689 = vpack.c.bf16 %v2682, %v2681
      %v2690 = vpack.c.bf16 %v2684, %v2683
      %v2691 = vpack.c.bf16 %v2685, %v2685
      %v2692 = vld [vmem:[%s770] sm:$0xf]
      %v2693 = vld [vmem:[%s770 + $0x4] sm:$0xf]
      %v2694 = vld [vmem:[%s770 + $0x8] sm:$0xf]
      %v2695 = vld [vmem:[%s770 + $0xc] sm:$0xf]
      %v2696 = vld [vmem:[%s773] sm:$0x1]
      %v2698 = vperm.slane %v2696, 0
      %v2704 = vunpack.c.l.b16 %v2692
      %v2705 = vunpack.c.l.b16 %v2693
      %v2706 = vunpack.c.l.b16 %v2694
      %v2707 = vunpack.c.l.b16 %v2695
      %v2708 = vpack.c.b16 %v2705, %v2704
      %v2709 = vpack.c.b16 %v2707, %v2706
      %v2713 = vsel %vm952, %v2686, 0
      %v2716 = vsel %vm952, %v2687, 0
      %v2719 = vsel %vm952, %v2688, 0
      %v2722 = vsel %vm952, %v2689, 0
      %v2725 = vsel %vm952, %v2690, 0
      %v2728 = vsel %vm952, %v2691, 0
      %2730 = vmatpush.bf16.msra.mxu0 0
      %2731 = vmatpush.bf16.msra.mxu0 0
      %2732 = vmatpush.bf16.msra.mxu0 0
      %2733 = vmatpush.bf16.msra.mxu0 0
      %2734 = vmatpush.bf16.msra.mxu0 0
      %2735 = vmatpush.bf16.msra.mxu0 0
      %2736 = vmatpush.bf16.msra.mxu0 %v2709
      %2737 = vmatpush.bf16.msra.mxu0 %v2708
      %2738 = vmatmul.bf16.gmra.mxu0 %v2713
      %v2739 = vpop.f32.mrf.mxu0
      %v2740 = vadd.f32 %v2698, %v2739
      %v2741 = vpop.f32.mrf.mxu0
      %v2742 = vadd.f32 %v2698, %v2741
      %2743 = vmatmul.bf16.gmra.mxu0 %v2716
      %v2744 = vpop.f32.mrf.mxu0
      %v2745 = vadd.f32 %v2698, %v2744
      %v2746 = vpop.f32.mrf.mxu0
      %v2747 = vadd.f32 %v2698, %v2746
      %2748 = vmatmul.bf16.gmra.mxu0 %v2719
      %v2749 = vpop.f32.mrf.mxu0
      %v2750 = vadd.f32 %v2698, %v2749
      %v2751 = vpop.f32.mrf.mxu0
      %v2752 = vadd.f32 %v2698, %v2751
      %2753 = vmatmul.bf16.gmra.mxu0 %v2722
      %v2754 = vpop.f32.mrf.mxu0
      %v2755 = vadd.f32 %v2698, %v2754
      %v2756 = vpop.f32.mrf.mxu0
      %v2757 = vadd.f32 %v2698, %v2756
      %2758 = vmatmul.bf16.gmra.mxu0 %v2725
      %v2759 = vpop.f32.mrf.mxu0
      %v2760 = vadd.f32 %v2698, %v2759
      %v2761 = vpop.f32.mrf.mxu0
      %v2762 = vadd.f32 %v2698, %v2761
      %2763 = vmatmul.bf16.gmra.mxu0 %v2728
      %v2764 = vpop.f32.mrf.mxu0
      %v2765 = vadd.f32 %v2698, %v2764
      %v2766 = vpop.f32.mrf.mxu0
      %2767 = vdwg.mxu0
      %v2768 = vadd.f32 %v939, %v2740
      %v2769 = vadd.f32 %v940, %v2742
      %v2770 = vadd.f32 %v941, %v2745
      %v2771 = vadd.f32 %v942, %v2747
      %v2772 = vadd.f32 %v943, %v2750
      %v2773 = vadd.f32 %v944, %v2752
      %v2774 = vadd.f32 %v945, %v2755
      %v2775 = vadd.f32 %v946, %v2757
      %v2776 = vadd.f32 %v947, %v2760
      %v2777 = vadd.f32 %v948, %v2762
      %v2778 = vadd.f32 %v949, %v2765
      %v2779 = vld [vmem:[%s782] sm:$0x1]
      %v2780 = vld [vmem:[%s785] sm:$0x1]
      %v2781 = vsel %vm952, %v2768, 0.0
      %2782 = vadd.xlane.f32.xlu0 %v2781
      %v2783 = vpop.xlane.xlu0 %2782
      %v2784 = vsel %vm952, %v2769, 0.0
      %2785 = vadd.xlane.f32.xlu0 %v2784
      %v2786 = vpop.xlane.xlu0 %2785
      %v2787 = vsel %vm952, %v2770, 0.0
      %2788 = vadd.xlane.f32.xlu0 %v2787
      %v2789 = vpop.xlane.xlu0 %2788
      %v2790 = vsel %vm952, %v2771, 0.0
      %2791 = vadd.xlane.f32.xlu0 %v2790
      %v2792 = vpop.xlane.xlu0 %2791
      %v2793 = vsel %vm952, %v2772, 0.0
      %2794 = vadd.xlane.f32.xlu0 %v2793
      %v2795 = vpop.xlane.xlu0 %2794
      %v2796 = vsel %vm952, %v2773, 0.0
      %2797 = vadd.xlane.f32.xlu0 %v2796
      %v2798 = vpop.xlane.xlu0 %2797
      %v2799 = vsel %vm952, %v2774, 0.0
      %2800 = vadd.xlane.f32.xlu0 %v2799
      %v2801 = vpop.xlane.xlu0 %2800
      %v2802 = vsel %vm952, %v2775, 0.0
      %2803 = vadd.xlane.f32.xlu0 %v2802
      %v2804 = vpop.xlane.xlu0 %2803
      %v2805 = vsel %vm952, %v2776, 0.0
      %2806 = vadd.xlane.f32.xlu0 %v2805
      %v2807 = vpop.xlane.xlu0 %2806
      %v2808 = vsel %vm952, %v2777, 0.0
      %2809 = vadd.xlane.f32.xlu0 %v2808
      %v2810 = vpop.xlane.xlu0 %2809
      %v2811 = vsel %vm952, %v2778, 0.0
      %2812 = vadd.xlane.f32.xlu0 %v2811
      %v2813 = vpop.xlane.xlu0 %2812
      %v2814 = vmul.f32 %v2783, %v992
      %v2815 = vmul.f32 %v2786, %v992
      %v2816 = vmul.f32 %v2789, %v992
      %v2817 = vmul.f32 %v2792, %v992
      %v2818 = vmul.f32 %v2795, %v992
      %v2819 = vmul.f32 %v2798, %v992
      %v2820 = vmul.f32 %v2801, %v992
      %v2821 = vmul.f32 %v2804, %v992
      %v2822 = vmul.f32 %v2807, %v992
      %v2823 = vmul.f32 %v2810, %v992
      %v2824 = vmul.f32 %v2813, %v992
      %v2825 = vsub.f32 %v2768, %v2814
      %v2826 = vsub.f32 %v2769, %v2815
      %v2827 = vsub.f32 %v2770, %v2816
      %v2828 = vsub.f32 %v2771, %v2817
      %v2829 = vsub.f32 %v2772, %v2818
      %v2830 = vsub.f32 %v2773, %v2819
      %v2831 = vsub.f32 %v2774, %v2820
      %v2832 = vsub.f32 %v2775, %v2821
      %v2833 = vsub.f32 %v2776, %v2822
      %v2834 = vsub.f32 %v2777, %v2823
      %v2835 = vsub.f32 %v2778, %v2824
      %v2836 = vmul.f32 %v2825, %v2825
      %v2837 = vmul.f32 %v2826, %v2826
      %v2838 = vmul.f32 %v2827, %v2827
      %v2839 = vmul.f32 %v2828, %v2828
      %v2840 = vmul.f32 %v2829, %v2829
      %v2841 = vmul.f32 %v2830, %v2830
      %v2842 = vmul.f32 %v2831, %v2831
      %v2843 = vmul.f32 %v2832, %v2832
      %v2844 = vmul.f32 %v2833, %v2833
      %v2845 = vmul.f32 %v2834, %v2834
      %v2846 = vmul.f32 %v2835, %v2835
      %v2847 = vsel %vm952, %v2836, 0.0
      %2848 = vadd.xlane.f32.xlu0 %v2847
      %v2849 = vpop.xlane.xlu0 %2848
      %v2850 = vsel %vm952, %v2837, 0.0
      %2851 = vadd.xlane.f32.xlu0 %v2850
      %v2852 = vpop.xlane.xlu0 %2851
      %v2853 = vsel %vm952, %v2838, 0.0
      %2854 = vadd.xlane.f32.xlu0 %v2853
      %v2855 = vpop.xlane.xlu0 %2854
      %v2856 = vsel %vm952, %v2839, 0.0
      %2857 = vadd.xlane.f32.xlu0 %v2856
      %v2858 = vpop.xlane.xlu0 %2857
      %v2859 = vsel %vm952, %v2840, 0.0
      %2860 = vadd.xlane.f32.xlu0 %v2859
      %v2861 = vpop.xlane.xlu0 %2860
      %v2862 = vsel %vm952, %v2841, 0.0
      %2863 = vadd.xlane.f32.xlu0 %v2862
      %v2864 = vpop.xlane.xlu0 %2863
      %v2865 = vsel %vm952, %v2842, 0.0
      %2866 = vadd.xlane.f32.xlu0 %v2865
      %v2867 = vpop.xlane.xlu0 %2866
      %v2868 = vsel %vm952, %v2843, 0.0
      %2869 = vadd.xlane.f32.xlu0 %v2868
      %v2870 = vpop.xlane.xlu0 %2869
      %v2871 = vsel %vm952, %v2844, 0.0
      %2872 = vadd.xlane.f32.xlu0 %v2871
      %v2873 = vpop.xlane.xlu0 %2872
      %v2874 = vsel %vm952, %v2845, 0.0
      %2875 = vadd.xlane.f32.xlu0 %v2874
      %v2876 = vpop.xlane.xlu0 %2875
      %v2877 = vsel %vm952, %v2846, 0.0
      %2878 = vadd.xlane.f32.xlu0 %v2877
      %v2879 = vpop.xlane.xlu0 %2878
      %v2880 = vmul.f32 %v2849, %v992
      %v2881 = vmul.f32 %v2852, %v992
      %v2882 = vmul.f32 %v2855, %v992
      %v2883 = vmul.f32 %v2858, %v992
      %v2884 = vmul.f32 %v2861, %v992
      %v2885 = vmul.f32 %v2864, %v992
      %v2886 = vmul.f32 %v2867, %v992
      %v2887 = vmul.f32 %v2870, %v992
      %v2888 = vmul.f32 %v2873, %v992
      %v2889 = vmul.f32 %v2876, %v992
      %v2890 = vmul.f32 %v2879, %v992
      %v2891 = vadd.f32 %v2880, 1e-06
      %v2892 = vadd.f32 %v2881, 1e-06
      %v2893 = vadd.f32 %v2882, 1e-06
      %v2894 = vadd.f32 %v2883, 1e-06
      %v2895 = vadd.f32 %v2884, 1e-06
      %v2896 = vadd.f32 %v2885, 1e-06
      %v2897 = vadd.f32 %v2886, 1e-06
      %v2898 = vadd.f32 %v2887, 1e-06
      %v2899 = vadd.f32 %v2888, 1e-06
      %v2900 = vadd.f32 %v2889, 1e-06
      %v2901 = vadd.f32 %v2890, 1e-06
      %v2902 = vrsqrt.pop %v2891
      %v2903 = vmul.f32 %v2902, %v2891
      %v2904 = vmul.f32 %v2903, %v2902
      %v2905 = vmul.f32 0.5, %v2904
      %v2906 = vsub.f32 1.5, %v2905
      %v2907 = vmul.f32 %v2902, %v2906
      %vm2908 = vweird.f32 %v2891
      %vm2909 = vweird.f32 %v2902
      %vm2910 = vmor %vm2908, %vm2909
      %v2911 = vsel %vm2910, %v2902, %v2907
      %v2912 = vrsqrt.pop %v2892
      %v2913 = vmul.f32 %v2912, %v2892
      %v2914 = vmul.f32 %v2913, %v2912
      %v2915 = vmul.f32 0.5, %v2914
      %v2916 = vsub.f32 1.5, %v2915
      %v2917 = vmul.f32 %v2912, %v2916
      %vm2918 = vweird.f32 %v2892
      %vm2919 = vweird.f32 %v2912
      %vm2920 = vmor %vm2918, %vm2919
      %v2921 = vsel %vm2920, %v2912, %v2917
      %v2922 = vrsqrt.pop %v2893
      %v2923 = vmul.f32 %v2922, %v2893
      %v2924 = vmul.f32 %v2923, %v2922
      %v2925 = vmul.f32 0.5, %v2924
      %v2926 = vsub.f32 1.5, %v2925
      %v2927 = vmul.f32 %v2922, %v2926
      %vm2928 = vweird.f32 %v2893
      %vm2929 = vweird.f32 %v2922
      %vm2930 = vmor %vm2928, %vm2929
      %v2931 = vsel %vm2930, %v2922, %v2927
      %v2932 = vrsqrt.pop %v2894
      %v2933 = vmul.f32 %v2932, %v2894
      %v2934 = vmul.f32 %v2933, %v2932
      %v2935 = vmul.f32 0.5, %v2934
      %v2936 = vsub.f32 1.5, %v2935
      %v2937 = vmul.f32 %v2932, %v2936
      %vm2938 = vweird.f32 %v2894
      %vm2939 = vweird.f32 %v2932
      %vm2940 = vmor %vm2938, %vm2939
      %v2941 = vsel %vm2940, %v2932, %v2937
      %v2942 = vrsqrt.pop %v2895
      %v2943 = vmul.f32 %v2942, %v2895
      %v2944 = vmul.f32 %v2943, %v2942
      %v2945 = vmul.f32 0.5, %v2944
      %v2946 = vsub.f32 1.5, %v2945
      %v2947 = vmul.f32 %v2942, %v2946
      %vm2948 = vweird.f32 %v2895
      %vm2949 = vweird.f32 %v2942
      %vm2950 = vmor %vm2948, %vm2949
      %v2951 = vsel %vm2950, %v2942, %v2947
      %v2952 = vrsqrt.pop %v2896
      %v2953 = vmul.f32 %v2952, %v2896
      %v2954 = vmul.f32 %v2953, %v2952
      %v2955 = vmul.f32 0.5, %v2954
      %v2956 = vsub.f32 1.5, %v2955
      %v2957 = vmul.f32 %v2952, %v2956
      %vm2958 = vweird.f32 %v2896
      %vm2959 = vweird.f32 %v2952
      %vm2960 = vmor %vm2958, %vm2959
      %v2961 = vsel %vm2960, %v2952, %v2957
      %v2962 = vrsqrt.pop %v2897
      %v2963 = vmul.f32 %v2962, %v2897
      %v2964 = vmul.f32 %v2963, %v2962
      %v2965 = vmul.f32 0.5, %v2964
      %v2966 = vsub.f32 1.5, %v2965
      %v2967 = vmul.f32 %v2962, %v2966
      %vm2968 = vweird.f32 %v2897
      %vm2969 = vweird.f32 %v2962
      %vm2970 = vmor %vm2968, %vm2969
      %v2971 = vsel %vm2970, %v2962, %v2967
      %v2972 = vrsqrt.pop %v2898
      %v2973 = vmul.f32 %v2972, %v2898
      %v2974 = vmul.f32 %v2973, %v2972
      %v2975 = vmul.f32 0.5, %v2974
      %v2976 = vsub.f32 1.5, %v2975
      %v2977 = vmul.f32 %v2972, %v2976
      %vm2978 = vweird.f32 %v2898
      %vm2979 = vweird.f32 %v2972
      %vm2980 = vmor %vm2978, %vm2979
      %v2981 = vsel %vm2980, %v2972, %v2977
      %v2982 = vrsqrt.pop %v2899
      %v2983 = vmul.f32 %v2982, %v2899
      %v2984 = vmul.f32 %v2983, %v2982
      %v2985 = vmul.f32 0.5, %v2984
      %v2986 = vsub.f32 1.5, %v2985
      %v2987 = vmul.f32 %v2982, %v2986
      %vm2988 = vweird.f32 %v2899
      %vm2989 = vweird.f32 %v2982
      %vm2990 = vmor %vm2988, %vm2989
      %v2991 = vsel %vm2990, %v2982, %v2987
      %v2992 = vrsqrt.pop %v2900
      %v2993 = vmul.f32 %v2992, %v2900
      %v2994 = vmul.f32 %v2993, %v2992
      %v2995 = vmul.f32 0.5, %v2994
      %v2996 = vsub.f32 1.5, %v2995
      %v2997 = vmul.f32 %v2992, %v2996
      %vm2998 = vweird.f32 %v2900
      %vm2999 = vweird.f32 %v2992
      %vm3000 = vmor %vm2998, %vm2999
      %v3001 = vsel %vm3000, %v2992, %v2997
      %v3002 = vrsqrt.pop %v2901
      %v3003 = vmul.f32 %v3002, %v2901
      %v3004 = vmul.f32 %v3003, %v3002
      %v3005 = vmul.f32 0.5, %v3004
      %v3006 = vsub.f32 1.5, %v3005
      %v3007 = vmul.f32 %v3002, %v3006
      %vm3008 = vweird.f32 %v2901
      %vm3009 = vweird.f32 %v3002
      %vm3010 = vmor %vm3008, %vm3009
      %v3011 = vsel %vm3010, %v3002, %v3007
      %v3012 = vmul.f32 %v2825, %v2911
      %v3013 = vmul.f32 %v2826, %v2921
      %v3014 = vmul.f32 %v2827, %v2931
      %v3015 = vmul.f32 %v2828, %v2941
      %v3016 = vmul.f32 %v2829, %v2951
      %v3017 = vmul.f32 %v2830, %v2961
      %v3018 = vmul.f32 %v2831, %v2971
      %v3019 = vmul.f32 %v2832, %v2981
      %v3020 = vmul.f32 %v2833, %v2991
      %v3021 = vmul.f32 %v2834, %v3001
      %v3022 = vmul.f32 %v2835, %v3011
      %v3024 = vperm.slane %v2779, 0
      %v3026 = vmul.f32 %v3012, %v3024
      %v3027 = vmul.f32 %v3013, %v3024
      %v3028 = vmul.f32 %v3014, %v3024
      %v3029 = vmul.f32 %v3015, %v3024
      %v3030 = vmul.f32 %v3016, %v3024
      %v3031 = vmul.f32 %v3017, %v3024
      %v3032 = vmul.f32 %v3018, %v3024
      %v3033 = vmul.f32 %v3019, %v3024
      %v3034 = vmul.f32 %v3020, %v3024
      %v3035 = vmul.f32 %v3021, %v3024
      %v3036 = vmul.f32 %v3022, %v3024
      %v3038 = vperm.slane %v2780, 0
      %v3040 = vadd.f32 %v3026, %v3038
      %v3041 = vadd.f32 %v3027, %v3038
      %v3042 = vadd.f32 %v3028, %v3038
      %v3043 = vadd.f32 %v3029, %v3038
      %v3044 = vadd.f32 %v3030, %v3038
      %v3045 = vadd.f32 %v3031, %v3038
      %v3046 = vadd.f32 %v3032, %v3038
      %v3047 = vadd.f32 %v3033, %v3038
      %v3048 = vadd.f32 %v3034, %v3038
      %v3049 = vadd.f32 %v3035, %v3038
      %v3050 = vadd.f32 %v3036, %v3038
      %v3051 = vpack.c.bf16 %v3041, %v3040
      %v3052 = vpack.c.bf16 %v3043, %v3042
      %v3053 = vpack.c.bf16 %v3045, %v3044
      %v3054 = vpack.c.bf16 %v3047, %v3046
      %v3055 = vpack.c.bf16 %v3049, %v3048
      %v3056 = vpack.c.bf16 %v3050, %v3050
      %v3057 = vld [vmem:[%s790] sm:$0xf]
      %v3058 = vld [vmem:[%s790 + $0x4] sm:$0xf]
      %v3059 = vld [vmem:[%s790 + $0x8] sm:$0xf]
      %v3060 = vld [vmem:[%s790 + $0xc] sm:$0xf]
      %v3061 = vld [vmem:[%s793] sm:$0x1]
      %v3063 = vperm.slane %v3061, 0
      %v3069 = vunpack.c.l.b16 %v3057
      %v3070 = vunpack.c.l.b16 %v3058
      %v3071 = vunpack.c.l.b16 %v3059
      %v3072 = vunpack.c.l.b16 %v3060
      %v3073 = vpack.c.b16 %v3070, %v3069
      %v3074 = vpack.c.b16 %v3072, %v3071
      %v3078 = vsel %vm952, %v3051, 0
      %v3081 = vsel %vm952, %v3052, 0
      %v3084 = vsel %vm952, %v3053, 0
      %v3087 = vsel %vm952, %v3054, 0
      %v3090 = vsel %vm952, %v3055, 0
      %v3093 = vsel %vm952, %v3056, 0
      %3095 = vmatpush.bf16.msra.mxu0 0
      %3096 = vmatpush.bf16.msra.mxu0 0
      %3097 = vmatpush.bf16.msra.mxu0 0
      %3098 = vmatpush.bf16.msra.mxu0 0
      %3099 = vmatpush.bf16.msra.mxu0 0
      %3100 = vmatpush.bf16.msra.mxu0 0
      %3101 = vmatpush.bf16.msra.mxu0 %v3074
      %3102 = vmatpush.bf16.msra.mxu0 %v3073
      %3103 = vmatmul.bf16.gmra.mxu0 %v3078
      %v3104 = vpop.f32.mrf.mxu0
      %v3105 = vadd.f32 %v3063, %v3104
      %v3106 = vpop.f32.mrf.mxu0
      %v3107 = vadd.f32 %v3063, %v3106
      %3108 = vmatmul.bf16.gmra.mxu0 %v3081
      %v3109 = vpop.f32.mrf.mxu0
      %v3110 = vadd.f32 %v3063, %v3109
      %v3111 = vpop.f32.mrf.mxu0
      %v3112 = vadd.f32 %v3063, %v3111
      %3113 = vmatmul.bf16.gmra.mxu0 %v3084
      %v3114 = vpop.f32.mrf.mxu0
      %v3115 = vadd.f32 %v3063, %v3114
      %v3116 = vpop.f32.mrf.mxu0
      %v3117 = vadd.f32 %v3063, %v3116
      %3118 = vmatmul.bf16.gmra.mxu0 %v3087
      %v3119 = vpop.f32.mrf.mxu0
      %v3120 = vadd.f32 %v3063, %v3119
      %v3121 = vpop.f32.mrf.mxu0
      %v3122 = vadd.f32 %v3063, %v3121
      %3123 = vmatmul.bf16.gmra.mxu0 %v3090
      %v3124 = vpop.f32.mrf.mxu0
      %v3125 = vadd.f32 %v3063, %v3124
      %v3126 = vpop.f32.mrf.mxu0
      %v3127 = vadd.f32 %v3063, %v3126
      %3128 = vmatmul.bf16.gmra.mxu0 %v3093
      %v3129 = vpop.f32.mrf.mxu0
      %v3130 = vadd.f32 %v3063, %v3129
      %v3131 = vpop.f32.mrf.mxu0
      %3132 = vdwg.mxu0
      %v3133 = vmul.f32 %v3105, 0.5
      %v3134 = vmul.f32 %v3107, 0.5
      %v3135 = vmul.f32 %v3110, 0.5
      %v3136 = vmul.f32 %v3112, 0.5
      %v3137 = vmul.f32 %v3115, 0.5
      %v3138 = vmul.f32 %v3117, 0.5
      %v3139 = vmul.f32 %v3120, 0.5
      %v3140 = vmul.f32 %v3122, 0.5
      %v3141 = vmul.f32 %v3125, 0.5
      %v3142 = vmul.f32 %v3127, 0.5
      %v3143 = vmul.f32 %v3130, 0.5
      %v3144 = vmul.f32 %v3105, 0.044715
      %v3145 = vmul.f32 %v3107, 0.044715
      %v3146 = vmul.f32 %v3110, 0.044715
      %v3147 = vmul.f32 %v3112, 0.044715
      %v3148 = vmul.f32 %v3115, 0.044715
      %v3149 = vmul.f32 %v3117, 0.044715
      %v3150 = vmul.f32 %v3120, 0.044715
      %v3151 = vmul.f32 %v3122, 0.044715
      %v3152 = vmul.f32 %v3125, 0.044715
      %v3153 = vmul.f32 %v3127, 0.044715
      %v3154 = vmul.f32 %v3130, 0.044715
      %v3155 = vmul.f32 %v3144, %v3105
      %v3156 = vmul.f32 %v3145, %v3107
      %v3157 = vmul.f32 %v3146, %v3110
      %v3158 = vmul.f32 %v3147, %v3112
      %v3159 = vmul.f32 %v3148, %v3115
      %v3160 = vmul.f32 %v3149, %v3117
      %v3161 = vmul.f32 %v3150, %v3120
      %v3162 = vmul.f32 %v3151, %v3122
      %v3163 = vmul.f32 %v3152, %v3125
      %v3164 = vmul.f32 %v3153, %v3127
      %v3165 = vmul.f32 %v3154, %v3130
      %v3166 = vmul.f32 %v3155, %v3105
      %v3167 = vmul.f32 %v3156, %v3107
      %v3168 = vmul.f32 %v3157, %v3110
      %v3169 = vmul.f32 %v3158, %v3112
      %v3170 = vmul.f32 %v3159, %v3115
      %v3171 = vmul.f32 %v3160, %v3117
      %v3172 = vmul.f32 %v3161, %v3120
      %v3173 = vmul.f32 %v3162, %v3122
      %v3174 = vmul.f32 %v3163, %v3125
      %v3175 = vmul.f32 %v3164, %v3127
      %v3176 = vmul.f32 %v3165, %v3130
      %v3177 = vadd.f32 %v3105, %v3166
      %v3178 = vadd.f32 %v3107, %v3167
      %v3179 = vadd.f32 %v3110, %v3168
      %v3180 = vadd.f32 %v3112, %v3169
      %v3181 = vadd.f32 %v3115, %v3170
      %v3182 = vadd.f32 %v3117, %v3171
      %v3183 = vadd.f32 %v3120, %v3172
      %v3184 = vadd.f32 %v3122, %v3173
      %v3185 = vadd.f32 %v3125, %v3174
      %v3186 = vadd.f32 %v3127, %v3175
      %v3187 = vadd.f32 %v3130, %v3176
      %v3188 = vmul.f32 %v3177, 0.7978846
      %v3189 = vmul.f32 %v3178, 0.7978846
      %v3190 = vmul.f32 %v3179, 0.7978846
      %v3191 = vmul.f32 %v3180, 0.7978846
      %v3192 = vmul.f32 %v3181, 0.7978846
      %v3193 = vmul.f32 %v3182, 0.7978846
      %v3194 = vmul.f32 %v3183, 0.7978846
      %v3195 = vmul.f32 %v3184, 0.7978846
      %v3196 = vmul.f32 %v3185, 0.7978846
      %v3197 = vmul.f32 %v3186, 0.7978846
      %v3198 = vmul.f32 %v3187, 0.7978846
      %v3199 = vtanh.pop %v3188
      %v3200 = vtanh.pop %v3189
      %v3201 = vtanh.pop %v3190
      %v3202 = vtanh.pop %v3191
      %v3203 = vtanh.pop %v3192
      %v3204 = vtanh.pop %v3193
      %v3205 = vtanh.pop %v3194
      %v3206 = vtanh.pop %v3195
      %v3207 = vtanh.pop %v3196
      %v3208 = vtanh.pop %v3197
      %v3209 = vtanh.pop %v3198
      %v3210 = vadd.f32 %v3199, 1.0
      %v3211 = vadd.f32 %v3200, 1.0
      %v3212 = vadd.f32 %v3201, 1.0
      %v3213 = vadd.f32 %v3202, 1.0
      %v3214 = vadd.f32 %v3203, 1.0
      %v3215 = vadd.f32 %v3204, 1.0
      %v3216 = vadd.f32 %v3205, 1.0
      %v3217 = vadd.f32 %v3206, 1.0
      %v3218 = vadd.f32 %v3207, 1.0
      %v3219 = vadd.f32 %v3208, 1.0
      %v3220 = vadd.f32 %v3209, 1.0
      %v3221 = vmul.f32 %v3133, %v3210
      %v3222 = vmul.f32 %v3134, %v3211
      %v3223 = vmul.f32 %v3135, %v3212
      %v3224 = vmul.f32 %v3136, %v3213
      %v3225 = vmul.f32 %v3137, %v3214
      %v3226 = vmul.f32 %v3138, %v3215
      %v3227 = vmul.f32 %v3139, %v3216
      %v3228 = vmul.f32 %v3140, %v3217
      %v3229 = vmul.f32 %v3141, %v3218
      %v3230 = vmul.f32 %v3142, %v3219
      %v3231 = vmul.f32 %v3143, %v3220
      %v3232 = vpack.c.bf16 %v3222, %v3221
      %v3233 = vpack.c.bf16 %v3224, %v3223
      %v3234 = vpack.c.bf16 %v3226, %v3225
      %v3235 = vpack.c.bf16 %v3228, %v3227
      %v3236 = vpack.c.bf16 %v3230, %v3229
      %v3237 = vpack.c.bf16 %v3231, %v3231
      %v3238 = vld [vmem:[%s798] sm:$0xf]
      %v3239 = vld [vmem:[%s798 + $0x4] sm:$0xf]
      %v3240 = vld [vmem:[%s798 + $0x8] sm:$0xf]
      %v3241 = vld [vmem:[%s798 + $0xc] sm:$0xf]
      %v3242 = vld [vmem:[%s798 + $0x10] sm:$0xf]
      %v3243 = vld [vmem:[%s798 + $0x14] sm:$0xf]
      %v3244 = vld [vmem:[%s798 + $0x18] sm:$0xf]
      %v3245 = vld [vmem:[%s798 + $0x1c] sm:$0xf]
      %v3246 = vld [vmem:[%s798 + $0x20] sm:$0xf]
      %v3247 = vld [vmem:[%s798 + $0x24] sm:$0xf]
      %v3248 = vld [vmem:[%s798 + $0x28] sm:$0xf]
      %v3249 = vld [vmem:[%s798 + $0x2c] sm:$0xf]
      %v3250 = vld [vmem:[%s798 + $0x30] sm:$0xf]
      %v3251 = vld [vmem:[%s798 + $0x34] sm:$0xf]
      %v3252 = vld [vmem:[%s798 + $0x38] sm:$0xf]
      %v3253 = vld [vmem:[%s798 + $0x3c] sm:$0xf]
      %v3254 = vld [vmem:[%s801] sm:$0x1]
      %v3256 = vperm.slane %v3254, 0
      %v3274 = vunpack.c.l.b16 %v3238
      %v3275 = vunpack.c.l.b16 %v3239
      %v3276 = vunpack.c.l.b16 %v3240
      %v3277 = vunpack.c.l.b16 %v3241
      %v3278 = vunpack.c.l.b16 %v3242
      %v3279 = vunpack.c.l.b16 %v3243
      %v3280 = vunpack.c.l.b16 %v3244
      %v3281 = vunpack.c.l.b16 %v3245
      %v3282 = vunpack.c.l.b16 %v3246
      %v3283 = vunpack.c.l.b16 %v3247
      %v3284 = vunpack.c.l.b16 %v3248
      %v3285 = vunpack.c.l.b16 %v3249
      %v3286 = vunpack.c.l.b16 %v3250
      %v3287 = vunpack.c.l.b16 %v3251
      %v3288 = vunpack.c.l.b16 %v3252
      %v3289 = vunpack.c.l.b16 %v3253
      %v3290 = vpack.c.b16 %v3275, %v3274
      %v3291 = vpack.c.b16 %v3277, %v3276
      %v3292 = vpack.c.b16 %v3279, %v3278
      %v3293 = vpack.c.b16 %v3281, %v3280
      %v3294 = vpack.c.b16 %v3283, %v3282
      %v3295 = vpack.c.b16 %v3285, %v3284
      %v3296 = vpack.c.b16 %v3287, %v3286
      %v3297 = vpack.c.b16 %v3289, %v3288
      %3306 = vmatpush.bf16.msra.mxu0 %v3297
      %3307 = vmatpush.bf16.msra.mxu0 %v3296
      %3308 = vmatpush.bf16.msra.mxu0 %v3295
      %3309 = vmatpush.bf16.msra.mxu0 %v3294
      %3310 = vmatpush.bf16.msra.mxu0 %v3293
      %3311 = vmatpush.bf16.msra.mxu0 %v3292
      %3312 = vmatpush.bf16.msra.mxu0 %v3291
      %3313 = vmatpush.bf16.msra.mxu0 %v3290
      %3314 = vmatmul.bf16.gmra.mxu0 %v3232
      %v3315 = vpop.f32.mrf.mxu0
      %v3316 = vadd.f32 %v3256, %v3315
      %v3317 = vpop.f32.mrf.mxu0
      %v3318 = vadd.f32 %v3256, %v3317
      %3319 = vmatmul.bf16.gmra.mxu0 %v3233
      %v3320 = vpop.f32.mrf.mxu0
      %v3321 = vadd.f32 %v3256, %v3320
      %v3322 = vpop.f32.mrf.mxu0
      %v3323 = vadd.f32 %v3256, %v3322
      %3324 = vmatmul.bf16.gmra.mxu0 %v3234
      %v3325 = vpop.f32.mrf.mxu0
      %v3326 = vadd.f32 %v3256, %v3325
      %v3327 = vpop.f32.mrf.mxu0
      %v3328 = vadd.f32 %v3256, %v3327
      %3329 = vmatmul.bf16.gmra.mxu0 %v3235
      %v3330 = vpop.f32.mrf.mxu0
      %v3331 = vadd.f32 %v3256, %v3330
      %v3332 = vpop.f32.mrf.mxu0
      %v3333 = vadd.f32 %v3256, %v3332
      %3334 = vmatmul.bf16.gmra.mxu0 %v3236
      %v3335 = vpop.f32.mrf.mxu0
      %v3336 = vadd.f32 %v3256, %v3335
      %v3337 = vpop.f32.mrf.mxu0
      %v3338 = vadd.f32 %v3256, %v3337
      %3339 = vmatmul.bf16.gmra.mxu0 %v3237
      %v3340 = vpop.f32.mrf.mxu0
      %v3341 = vadd.f32 %v3256, %v3340
      %v3342 = vpop.f32.mrf.mxu0
      %3343 = vdwg.mxu0
      %v3344 = vadd.f32 %v2768, %v3316
      %v3345 = vadd.f32 %v2769, %v3318
      %v3346 = vadd.f32 %v2770, %v3321
      %v3347 = vadd.f32 %v2771, %v3323
      %v3348 = vadd.f32 %v2772, %v3326
      %v3349 = vadd.f32 %v2773, %v3328
      %v3350 = vadd.f32 %v2774, %v3331
      %v3351 = vadd.f32 %v2775, %v3333
      %v3352 = vadd.f32 %v2776, %v3336
      %v3353 = vadd.f32 %v2777, %v3338
      %v3354 = vadd.f32 %v2778, %v3341
      %3355 = vst.msk [vmem:[#allocation2] sm:$0xff] %vm952, %v3344
      %3356 = vst.msk [vmem:[#allocation2 + $0x8] sm:$0xff] %vm952, %v3345
      %3357 = vst.msk [vmem:[#allocation2 + $0x10] sm:$0xff] %vm952, %v3346
      %3358 = vst.msk [vmem:[#allocation2 + $0x18] sm:$0xff] %vm952, %v3347
      %3359 = vst.msk [vmem:[#allocation2 + $0x20] sm:$0xff] %vm952, %v3348
      %3360 = vst.msk [vmem:[#allocation2 + $0x28] sm:$0xff] %vm952, %v3349
      %3361 = vst.msk [vmem:[#allocation2 + $0x30] sm:$0xff] %vm952, %v3350
      %3362 = vst.msk [vmem:[#allocation2 + $0x38] sm:$0xff] %vm952, %v3351
      %3363 = vst.msk [vmem:[#allocation2 + $0x40] sm:$0xff] %vm952, %v3352
      %3364 = vst.msk [vmem:[#allocation2 + $0x48] sm:$0xff] %vm952, %v3353
      %3365 = vst.msk [vmem:[#allocation2 + $0x50] sm:$0xff] %vm952, %v3354
      %p3366 = scmp.eq.s32.totalorder %s35, 1
      // Predicated region
      $region101: #{timm_vit_forward.1} parent=95 // pred_check
        %p3367 = pneg %p3366
      $region102: #{timm_vit_forward.1} parent=95 // pred_check_branch
        %3369 = sbr.rel (%p3367) target = $region104
      $region103: #{timm_vit_forward.1} parent=95 // pred_region
        %v3370 = vld [vmem:[#allocation2] sm:$0xff]
        %v3371 = vld [vmem:[#allocation2 + $0x8] sm:$0xff]
        %v3372 = vld [vmem:[#allocation2 + $0x10] sm:$0xff]
        %v3373 = vld [vmem:[#allocation2 + $0x18] sm:$0xff]
        %v3374 = vld [vmem:[#allocation2 + $0x20] sm:$0xff]
        %v3375 = vld [vmem:[#allocation2 + $0x28] sm:$0xff]
        %v3376 = vld [vmem:[#allocation2 + $0x30] sm:$0xff]
        %v3377 = vld [vmem:[#allocation2 + $0x38] sm:$0xff]
        %v3378 = vld [vmem:[#allocation2 + $0x40] sm:$0xff]
        %v3379 = vld [vmem:[#allocation2 + $0x48] sm:$0xff]
        %v3380 = vld [vmem:[#allocation2 + $0x50] sm:$0xff]
        %v3381 = vld [vmem:[%s15] sm:$0x1]
        %v3382 = vld [vmem:[%s16] sm:$0x1]
        %v3383 = vsel %vm952, %v3370, 0.0
        %3384 = vadd.xlane.f32.xlu0 %v3383
        %v3385 = vpop.xlane.xlu0 %3384
        %v3386 = vsel %vm952, %v3371, 0.0
        %3387 = vadd.xlane.f32.xlu0 %v3386
        %v3388 = vpop.xlane.xlu0 %3387
        %v3389 = vsel %vm952, %v3372, 0.0
        %3390 = vadd.xlane.f32.xlu0 %v3389
        %v3391 = vpop.xlane.xlu0 %3390
        %v3392 = vsel %vm952, %v3373, 0.0
        %3393 = vadd.xlane.f32.xlu0 %v3392
        %v3394 = vpop.xlane.xlu0 %3393
        %v3395 = vsel %vm952, %v3374, 0.0
        %3396 = vadd.xlane.f32.xlu0 %v3395
        %v3397 = vpop.xlane.xlu0 %3396
        %v3398 = vsel %vm952, %v3375, 0.0
        %3399 = vadd.xlane.f32.xlu0 %v3398
        %v3400 = vpop.xlane.xlu0 %3399
        %v3401 = vsel %vm952, %v3376, 0.0
        %3402 = vadd.xlane.f32.xlu0 %v3401
        %v3403 = vpop.xlane.xlu0 %3402
        %v3404 = vsel %vm952, %v3377, 0.0
        %3405 = vadd.xlane.f32.xlu0 %v3404
        %v3406 = vpop.xlane.xlu0 %3405
        %v3407 = vsel %vm952, %v3378, 0.0
        %3408 = vadd.xlane.f32.xlu0 %v3407
        %v3409 = vpop.xlane.xlu0 %3408
        %v3410 = vsel %vm952, %v3379, 0.0
        %3411 = vadd.xlane.f32.xlu0 %v3410
        %v3412 = vpop.xlane.xlu0 %3411
        %v3413 = vsel %vm952, %v3380, 0.0
        %3414 = vadd.xlane.f32.xlu0 %v3413
        %v3415 = vpop.xlane.xlu0 %3414
        %v3416 = vmul.f32 %v3385, %v992
        %v3417 = vmul.f32 %v3388, %v992
        %v3418 = vmul.f32 %v3391, %v992
        %v3419 = vmul.f32 %v3394, %v992
        %v3420 = vmul.f32 %v3397, %v992
        %v3421 = vmul.f32 %v3400, %v992
        %v3422 = vmul.f32 %v3403, %v992
        %v3423 = vmul.f32 %v3406, %v992
        %v3424 = vmul.f32 %v3409, %v992
        %v3425 = vmul.f32 %v3412, %v992
        %v3426 = vmul.f32 %v3415, %v992
        %v3427 = vsub.f32 %v3370, %v3416
        %v3428 = vsub.f32 %v3371, %v3417
        %v3429 = vsub.f32 %v3372, %v3418
        %v3430 = vsub.f32 %v3373, %v3419
        %v3431 = vsub.f32 %v3374, %v3420
        %v3432 = vsub.f32 %v3375, %v3421
        %v3433 = vsub.f32 %v3376, %v3422
        %v3434 = vsub.f32 %v3377, %v3423
        %v3435 = vsub.f32 %v3378, %v3424
        %v3436 = vsub.f32 %v3379, %v3425
        %v3437 = vsub.f32 %v3380, %v3426
        %v3438 = vmul.f32 %v3427, %v3427
        %v3439 = vmul.f32 %v3428, %v3428
        %v3440 = vmul.f32 %v3429, %v3429
        %v3441 = vmul.f32 %v3430, %v3430
        %v3442 = vmul.f32 %v3431, %v3431
        %v3443 = vmul.f32 %v3432, %v3432
        %v3444 = vmul.f32 %v3433, %v3433
        %v3445 = vmul.f32 %v3434, %v3434
        %v3446 = vmul.f32 %v3435, %v3435
        %v3447 = vmul.f32 %v3436, %v3436
        %v3448 = vmul.f32 %v3437, %v3437
        %v3449 = vsel %vm952, %v3438, 0.0
        %3450 = vadd.xlane.f32.xlu0 %v3449
        %v3451 = vpop.xlane.xlu0 %3450
        %v3452 = vsel %vm952, %v3439, 0.0
        %3453 = vadd.xlane.f32.xlu0 %v3452
        %v3454 = vpop.xlane.xlu0 %3453
        %v3455 = vsel %vm952, %v3440, 0.0
        %3456 = vadd.xlane.f32.xlu0 %v3455
        %v3457 = vpop.xlane.xlu0 %3456
        %v3458 = vsel %vm952, %v3441, 0.0
        %3459 = vadd.xlane.f32.xlu0 %v3458
        %v3460 = vpop.xlane.xlu0 %3459
        %v3461 = vsel %vm952, %v3442, 0.0
        %3462 = vadd.xlane.f32.xlu0 %v3461
        %v3463 = vpop.xlane.xlu0 %3462
        %v3464 = vsel %vm952, %v3443, 0.0
        %3465 = vadd.xlane.f32.xlu0 %v3464
        %v3466 = vpop.xlane.xlu0 %3465
        %v3467 = vsel %vm952, %v3444, 0.0
        %3468 = vadd.xlane.f32.xlu0 %v3467
        %v3469 = vpop.xlane.xlu0 %3468
        %v3470 = vsel %vm952, %v3445, 0.0
        %3471 = vadd.xlane.f32.xlu0 %v3470
        %v3472 = vpop.xlane.xlu0 %3471
        %v3473 = vsel %vm952, %v3446, 0.0
        %3474 = vadd.xlane.f32.xlu0 %v3473
        %v3475 = vpop.xlane.xlu0 %3474
        %v3476 = vsel %vm952, %v3447, 0.0
        %3477 = vadd.xlane.f32.xlu0 %v3476
        %v3478 = vpop.xlane.xlu0 %3477
        %v3479 = vsel %vm952, %v3448, 0.0
        %3480 = vadd.xlane.f32.xlu0 %v3479
        %v3481 = vpop.xlane.xlu0 %3480
        %v3482 = vmul.f32 %v3451, %v992
        %v3483 = vmul.f32 %v3454, %v992
        %v3484 = vmul.f32 %v3457, %v992
        %v3485 = vmul.f32 %v3460, %v992
        %v3486 = vmul.f32 %v3463, %v992
        %v3487 = vmul.f32 %v3466, %v992
        %v3488 = vmul.f32 %v3469, %v992
        %v3489 = vmul.f32 %v3472, %v992
        %v3490 = vmul.f32 %v3475, %v992
        %v3491 = vmul.f32 %v3478, %v992
        %v3492 = vmul.f32 %v3481, %v992
        %v3493 = vadd.f32 %v3482, 1e-06
        %v3494 = vadd.f32 %v3483, 1e-06
        %v3495 = vadd.f32 %v3484, 1e-06
        %v3496 = vadd.f32 %v3485, 1e-06
        %v3497 = vadd.f32 %v3486, 1e-06
        %v3498 = vadd.f32 %v3487, 1e-06
        %v3499 = vadd.f32 %v3488, 1e-06
        %v3500 = vadd.f32 %v3489, 1e-06
        %v3501 = vadd.f32 %v3490, 1e-06
        %v3502 = vadd.f32 %v3491, 1e-06
        %v3503 = vadd.f32 %v3492, 1e-06
        %v3504 = vrsqrt.pop %v3493
        %v3505 = vmul.f32 %v3504, %v3493
        %v3506 = vmul.f32 %v3505, %v3504
        %v3507 = vmul.f32 0.5, %v3506
        %v3508 = vsub.f32 1.5, %v3507
        %v3509 = vmul.f32 %v3504, %v3508
        %vm3510 = vweird.f32 %v3493
        %vm3511 = vweird.f32 %v3504
        %vm3512 = vmor %vm3510, %vm3511
        %v3513 = vsel %vm3512, %v3504, %v3509
        %v3514 = vrsqrt.pop %v3494
        %v3515 = vmul.f32 %v3514, %v3494
        %v3516 = vmul.f32 %v3515, %v3514
        %v3517 = vmul.f32 0.5, %v3516
        %v3518 = vsub.f32 1.5, %v3517
        %v3519 = vmul.f32 %v3514, %v3518
        %vm3520 = vweird.f32 %v3494
        %vm3521 = vweird.f32 %v3514
        %vm3522 = vmor %vm3520, %vm3521
        %v3523 = vsel %vm3522, %v3514, %v3519
        %v3524 = vrsqrt.pop %v3495
        %v3525 = vmul.f32 %v3524, %v3495
        %v3526 = vmul.f32 %v3525, %v3524
        %v3527 = vmul.f32 0.5, %v3526
        %v3528 = vsub.f32 1.5, %v3527
        %v3529 = vmul.f32 %v3524, %v3528
        %vm3530 = vweird.f32 %v3495
        %vm3531 = vweird.f32 %v3524
        %vm3532 = vmor %vm3530, %vm3531
        %v3533 = vsel %vm3532, %v3524, %v3529
        %v3534 = vrsqrt.pop %v3496
        %v3535 = vmul.f32 %v3534, %v3496
        %v3536 = vmul.f32 %v3535, %v3534
        %v3537 = vmul.f32 0.5, %v3536
        %v3538 = vsub.f32 1.5, %v3537
        %v3539 = vmul.f32 %v3534, %v3538
        %vm3540 = vweird.f32 %v3496
        %vm3541 = vweird.f32 %v3534
        %vm3542 = vmor %vm3540, %vm3541
        %v3543 = vsel %vm3542, %v3534, %v3539
        %v3544 = vrsqrt.pop %v3497
        %v3545 = vmul.f32 %v3544, %v3497
        %v3546 = vmul.f32 %v3545, %v3544
        %v3547 = vmul.f32 0.5, %v3546
        %v3548 = vsub.f32 1.5, %v3547
        %v3549 = vmul.f32 %v3544, %v3548
        %vm3550 = vweird.f32 %v3497
        %vm3551 = vweird.f32 %v3544
        %vm3552 = vmor %vm3550, %vm3551
        %v3553 = vsel %vm3552, %v3544, %v3549
        %v3554 = vrsqrt.pop %v3498
        %v3555 = vmul.f32 %v3554, %v3498
        %v3556 = vmul.f32 %v3555, %v3554
        %v3557 = vmul.f32 0.5, %v3556
        %v3558 = vsub.f32 1.5, %v3557
        %v3559 = vmul.f32 %v3554, %v3558
        %vm3560 = vweird.f32 %v3498
        %vm3561 = vweird.f32 %v3554
        %vm3562 = vmor %vm3560, %vm3561
        %v3563 = vsel %vm3562, %v3554, %v3559
        %v3564 = vrsqrt.pop %v3499
        %v3565 = vmul.f32 %v3564, %v3499
        %v3566 = vmul.f32 %v3565, %v3564
        %v3567 = vmul.f32 0.5, %v3566
        %v3568 = vsub.f32 1.5, %v3567
        %v3569 = vmul.f32 %v3564, %v3568
        %vm3570 = vweird.f32 %v3499
        %vm3571 = vweird.f32 %v3564
        %vm3572 = vmor %vm3570, %vm3571
        %v3573 = vsel %vm3572, %v3564, %v3569
        %v3574 = vrsqrt.pop %v3500
        %v3575 = vmul.f32 %v3574, %v3500
        %v3576 = vmul.f32 %v3575, %v3574
        %v3577 = vmul.f32 0.5, %v3576
        %v3578 = vsub.f32 1.5, %v3577
        %v3579 = vmul.f32 %v3574, %v3578
        %vm3580 = vweird.f32 %v3500
        %vm3581 = vweird.f32 %v3574
        %vm3582 = vmor %vm3580, %vm3581
        %v3583 = vsel %vm3582, %v3574, %v3579
        %v3584 = vrsqrt.pop %v3501
        %v3585 = vmul.f32 %v3584, %v3501
        %v3586 = vmul.f32 %v3585, %v3584
        %v3587 = vmul.f32 0.5, %v3586
        %v3588 = vsub.f32 1.5, %v3587
        %v3589 = vmul.f32 %v3584, %v3588
        %vm3590 = vweird.f32 %v3501
        %vm3591 = vweird.f32 %v3584
        %vm3592 = vmor %vm3590, %vm3591
        %v3593 = vsel %vm3592, %v3584, %v3589
        %v3594 = vrsqrt.pop %v3502
        %v3595 = vmul.f32 %v3594, %v3502
        %v3596 = vmul.f32 %v3595, %v3594
        %v3597 = vmul.f32 0.5, %v3596
        %v3598 = vsub.f32 1.5, %v3597
        %v3599 = vmul.f32 %v3594, %v3598
        %vm3600 = vweird.f32 %v3502
        %vm3601 = vweird.f32 %v3594
        %vm3602 = vmor %vm3600, %vm3601
        %v3603 = vsel %vm3602, %v3594, %v3599
        %v3604 = vrsqrt.pop %v3503
        %v3605 = vmul.f32 %v3604, %v3503
        %v3606 = vmul.f32 %v3605, %v3604
        %v3607 = vmul.f32 0.5, %v3606
        %v3608 = vsub.f32 1.5, %v3607
        %v3609 = vmul.f32 %v3604, %v3608
        %vm3610 = vweird.f32 %v3503
        %vm3611 = vweird.f32 %v3604
        %vm3612 = vmor %vm3610, %vm3611
        %v3613 = vsel %vm3612, %v3604, %v3609
        %v3614 = vmul.f32 %v3427, %v3513
        %v3615 = vmul.f32 %v3428, %v3523
        %v3616 = vmul.f32 %v3429, %v3533
        %v3617 = vmul.f32 %v3430, %v3543
        %v3618 = vmul.f32 %v3431, %v3553
        %v3619 = vmul.f32 %v3432, %v3563
        %v3620 = vmul.f32 %v3433, %v3573
        %v3621 = vmul.f32 %v3434, %v3583
        %v3622 = vmul.f32 %v3435, %v3593
        %v3623 = vmul.f32 %v3436, %v3603
        %v3624 = vmul.f32 %v3437, %v3613
        %v3626 = vperm.slane %v3381, 0
        %v3628 = vmul.f32 %v3614, %v3626
        %v3629 = vmul.f32 %v3615, %v3626
        %v3630 = vmul.f32 %v3616, %v3626
        %v3631 = vmul.f32 %v3617, %v3626
        %v3632 = vmul.f32 %v3618, %v3626
        %v3633 = vmul.f32 %v3619, %v3626
        %v3634 = vmul.f32 %v3620, %v3626
        %v3635 = vmul.f32 %v3621, %v3626
        %v3636 = vmul.f32 %v3622, %v3626
        %v3637 = vmul.f32 %v3623, %v3626
        %v3638 = vmul.f32 %v3624, %v3626
        %v3640 = vperm.slane %v3382, 0
        %v3642 = vadd.f32 %v3628, %v3640
        %v3643 = vadd.f32 %v3629, %v3640
        %v3644 = vadd.f32 %v3630, %v3640
        %v3645 = vadd.f32 %v3631, %v3640
        %v3646 = vadd.f32 %v3632, %v3640
        %v3647 = vadd.f32 %v3633, %v3640
        %v3648 = vadd.f32 %v3634, %v3640
        %v3649 = vadd.f32 %v3635, %v3640
        %v3650 = vadd.f32 %v3636, %v3640
        %v3651 = vadd.f32 %v3637, %v3640
        %v3652 = vadd.f32 %v3638, %v3640
        %v3653 = vpack.c.bf16 %v3643, %v3642
        %v3654 = vpack.c.bf16 %v3645, %v3644
        %v3655 = vpack.c.bf16 %v3647, %v3646
        %v3656 = vpack.c.bf16 %v3649, %v3648
        %v3657 = vpack.c.bf16 %v3651, %v3650
        %v3658 = vpack.c.bf16 %v3652, %v3652
        %v3659 = vld [vmem:[%s17] sm:$0xf]
        %v3660 = vld [vmem:[%s17 + $0x4] sm:$0xf]
        %v3661 = vld [vmem:[%s17 + $0x8] sm:$0xf]
        %v3662 = vld [vmem:[%s17 + $0xc] sm:$0xf]
        %v3663 = vld [vmem:[%s18] sm:$0x1]
        %v3665 = vperm.slane %v3663, 0
        %v3671 = vunpack.c.l.b16 %v3659
        %v3672 = vunpack.c.l.b16 %v3660
        %v3673 = vunpack.c.l.b16 %v3661
        %v3674 = vunpack.c.l.b16 %v3662
        %v3675 = vpack.c.b16 %v3672, %v3671
        %v3676 = vpack.c.b16 %v3674, %v3673
        %v3680 = vsel %vm952, %v3653, 0
        %v3683 = vsel %vm952, %v3654, 0
        %v3686 = vsel %vm952, %v3655, 0
        %v3689 = vsel %vm952, %v3656, 0
        %v3692 = vsel %vm952, %v3657, 0
        %v3695 = vsel %vm952, %v3658, 0
        %3697 = vmatpush.bf16.msra.mxu0 0
        %3698 = vmatpush.bf16.msra.mxu0 0
        %3699 = vmatpush.bf16.msra.mxu0 0
        %3700 = vmatpush.bf16.msra.mxu0 0
        %3701 = vmatpush.bf16.msra.mxu0 0
        %3702 = vmatpush.bf16.msra.mxu0 0
        %3703 = vmatpush.bf16.msra.mxu0 %v3676
        %3704 = vmatpush.bf16.msra.mxu0 %v3675
        %3705 = vmatmul.bf16.gmra.mxu0 %v3680
        %v3706 = vpop.f32.mrf.mxu0
        %v3707 = vadd.f32 %v3665, %v3706
        %v3708 = vpop.f32.mrf.mxu0
        %v3709 = vadd.f32 %v3665, %v3708
        %3710 = vmatmul.bf16.gmra.mxu0 %v3683
        %v3711 = vpop.f32.mrf.mxu0
        %v3712 = vadd.f32 %v3665, %v3711
        %v3713 = vpop.f32.mrf.mxu0
        %v3714 = vadd.f32 %v3665, %v3713
        %3715 = vmatmul.bf16.gmra.mxu0 %v3686
        %v3716 = vpop.f32.mrf.mxu0
        %v3717 = vadd.f32 %v3665, %v3716
        %v3718 = vpop.f32.mrf.mxu0
        %v3719 = vadd.f32 %v3665, %v3718
        %3720 = vmatmul.bf16.gmra.mxu0 %v3689
        %v3721 = vpop.f32.mrf.mxu0
        %v3722 = vadd.f32 %v3665, %v3721
        %v3723 = vpop.f32.mrf.mxu0
        %v3724 = vadd.f32 %v3665, %v3723
        %3725 = vmatmul.bf16.gmra.mxu0 %v3692
        %v3726 = vpop.f32.mrf.mxu0
        %v3727 = vadd.f32 %v3665, %v3726
        %v3728 = vpop.f32.mrf.mxu0
        %v3729 = vadd.f32 %v3665, %v3728
        %3730 = vmatmul.bf16.gmra.mxu0 %v3695
        %v3731 = vpop.f32.mrf.mxu0
        %v3732 = vadd.f32 %v3665, %v3731
        %v3733 = vpop.f32.mrf.mxu0
        %3734 = vdwg.mxu0
        %3735 = vst [vmem:[%s806] sm:$0xff] %v3707
        %3736 = vst [vmem:[%s806 + $0x8] sm:$0xff] %v3709
        %3737 = vst [vmem:[%s806 + $0x10] sm:$0xff] %v3712
        %3738 = vst [vmem:[%s806 + $0x18] sm:$0xff] %v3714
        %3739 = vst [vmem:[%s806 + $0x20] sm:$0xff] %v3717
        %3740 = vst [vmem:[%s806 + $0x28] sm:$0xff] %v3719
        %3741 = vst [vmem:[%s806 + $0x30] sm:$0xff] %v3722
        %3742 = vst [vmem:[%s806 + $0x38] sm:$0xff] %v3724
        %3743 = vst [vmem:[%s806 + $0x40] sm:$0xff] %v3727
        %3744 = vst [vmem:[%s806 + $0x48] sm:$0xff] %v3729
        %3745 = vst [vmem:[%s806 + $0x50] sm:$0xff] %v3732
      $region104: #{timm_vit_forward.1} parent=95 // pred_fallthru
        _
      %p3746 = scmp.lt.s32.totalorder %s34, 1
      %s3747 = scalar_select %p3746, %s34, 1
      %s3748 = smul.addr %s3747, 11
      %s3749 = smul.addr %s3748, 8
      %s3750 = scalar_lea.vmem %s19, %s3749
      // Predicated region
      $region105: #{timm_vit_forward.1} parent=95 // pred_check
        %p3751 = pneg %p524
      $region106: #{timm_vit_forward.1} parent=95 // pred_check_branch
        %3753 = sbr.rel (%p3751) target = $region108
      $region107: #{timm_vit_forward.1} parent=95 // pred_region
        _
      $region108: #{timm_vit_forward.1} parent=95 // pred_fallthru
        _
    $region96: #{timm_vit_forward.1} parent=5 // pred_fallthru
      _
    %p3754 = scmp.le.s32.totalorder 2, %s25
    // Predicated region
    $region109: #{timm_vit_forward.1} parent=5 // pred_check
      %p3755 = pneg %p3754
    $region110: #{timm_vit_forward.1} parent=5 // pred_check_branch
      %3757 = sbr.rel (%p3755) target = $region112
    $region111: #{timm_vit_forward.1} parent=5 // pred_region
      %s3758 = ssub.s32 %s25, 2
      // Predicated region
      $region113: #{timm_vit_forward.1} parent=111 // pred_check
        %p3759 = pneg %p530
      $region114: #{timm_vit_forward.1} parent=111 // pred_check_branch
        %3761 = sbr.rel (%p3759) target = $region116
      $region115: #{timm_vit_forward.1} parent=111 // pred_region
        %p3762 = scmp.lt.s32.totalorder %s36, 1
        %s3763 = scalar_select %p3762, %s36, 1
        %s3764 = smul.addr %s3763, 11
        %s3765 = smul.addr %s3764, 8
        %s3766 = scalar_lea.vmem %s19, %s3765
      $region116: #{timm_vit_forward.1} parent=111 // pred_fallthru
        _
    $region112: #{timm_vit_forward.1} parent=5 // pred_fallthru
      _
  $region6: #{timm_vit_forward.1} parent=0 // loop_footer
    %s29 = sadd.s32 1, %s25
  $region7: #{timm_vit_forward.1} parent=0 // loop_footer_branch
    %24 = sbr.rel target = $region3
  $region8: #{timm_vit_forward.1} parent=0 // loop_exit
    _

</llo_original>
